<compile_context>
chip_gen: v7x
topology: tpu7x:2x2x1
jax: 0.10.0
libtpu: 0.0.40
codegen_flags: <defaults>
</compile_context>

<pallas_src>
import math

import jax
import jax.numpy as jnp
from jax.experimental import pallas as pl
from jax.experimental.pallas import tpu as pltpu

# ---------------------------------------------------------------------------
# Model configuration (small synthetic shapes consistent with the module)
# ---------------------------------------------------------------------------
B = 2              # batch size
N_BINS = 16        # frequency bins
N_FRAMES = 16      # time frames
KH, KW = 4, 4      # patch-embedding conv kernel
SH, SW = 4, 4      # conv stride (== kernel -> non-overlapping patches)
E = 32             # embedding_dim
NHEAD = 4          # attention heads
HD = E // NHEAD    # head dim
FF = 64            # dim_feedforward
NUM_LAYERS = 2     # nn.TransformerEncoder layers
LN_EPS = 1e-5

H = (N_BINS - KH) // SH + 1     # patch grid height
W = (N_FRAMES - KW) // SW + 1   # patch grid width
P = H * W                       # number of patches
NUM_HEAD_TOKENS = 2             # cls token + dist token
L = P + NUM_HEAD_TOKENS         # transformer sequence length


# ---------------------------------------------------------------------------
# In-kernel helpers
# ---------------------------------------------------------------------------
def _mm_t(x, w):
    """x: (M, K), shared weight w: (N, K) -> x @ w.T : (M, N).

    Plain 2D MXU contraction (no batched/broadcast weights); bf16 operands,
    f32 accumulation via preferred_element_type."""
    return jax.lax.dot_general(
        x.astype(jnp.bfloat16), w.astype(jnp.bfloat16),
        (((1,), (1,)), ((), ())), preferred_element_type=jnp.float32)


def _layer_norm(x, w, b):
    mean = jnp.mean(x, axis=-1, keepdims=True)
    var = jnp.mean((x - mean) ** 2, axis=-1, keepdims=True)
    return (x - mean) * jax.lax.rsqrt(var + LN_EPS) * w + b


# ---------------------------------------------------------------------------
# Single fused kernel (one batch element per grid step): patch embedding,
# head-token prepend, and all NUM_LAYERS encoder layers.
# ---------------------------------------------------------------------------
def ast_fused_kernel(patches_ref, conv_w_ref, bias_pos_ref, head_tok_ref,
                     wqkv_ref, bqkv_ref, wo_ref, bo_ref,
                     ln1w_ref, ln1b_ref, w1_ref, b1_ref, w2_ref, b2_ref,
                     ln2w_ref, ln2b_ref, out_ref):
    # --- patch embedding: Conv2d(kernel==stride) as one matmul ---
    patches = patches_ref[0]                          # (P, KH*KW)
    emb = _mm_t(patches, conv_w_ref[...])             # (P, E) f32
    emb = emb + bias_pos_ref[...]                     # conv bias + positional embedding

    # prepend [cls, dist] head tokens in registers (dropout = identity in eval mode)
    x = jnp.concatenate([head_tok_ref[...], emb], axis=0)          # (L, E) f32

    for li in range(NUM_LAYERS):    # statically unrolled; all weights VMEM-resident
        # ---- multi-head self-attention (1/sqrt(HD) pre-folded into Wq/bq) ----
        qkv = _mm_t(x, wqkv_ref[li]) + bqkv_ref[li]                # (L, 3E) f32
        wo_l = wo_ref[li]                                          # (E, E) bf16
        attn = jnp.zeros((L, E), jnp.float32)
        for h in range(NHEAD):      # static head loop; out-projection folded in
            qh = qkv[:, 0 * E + h * HD:0 * E + (h + 1) * HD]       # (L, HD)
            kh = qkv[:, 1 * E + h * HD:1 * E + (h + 1) * HD]
            vh = qkv[:, 2 * E + h * HD:2 * E + (h + 1) * HD]
            s = _mm_t(qh, kh)                                      # (L, L) scores
            s = s - jnp.max(s, axis=-1, keepdims=True)
            p = jnp.exp(s)                                         # f32 softmax math
            inv = pl.reciprocal(jnp.sum(p, axis=-1, keepdims=True),
                                approx=True)                       # EUP slot
            oh = jax.lax.dot_general(
                p.astype(jnp.bfloat16), vh.astype(jnp.bfloat16),
                (((1,), (0,)), ((), ())),
                preferred_element_type=jnp.float32) * inv          # (L, HD)
            # accumulate oh @ Wo[:, h*HD:(h+1)*HD].T  (no lane-offset scratch stores)
            attn = attn + _mm_t(oh, wo_l[:, h * HD:(h + 1) * HD])  # (L, E)
        attn = attn + bo_ref[li]

        x = _layer_norm(x + attn, ln1w_ref[li], ln1b_ref[li])      # residual + LN1 (post-norm)

        # ---- feed-forward (ReLU); eval-mode dropout = identity ----
        hdn = jnp.maximum(_mm_t(x, w1_ref[li]) + b1_ref[li], 0.0)  # (L, FF)
        ff = _mm_t(hdn, w2_ref[li]) + b2_ref[li]                   # (L, E)
        x = _layer_norm(x + ff, ln2w_ref[li], ln2b_ref[li])        # residual + LN2

    out_ref[0] = x


# ---------------------------------------------------------------------------
# pallas_call wrapper: batch grid axis ("parallel" -> v7x 2nd TensorCore),
# weights as constant-index full blocks (fetched once, VMEM-resident).
# ---------------------------------------------------------------------------
def ast_forward(spec, params):
    # pad_by_length(length=None) -> identity
    # im2col (glue): (B, n_bins, n_frames) -> (B, P, KH*KW); stride == kernel.
    x = spec.reshape(B, H, KH, W, KW)
    x = jnp.transpose(x, (0, 1, 3, 2, 4))                # (B, H, W, KH, KW)
    patches = x.reshape(B, P, KH * KW)

    # positional embedding (E, H, W) -> (P, E); resample is identity (same n_bins/n_frames).
    # conv bias is folded into the same table.
    pos_flat = params["pos_emb"].reshape(E, P).T         # (P, E), H-major patch order
    bias_pos = params["conv_b"] + pos_flat               # (P, E) f32

    head_tokens = jnp.stack([params["cls_token"], params["dist_token"]], axis=0)  # (2, E)

    lp = params["layers"]

    # Static fold of 1/sqrt(HD) into the Q rows of in_proj weight/bias; bf16 matmul weights.
    scale = 1.0 / math.sqrt(HD)
    wq, wkv = jnp.split(lp["wqkv"], [E], axis=1)
    wqkv = jnp.concatenate([wq * scale, wkv], axis=1).astype(jnp.bfloat16)   # (NL, 3E, E)
    bq, bkv = jnp.split(lp["bqkv"], [E], axis=2)
    bqkv = jnp.concatenate([bq * scale, bkv], axis=2)                        # (NL, 1, 3E) f32
    conv_w = params["conv_w"].astype(jnp.bfloat16)
    wo = lp["wo"].astype(jnp.bfloat16)
    w1 = lp["w1"].astype(jnp.bfloat16)
    w2 = lp["w2"].astype(jnp.bfloat16)

    def _full_spec(arr):
        nd = arr.ndim
        return pl.BlockSpec(arr.shape, lambda b, _nd=nd: (0,) * _nd)

    operands = (patches, conv_w, bias_pos, head_tokens,
                wqkv, bqkv, wo, lp["bo"],
                lp["ln1w"], lp["ln1b"], w1, lp["b1"], w2, lp["b2"],
                lp["ln2w"], lp["ln2b"])

    in_specs = [pl.BlockSpec((1, P, KH * KW), lambda b: (b, 0, 0))]
    in_specs += [_full_spec(a) for a in operands[1:]]

    return pl.pallas_call(
        ast_fused_kernel,
        out_shape=jax.ShapeDtypeStruct((B, L, E), jnp.float32),
        grid=(B,),
        in_specs=in_specs,
        out_specs=pl.BlockSpec((1, L, E), lambda b: (b, 0, 0)),
        compiler_params=pltpu.CompilerParams(dimension_semantics=("parallel",)),
    )(*operands)


# ---------------------------------------------------------------------------
# Parameters (deterministic synthetic init, PyTorch weight layouts, layers stacked)
# ---------------------------------------------------------------------------
def init_params(key):
    ks = jax.random.split(key, 5 + NUM_LAYERS)
    p = {
        "conv_w": 0.02 * jax.random.normal(ks[0], (E, KH * KW), jnp.float32),
        "conv_b": 0.02 * jax.random.normal(ks[1], (1, E), jnp.float32),
        "pos_emb": 0.02 * jax.random.normal(ks[2], (E, H, W), jnp.float32),
        "cls_token": 0.02 * jax.random.normal(ks[3], (E,), jnp.float32),
        "dist_token": 0.02 * jax.random.normal(ks[4], (E,), jnp.float32),
    }
    wqkv, wo, w1, w2 = [], [], [], []
    for li in range(NUM_LAYERS):
        lk = jax.random.split(ks[5 + li], 4)
        wqkv.append(0.02 * jax.random.normal(lk[0], (3 * E, E), jnp.float32))
        wo.append(0.02 * jax.random.normal(lk[1], (E, E), jnp.float32))
        w1.append(0.02 * jax.random.normal(lk[2], (FF, E), jnp.float32))
        w2.append(0.02 * jax.random.normal(lk[3], (E, FF), jnp.float32))
    p["layers"] = {
        "wqkv": jnp.stack(wqkv),                                   # in_proj_weight  (NL, 3E, E)
        "bqkv": jnp.zeros((NUM_LAYERS, 1, 3 * E), jnp.float32),    # in_proj_bias
        "wo": jnp.stack(wo),                                       # out_proj.weight (NL, E, E)
        "bo": jnp.zeros((NUM_LAYERS, 1, E), jnp.float32),          # out_proj.bias
        "ln1w": jnp.ones((NUM_LAYERS, 1, E), jnp.float32),         # norm1.weight
        "ln1b": jnp.zeros((NUM_LAYERS, 1, E), jnp.float32),        # norm1.bias
        "w1": jnp.stack(w1),                                       # linear1.weight  (NL, FF, E)
        "b1": jnp.zeros((NUM_LAYERS, 1, FF), jnp.float32),         # linear1.bias
        "w2": jnp.stack(w2),                                       # linear2.weight  (NL, E, FF)
        "b2": jnp.zeros((NUM_LAYERS, 1, E), jnp.float32),          # linear2.bias
        "ln2w": jnp.ones((NUM_LAYERS, 1, E), jnp.float32),         # norm2.weight
        "ln2b": jnp.zeros((NUM_LAYERS, 1, E), jnp.float32),        # norm2.bias
    }
    return p


# ---------------------------------------------------------------------------
if __name__ == "__main__":
    key = jax.random.PRNGKey(0)
    pkey, xkey = jax.random.split(key)
    params = init_params(pkey)

    spectrogram = jax.random.normal(xkey, (B, N_BINS, N_FRAMES), jnp.float32)

    out = jax.jit(ast_forward)(spectrogram, params)
    out = jax.block_until_ready(out)

    assert out.shape == (B, L, E), out.shape
    assert bool(jnp.all(jnp.isfinite(out)))
    print("KERNEL_OK")
</pallas_src>

<mosaic_0001>
module attributes {stable_mosaic.version = 11 : i64} {
  func.func @ast_fused_kernel(%arg0: i32, %arg1: memref<1x16x16xf32, #tpu.memory_space<vmem>>, %arg2: memref<32x16xbf16, #tpu.memory_space<vmem>>, %arg3: memref<16x32xf32, #tpu.memory_space<vmem>>, %arg4: memref<2x32xf32, #tpu.memory_space<vmem>>, %arg5: memref<2x96x32xbf16, #tpu.memory_space<vmem>>, %arg6: memref<2x1x96xf32, #tpu.memory_space<vmem>>, %arg7: memref<2x32x32xbf16, #tpu.memory_space<vmem>>, %arg8: memref<2x1x32xf32, #tpu.memory_space<vmem>>, %arg9: memref<2x1x32xf32, #tpu.memory_space<vmem>>, %arg10: memref<2x1x32xf32, #tpu.memory_space<vmem>>, %arg11: memref<2x64x32xbf16, #tpu.memory_space<vmem>>, %arg12: memref<2x1x64xf32, #tpu.memory_space<vmem>>, %arg13: memref<2x32x64xbf16, #tpu.memory_space<vmem>>, %arg14: memref<2x1x32xf32, #tpu.memory_space<vmem>>, %arg15: memref<2x1x32xf32, #tpu.memory_space<vmem>>, %arg16: memref<2x1x32xf32, #tpu.memory_space<vmem>>, %arg17: memref<1x18x32xf32, #tpu.memory_space<vmem>>) attributes {dimension_semantics = [#tpu.dimension_semantics<parallel>], iteration_bounds = array<i64: 2>, scalar_prefetch = 0 : i64, scratch_operands = 0 : i64, tpu.core_type = #tpu.core_type<tc>, window_params = [{transform_indices = @transform_0, window_bounds = array<i64: 1, 16, 16>}, {pipeline_mode = #tpu.pipeline_mode<synchronous>, transform_indices = @transform_1, window_bounds = array<i64: 32, 16>}, {pipeline_mode = #tpu.pipeline_mode<synchronous>, transform_indices = @transform_2, window_bounds = array<i64: 16, 32>}, {pipeline_mode = #tpu.pipeline_mode<synchronous>, transform_indices = @transform_3, window_bounds = array<i64: 2, 32>}, {pipeline_mode = #tpu.pipeline_mode<synchronous>, transform_indices = @transform_4, window_bounds = array<i64: 2, 96, 32>}, {pipeline_mode = #tpu.pipeline_mode<synchronous>, transform_indices = @transform_5, window_bounds = array<i64: 2, 1, 96>}, {pipeline_mode = #tpu.pipeline_mode<synchronous>, transform_indices = @transform_6, window_bounds = array<i64: 2, 32, 32>}, {pipeline_mode = #tpu.pipeline_mode<synchronous>, transform_indices = @transform_7, window_bounds = array<i64: 2, 1, 32>}, {pipeline_mode = #tpu.pipeline_mode<synchronous>, transform_indices = @transform_8, window_bounds = array<i64: 2, 1, 32>}, {pipeline_mode = #tpu.pipeline_mode<synchronous>, transform_indices = @transform_9, window_bounds = array<i64: 2, 1, 32>}, {pipeline_mode = #tpu.pipeline_mode<synchronous>, transform_indices = @transform_10, window_bounds = array<i64: 2, 64, 32>}, {pipeline_mode = #tpu.pipeline_mode<synchronous>, transform_indices = @transform_11, window_bounds = array<i64: 2, 1, 64>}, {pipeline_mode = #tpu.pipeline_mode<synchronous>, transform_indices = @transform_12, window_bounds = array<i64: 2, 32, 64>}, {pipeline_mode = #tpu.pipeline_mode<synchronous>, transform_indices = @transform_13, window_bounds = array<i64: 2, 1, 32>}, {pipeline_mode = #tpu.pipeline_mode<synchronous>, transform_indices = @transform_14, window_bounds = array<i64: 2, 1, 32>}, {pipeline_mode = #tpu.pipeline_mode<synchronous>, transform_indices = @transform_15, window_bounds = array<i64: 2, 1, 32>}, {transform_indices = @transform_16, window_bounds = array<i64: 1, 18, 32>}]} {
    %c0 = arith.constant 0 : index
    %c0_0 = arith.constant 0 : index
    %c0_1 = arith.constant 0 : index
    %0 = vector.load %arg1[%c0, %c0_0, %c0_1] : memref<1x16x16xf32, #tpu.memory_space<vmem>>, vector<1x16x16xf32>
    %1 = vector.shape_cast %0 : vector<1x16x16xf32> to vector<16x16xf32>
    %c0_2 = arith.constant 0 : index
    %c0_3 = arith.constant 0 : index
    %2 = vector.load %arg2[%c0_2, %c0_3] : memref<32x16xbf16, #tpu.memory_space<vmem>>, vector<32x16xbf16>
    %3 = arith.truncf %1 : vector<16x16xf32> to vector<16x16xbf16>
    %cst = arith.constant dense<0.000000e+00> : vector<16x32xf32>
    %4 = tpu.matmul %3, %2, %cst {dimension_numbers = #tpu.dot_dimension_numbers<[1], [1], [0], [0], [0, 0, 1, 0], [], []>} : vector<16x16xbf16>, vector<32x16xbf16>, vector<16x32xf32> -> vector<16x32xf32>
    %c0_4 = arith.constant 0 : index
    %c0_5 = arith.constant 0 : index
    %5 = vector.load %arg3[%c0_4, %c0_5] : memref<16x32xf32, #tpu.memory_space<vmem>>, vector<16x32xf32>
    %6 = arith.addf %4, %5 : vector<16x32xf32>
    %c0_6 = arith.constant 0 : index
    %c0_7 = arith.constant 0 : index
    %7 = vector.load %arg4[%c0_6, %c0_7] : memref<2x32xf32, #tpu.memory_space<vmem>>, vector<2x32xf32>
    %8 = tpu.concatenate %7, %6 in 0 : vector<2x32xf32>, vector<16x32xf32> -> vector<18x32xf32>
    %c0_8 = arith.constant 0 : index
    %c0_9 = arith.constant 0 : index
    %c0_10 = arith.constant 0 : index
    %9 = vector.load %arg5[%c0_8, %c0_9, %c0_10] : memref<2x96x32xbf16, #tpu.memory_space<vmem>>, vector<1x96x32xbf16>
    %10 = vector.shape_cast %9 : vector<1x96x32xbf16> to vector<96x32xbf16>
    %11 = arith.truncf %8 : vector<18x32xf32> to vector<18x32xbf16>
    %cst_11 = arith.constant dense<0.000000e+00> : vector<18x96xf32>
    %12 = tpu.matmul %11, %10, %cst_11 {dimension_numbers = #tpu.dot_dimension_numbers<[1], [1], [0], [0], [0, 0, 1, 0], [], []>} : vector<18x32xbf16>, vector<96x32xbf16>, vector<18x96xf32> -> vector<18x96xf32>
    %c0_12 = arith.constant 0 : index
    %c0_13 = arith.constant 0 : index
    %c0_14 = arith.constant 0 : index
    %13 = vector.load %arg6[%c0_12, %c0_13, %c0_14] : memref<2x1x96xf32, #tpu.memory_space<vmem>>, vector<1x1x96xf32>
    %14 = vector.shape_cast %13 : vector<1x1x96xf32> to vector<1x96xf32>
    %15 = vector.broadcast %14 : vector<1x96xf32> to vector<18x96xf32>
    %16 = arith.addf %12, %15 : vector<18x96xf32>
    %c0_15 = arith.constant 0 : index
    %c0_16 = arith.constant 0 : index
    %c0_17 = arith.constant 0 : index
    %17 = vector.load %arg7[%c0_15, %c0_16, %c0_17] : memref<2x32x32xbf16, #tpu.memory_space<vmem>>, vector<1x32x32xbf16>
    %18 = vector.shape_cast %17 : vector<1x32x32xbf16> to vector<32x32xbf16>
    %cst_18 = arith.constant 0.000000e+00 : f32
    %19 = vector.broadcast %cst_18 : f32 to vector<18x32xf32>
    %20 = vector.extract_strided_slice %16 {offsets = [0, 0], sizes = [18, 8], strides = [1, 1]} : vector<18x96xf32> to vector<18x8xf32>
    %21 = vector.extract_strided_slice %16 {offsets = [0, 32], sizes = [18, 8], strides = [1, 1]} : vector<18x96xf32> to vector<18x8xf32>
    %22 = vector.extract_strided_slice %16 {offsets = [0, 64], sizes = [18, 8], strides = [1, 1]} : vector<18x96xf32> to vector<18x8xf32>
    %23 = arith.truncf %20 : vector<18x8xf32> to vector<18x8xbf16>
    %24 = arith.truncf %21 : vector<18x8xf32> to vector<18x8xbf16>
    %cst_19 = arith.constant dense<0.000000e+00> : vector<18x18xf32>
    %25 = tpu.matmul %23, %24, %cst_19 {dimension_numbers = #tpu.dot_dimension_numbers<[1], [1], [0], [0], [0, 0, 1, 0], [], []>} : vector<18x8xbf16>, vector<18x8xbf16>, vector<18x18xf32> -> vector<18x18xf32>
    %cst_20 = arith.constant dense<0xFF800000> : vector<18xf32>
    %26 = vector.multi_reduction <maximumf>, %25, %cst_20 [1] : vector<18x18xf32> to vector<18xf32>
    %27 = vector.shape_cast %26 : vector<18xf32> to vector<18x1xf32>
    %28 = vector.broadcast %27 : vector<18x1xf32> to vector<18x18xf32>
    %29 = arith.subf %25, %28 : vector<18x18xf32>
    %30 = math.exp %29 : vector<18x18xf32>
    %cst_21 = arith.constant dense<0.000000e+00> : vector<18xf32>
    %31 = vector.multi_reduction <add>, %30, %cst_21 [1] : vector<18x18xf32> to vector<18xf32>
    %32 = vector.shape_cast %31 : vector<18xf32> to vector<18x1xf32>
    %33 = tpu.reciprocal %32 {approx = true} : vector<18x1xf32> -> vector<18x1xf32>
    %34 = arith.truncf %30 : vector<18x18xf32> to vector<18x18xbf16>
    %35 = arith.truncf %22 : vector<18x8xf32> to vector<18x8xbf16>
    %cst_22 = arith.constant dense<0.000000e+00> : vector<18x8xf32>
    %36 = tpu.matmul %34, %35, %cst_22 {dimension_numbers = #tpu.dot_dimension_numbers<[1], [0], [0], [1], [0, 0, 1, 1], [], []>} : vector<18x18xbf16>, vector<18x8xbf16>, vector<18x8xf32> -> vector<18x8xf32>
    %37 = vector.broadcast %33 : vector<18x1xf32> to vector<18x8xf32>
    %38 = arith.mulf %36, %37 : vector<18x8xf32>
    %39 = vector.extract_strided_slice %18 {offsets = [0, 0], sizes = [32, 8], strides = [1, 1]} : vector<32x32xbf16> to vector<32x8xbf16>
    %40 = arith.truncf %38 : vector<18x8xf32> to vector<18x8xbf16>
    %cst_23 = arith.constant dense<0.000000e+00> : vector<18x32xf32>
    %41 = tpu.matmul %40, %39, %cst_23 {dimension_numbers = #tpu.dot_dimension_numbers<[1], [1], [0], [0], [0, 0, 1, 0], [], []>} : vector<18x8xbf16>, vector<32x8xbf16>, vector<18x32xf32> -> vector<18x32xf32>
    %42 = arith.addf %19, %41 : vector<18x32xf32>
    %43 = vector.extract_strided_slice %16 {offsets = [0, 8], sizes = [18, 8], strides = [1, 1]} : vector<18x96xf32> to vector<18x8xf32>
    %44 = vector.extract_strided_slice %16 {offsets = [0, 40], sizes = [18, 8], strides = [1, 1]} : vector<18x96xf32> to vector<18x8xf32>
    %45 = vector.extract_strided_slice %16 {offsets = [0, 72], sizes = [18, 8], strides = [1, 1]} : vector<18x96xf32> to vector<18x8xf32>
    %46 = arith.truncf %43 : vector<18x8xf32> to vector<18x8xbf16>
    %47 = arith.truncf %44 : vector<18x8xf32> to vector<18x8xbf16>
    %cst_24 = arith.constant dense<0.000000e+00> : vector<18x18xf32>
    %48 = tpu.matmul %46, %47, %cst_24 {dimension_numbers = #tpu.dot_dimension_numbers<[1], [1], [0], [0], [0, 0, 1, 0], [], []>} : vector<18x8xbf16>, vector<18x8xbf16>, vector<18x18xf32> -> vector<18x18xf32>
    %cst_25 = arith.constant dense<0xFF800000> : vector<18xf32>
    %49 = vector.multi_reduction <maximumf>, %48, %cst_25 [1] : vector<18x18xf32> to vector<18xf32>
    %50 = vector.shape_cast %49 : vector<18xf32> to vector<18x1xf32>
    %51 = vector.broadcast %50 : vector<18x1xf32> to vector<18x18xf32>
    %52 = arith.subf %48, %51 : vector<18x18xf32>
    %53 = math.exp %52 : vector<18x18xf32>
    %cst_26 = arith.constant dense<0.000000e+00> : vector<18xf32>
    %54 = vector.multi_reduction <add>, %53, %cst_26 [1] : vector<18x18xf32> to vector<18xf32>
    %55 = vector.shape_cast %54 : vector<18xf32> to vector<18x1xf32>
    %56 = tpu.reciprocal %55 {approx = true} : vector<18x1xf32> -> vector<18x1xf32>
    %57 = arith.truncf %53 : vector<18x18xf32> to vector<18x18xbf16>
    %58 = arith.truncf %45 : vector<18x8xf32> to vector<18x8xbf16>
    %cst_27 = arith.constant dense<0.000000e+00> : vector<18x8xf32>
    %59 = tpu.matmul %57, %58, %cst_27 {dimension_numbers = #tpu.dot_dimension_numbers<[1], [0], [0], [1], [0, 0, 1, 1], [], []>} : vector<18x18xbf16>, vector<18x8xbf16>, vector<18x8xf32> -> vector<18x8xf32>
    %60 = vector.broadcast %56 : vector<18x1xf32> to vector<18x8xf32>
    %61 = arith.mulf %59, %60 : vector<18x8xf32>
    %62 = vector.extract_strided_slice %18 {offsets = [0, 8], sizes = [32, 8], strides = [1, 1]} : vector<32x32xbf16> to vector<32x8xbf16>
    %63 = arith.truncf %61 : vector<18x8xf32> to vector<18x8xbf16>
    %cst_28 = arith.constant dense<0.000000e+00> : vector<18x32xf32>
    %64 = tpu.matmul %63, %62, %cst_28 {dimension_numbers = #tpu.dot_dimension_numbers<[1], [1], [0], [0], [0, 0, 1, 0], [], []>} : vector<18x8xbf16>, vector<32x8xbf16>, vector<18x32xf32> -> vector<18x32xf32>
    %65 = arith.addf %42, %64 : vector<18x32xf32>
    %66 = vector.extract_strided_slice %16 {offsets = [0, 16], sizes = [18, 8], strides = [1, 1]} : vector<18x96xf32> to vector<18x8xf32>
    %67 = vector.extract_strided_slice %16 {offsets = [0, 48], sizes = [18, 8], strides = [1, 1]} : vector<18x96xf32> to vector<18x8xf32>
    %68 = vector.extract_strided_slice %16 {offsets = [0, 80], sizes = [18, 8], strides = [1, 1]} : vector<18x96xf32> to vector<18x8xf32>
    %69 = arith.truncf %66 : vector<18x8xf32> to vector<18x8xbf16>
    %70 = arith.truncf %67 : vector<18x8xf32> to vector<18x8xbf16>
    %cst_29 = arith.constant dense<0.000000e+00> : vector<18x18xf32>
    %71 = tpu.matmul %69, %70, %cst_29 {dimension_numbers = #tpu.dot_dimension_numbers<[1], [1], [0], [0], [0, 0, 1, 0], [], []>} : vector<18x8xbf16>, vector<18x8xbf16>, vector<18x18xf32> -> vector<18x18xf32>
    %cst_30 = arith.constant dense<0xFF800000> : vector<18xf32>
    %72 = vector.multi_reduction <maximumf>, %71, %cst_30 [1] : vector<18x18xf32> to vector<18xf32>
    %73 = vector.shape_cast %72 : vector<18xf32> to vector<18x1xf32>
    %74 = vector.broadcast %73 : vector<18x1xf32> to vector<18x18xf32>
    %75 = arith.subf %71, %74 : vector<18x18xf32>
    %76 = math.exp %75 : vector<18x18xf32>
    %cst_31 = arith.constant dense<0.000000e+00> : vector<18xf32>
    %77 = vector.multi_reduction <add>, %76, %cst_31 [1] : vector<18x18xf32> to vector<18xf32>
    %78 = vector.shape_cast %77 : vector<18xf32> to vector<18x1xf32>
    %79 = tpu.reciprocal %78 {approx = true} : vector<18x1xf32> -> vector<18x1xf32>
    %80 = arith.truncf %76 : vector<18x18xf32> to vector<18x18xbf16>
    %81 = arith.truncf %68 : vector<18x8xf32> to vector<18x8xbf16>
    %cst_32 = arith.constant dense<0.000000e+00> : vector<18x8xf32>
    %82 = tpu.matmul %80, %81, %cst_32 {dimension_numbers = #tpu.dot_dimension_numbers<[1], [0], [0], [1], [0, 0, 1, 1], [], []>} : vector<18x18xbf16>, vector<18x8xbf16>, vector<18x8xf32> -> vector<18x8xf32>
    %83 = vector.broadcast %79 : vector<18x1xf32> to vector<18x8xf32>
    %84 = arith.mulf %82, %83 : vector<18x8xf32>
    %85 = vector.extract_strided_slice %18 {offsets = [0, 16], sizes = [32, 8], strides = [1, 1]} : vector<32x32xbf16> to vector<32x8xbf16>
    %86 = arith.truncf %84 : vector<18x8xf32> to vector<18x8xbf16>
    %cst_33 = arith.constant dense<0.000000e+00> : vector<18x32xf32>
    %87 = tpu.matmul %86, %85, %cst_33 {dimension_numbers = #tpu.dot_dimension_numbers<[1], [1], [0], [0], [0, 0, 1, 0], [], []>} : vector<18x8xbf16>, vector<32x8xbf16>, vector<18x32xf32> -> vector<18x32xf32>
    %88 = arith.addf %65, %87 : vector<18x32xf32>
    %89 = vector.extract_strided_slice %16 {offsets = [0, 24], sizes = [18, 8], strides = [1, 1]} : vector<18x96xf32> to vector<18x8xf32>
    %90 = vector.extract_strided_slice %16 {offsets = [0, 56], sizes = [18, 8], strides = [1, 1]} : vector<18x96xf32> to vector<18x8xf32>
    %91 = vector.extract_strided_slice %16 {offsets = [0, 88], sizes = [18, 8], strides = [1, 1]} : vector<18x96xf32> to vector<18x8xf32>
    %92 = arith.truncf %89 : vector<18x8xf32> to vector<18x8xbf16>
    %93 = arith.truncf %90 : vector<18x8xf32> to vector<18x8xbf16>
    %cst_34 = arith.constant dense<0.000000e+00> : vector<18x18xf32>
    %94 = tpu.matmul %92, %93, %cst_34 {dimension_numbers = #tpu.dot_dimension_numbers<[1], [1], [0], [0], [0, 0, 1, 0], [], []>} : vector<18x8xbf16>, vector<18x8xbf16>, vector<18x18xf32> -> vector<18x18xf32>
    %cst_35 = arith.constant dense<0xFF800000> : vector<18xf32>
    %95 = vector.multi_reduction <maximumf>, %94, %cst_35 [1] : vector<18x18xf32> to vector<18xf32>
    %96 = vector.shape_cast %95 : vector<18xf32> to vector<18x1xf32>
    %97 = vector.broadcast %96 : vector<18x1xf32> to vector<18x18xf32>
    %98 = arith.subf %94, %97 : vector<18x18xf32>
    %99 = math.exp %98 : vector<18x18xf32>
    %cst_36 = arith.constant dense<0.000000e+00> : vector<18xf32>
    %100 = vector.multi_reduction <add>, %99, %cst_36 [1] : vector<18x18xf32> to vector<18xf32>
    %101 = vector.shape_cast %100 : vector<18xf32> to vector<18x1xf32>
    %102 = tpu.reciprocal %101 {approx = true} : vector<18x1xf32> -> vector<18x1xf32>
    %103 = arith.truncf %99 : vector<18x18xf32> to vector<18x18xbf16>
    %104 = arith.truncf %91 : vector<18x8xf32> to vector<18x8xbf16>
    %cst_37 = arith.constant dense<0.000000e+00> : vector<18x8xf32>
    %105 = tpu.matmul %103, %104, %cst_37 {dimension_numbers = #tpu.dot_dimension_numbers<[1], [0], [0], [1], [0, 0, 1, 1], [], []>} : vector<18x18xbf16>, vector<18x8xbf16>, vector<18x8xf32> -> vector<18x8xf32>
    %106 = vector.broadcast %102 : vector<18x1xf32> to vector<18x8xf32>
    %107 = arith.mulf %105, %106 : vector<18x8xf32>
    %108 = vector.extract_strided_slice %18 {offsets = [0, 24], sizes = [32, 8], strides = [1, 1]} : vector<32x32xbf16> to vector<32x8xbf16>
    %109 = arith.truncf %107 : vector<18x8xf32> to vector<18x8xbf16>
    %cst_38 = arith.constant dense<0.000000e+00> : vector<18x32xf32>
    %110 = tpu.matmul %109, %108, %cst_38 {dimension_numbers = #tpu.dot_dimension_numbers<[1], [1], [0], [0], [0, 0, 1, 0], [], []>} : vector<18x8xbf16>, vector<32x8xbf16>, vector<18x32xf32> -> vector<18x32xf32>
    %111 = arith.addf %88, %110 : vector<18x32xf32>
    %c0_39 = arith.constant 0 : index
    %c0_40 = arith.constant 0 : index
    %c0_41 = arith.constant 0 : index
    %112 = vector.load %arg8[%c0_39, %c0_40, %c0_41] : memref<2x1x32xf32, #tpu.memory_space<vmem>>, vector<1x1x32xf32>
    %113 = vector.shape_cast %112 : vector<1x1x32xf32> to vector<1x32xf32>
    %114 = vector.broadcast %113 : vector<1x32xf32> to vector<18x32xf32>
    %115 = arith.addf %111, %114 : vector<18x32xf32>
    %116 = arith.addf %8, %115 : vector<18x32xf32>
    %c0_42 = arith.constant 0 : index
    %c0_43 = arith.constant 0 : index
    %c0_44 = arith.constant 0 : index
    %117 = vector.load %arg9[%c0_42, %c0_43, %c0_44] : memref<2x1x32xf32, #tpu.memory_space<vmem>>, vector<1x1x32xf32>
    %118 = vector.shape_cast %117 : vector<1x1x32xf32> to vector<1x32xf32>
    %c0_45 = arith.constant 0 : index
    %c0_46 = arith.constant 0 : index
    %c0_47 = arith.constant 0 : index
    %119 = vector.load %arg10[%c0_45, %c0_46, %c0_47] : memref<2x1x32xf32, #tpu.memory_space<vmem>>, vector<1x1x32xf32>
    %120 = vector.shape_cast %119 : vector<1x1x32xf32> to vector<1x32xf32>
    %cst_48 = arith.constant dense<0.000000e+00> : vector<18xf32>
    %121 = vector.multi_reduction <add>, %116, %cst_48 [1] : vector<18x32xf32> to vector<18xf32>
    %122 = vector.shape_cast %121 : vector<18xf32> to vector<18x1xf32>
    %cst_49 = arith.constant 3.200000e+01 : f32
    %123 = vector.broadcast %cst_49 : f32 to vector<18x1xf32>
    %124 = arith.divf %122, %123 : vector<18x1xf32>
    %125 = vector.broadcast %124 : vector<18x1xf32> to vector<18x32xf32>
    %126 = arith.subf %116, %125 : vector<18x32xf32>
    %127 = arith.mulf %126, %126 : vector<18x32xf32>
    %cst_50 = arith.constant dense<0.000000e+00> : vector<18xf32>
    %128 = vector.multi_reduction <add>, %127, %cst_50 [1] : vector<18x32xf32> to vector<18xf32>
    %129 = vector.shape_cast %128 : vector<18xf32> to vector<18x1xf32>
    %cst_51 = arith.constant 3.200000e+01 : f32
    %130 = vector.broadcast %cst_51 : f32 to vector<18x1xf32>
    %131 = arith.divf %129, %130 : vector<18x1xf32>
    %132 = vector.broadcast %124 : vector<18x1xf32> to vector<18x32xf32>
    %133 = arith.subf %116, %132 : vector<18x32xf32>
    %cst_52 = arith.constant 9.99999974E-6 : f32
    %134 = vector.broadcast %cst_52 : f32 to vector<18x1xf32>
    %135 = arith.addf %131, %134 : vector<18x1xf32>
    %136 = math.rsqrt %135 : vector<18x1xf32>
    %137 = vector.broadcast %136 : vector<18x1xf32> to vector<18x32xf32>
    %138 = arith.mulf %133, %137 : vector<18x32xf32>
    %139 = vector.broadcast %118 : vector<1x32xf32> to vector<18x32xf32>
    %140 = arith.mulf %138, %139 : vector<18x32xf32>
    %141 = vector.broadcast %120 : vector<1x32xf32> to vector<18x32xf32>
    %142 = arith.addf %140, %141 : vector<18x32xf32>
    %c0_53 = arith.constant 0 : index
    %c0_54 = arith.constant 0 : index
    %c0_55 = arith.constant 0 : index
    %143 = vector.load %arg11[%c0_53, %c0_54, %c0_55] : memref<2x64x32xbf16, #tpu.memory_space<vmem>>, vector<1x64x32xbf16>
    %144 = vector.shape_cast %143 : vector<1x64x32xbf16> to vector<64x32xbf16>
    %145 = arith.truncf %142 : vector<18x32xf32> to vector<18x32xbf16>
    %cst_56 = arith.constant dense<0.000000e+00> : vector<18x64xf32>
    %146 = tpu.matmul %145, %144, %cst_56 {dimension_numbers = #tpu.dot_dimension_numbers<[1], [1], [0], [0], [0, 0, 1, 0], [], []>} : vector<18x32xbf16>, vector<64x32xbf16>, vector<18x64xf32> -> vector<18x64xf32>
    %c0_57 = arith.constant 0 : index
    %c0_58 = arith.constant 0 : index
    %c0_59 = arith.constant 0 : index
    %147 = vector.load %arg12[%c0_57, %c0_58, %c0_59] : memref<2x1x64xf32, #tpu.memory_space<vmem>>, vector<1x1x64xf32>
    %148 = vector.shape_cast %147 : vector<1x1x64xf32> to vector<1x64xf32>
    %149 = vector.broadcast %148 : vector<1x64xf32> to vector<18x64xf32>
    %150 = arith.addf %146, %149 : vector<18x64xf32>
    %cst_60 = arith.constant 0.000000e+00 : f32
    %151 = vector.broadcast %cst_60 : f32 to vector<18x64xf32>
    %152 = arith.maximumf %150, %151 : vector<18x64xf32>
    %c0_61 = arith.constant 0 : index
    %c0_62 = arith.constant 0 : index
    %c0_63 = arith.constant 0 : index
    %153 = vector.load %arg13[%c0_61, %c0_62, %c0_63] : memref<2x32x64xbf16, #tpu.memory_space<vmem>>, vector<1x32x64xbf16>
    %154 = vector.shape_cast %153 : vector<1x32x64xbf16> to vector<32x64xbf16>
    %155 = arith.truncf %152 : vector<18x64xf32> to vector<18x64xbf16>
    %cst_64 = arith.constant dense<0.000000e+00> : vector<18x32xf32>
    %156 = tpu.matmul %155, %154, %cst_64 {dimension_numbers = #tpu.dot_dimension_numbers<[1], [1], [0], [0], [0, 0, 1, 0], [], []>} : vector<18x64xbf16>, vector<32x64xbf16>, vector<18x32xf32> -> vector<18x32xf32>
    %c0_65 = arith.constant 0 : index
    %c0_66 = arith.constant 0 : index
    %c0_67 = arith.constant 0 : index
    %157 = vector.load %arg14[%c0_65, %c0_66, %c0_67] : memref<2x1x32xf32, #tpu.memory_space<vmem>>, vector<1x1x32xf32>
    %158 = vector.shape_cast %157 : vector<1x1x32xf32> to vector<1x32xf32>
    %159 = vector.broadcast %158 : vector<1x32xf32> to vector<18x32xf32>
    %160 = arith.addf %156, %159 : vector<18x32xf32>
    %161 = arith.addf %142, %160 : vector<18x32xf32>
    %c0_68 = arith.constant 0 : index
    %c0_69 = arith.constant 0 : index
    %c0_70 = arith.constant 0 : index
    %162 = vector.load %arg15[%c0_68, %c0_69, %c0_70] : memref<2x1x32xf32, #tpu.memory_space<vmem>>, vector<1x1x32xf32>
    %163 = vector.shape_cast %162 : vector<1x1x32xf32> to vector<1x32xf32>
    %c0_71 = arith.constant 0 : index
    %c0_72 = arith.constant 0 : index
    %c0_73 = arith.constant 0 : index
    %164 = vector.load %arg16[%c0_71, %c0_72, %c0_73] : memref<2x1x32xf32, #tpu.memory_space<vmem>>, vector<1x1x32xf32>
    %165 = vector.shape_cast %164 : vector<1x1x32xf32> to vector<1x32xf32>
    %cst_74 = arith.constant dense<0.000000e+00> : vector<18xf32>
    %166 = vector.multi_reduction <add>, %161, %cst_74 [1] : vector<18x32xf32> to vector<18xf32>
    %167 = vector.shape_cast %166 : vector<18xf32> to vector<18x1xf32>
    %cst_75 = arith.constant 3.200000e+01 : f32
    %168 = vector.broadcast %cst_75 : f32 to vector<18x1xf32>
    %169 = arith.divf %167, %168 : vector<18x1xf32>
    %170 = vector.broadcast %169 : vector<18x1xf32> to vector<18x32xf32>
    %171 = arith.subf %161, %170 : vector<18x32xf32>
    %172 = arith.mulf %171, %171 : vector<18x32xf32>
    %cst_76 = arith.constant dense<0.000000e+00> : vector<18xf32>
    %173 = vector.multi_reduction <add>, %172, %cst_76 [1] : vector<18x32xf32> to vector<18xf32>
    %174 = vector.shape_cast %173 : vector<18xf32> to vector<18x1xf32>
    %cst_77 = arith.constant 3.200000e+01 : f32
    %175 = vector.broadcast %cst_77 : f32 to vector<18x1xf32>
    %176 = arith.divf %174, %175 : vector<18x1xf32>
    %177 = vector.broadcast %169 : vector<18x1xf32> to vector<18x32xf32>
    %178 = arith.subf %161, %177 : vector<18x32xf32>
    %cst_78 = arith.constant 9.99999974E-6 : f32
    %179 = vector.broadcast %cst_78 : f32 to vector<18x1xf32>
    %180 = arith.addf %176, %179 : vector<18x1xf32>
    %181 = math.rsqrt %180 : vector<18x1xf32>
    %182 = vector.broadcast %181 : vector<18x1xf32> to vector<18x32xf32>
    %183 = arith.mulf %178, %182 : vector<18x32xf32>
    %184 = vector.broadcast %163 : vector<1x32xf32> to vector<18x32xf32>
    %185 = arith.mulf %183, %184 : vector<18x32xf32>
    %186 = vector.broadcast %165 : vector<1x32xf32> to vector<18x32xf32>
    %187 = arith.addf %185, %186 : vector<18x32xf32>
    %c1 = arith.constant 1 : index
    %c0_79 = arith.constant 0 : index
    %c0_80 = arith.constant 0 : index
    %188 = vector.load %arg5[%c1, %c0_79, %c0_80] : memref<2x96x32xbf16, #tpu.memory_space<vmem>>, vector<1x96x32xbf16>
    %189 = vector.shape_cast %188 : vector<1x96x32xbf16> to vector<96x32xbf16>
    %190 = arith.truncf %187 : vector<18x32xf32> to vector<18x32xbf16>
    %cst_81 = arith.constant dense<0.000000e+00> : vector<18x96xf32>
    %191 = tpu.matmul %190, %189, %cst_81 {dimension_numbers = #tpu.dot_dimension_numbers<[1], [1], [0], [0], [0, 0, 1, 0], [], []>} : vector<18x32xbf16>, vector<96x32xbf16>, vector<18x96xf32> -> vector<18x96xf32>
    %c1_82 = arith.constant 1 : index
    %c0_83 = arith.constant 0 : index
    %c0_84 = arith.constant 0 : index
    %192 = vector.load %arg6[%c1_82, %c0_83, %c0_84] : memref<2x1x96xf32, #tpu.memory_space<vmem>>, vector<1x1x96xf32>
    %193 = vector.shape_cast %192 : vector<1x1x96xf32> to vector<1x96xf32>
    %194 = vector.broadcast %193 : vector<1x96xf32> to vector<18x96xf32>
    %195 = arith.addf %191, %194 : vector<18x96xf32>
    %c1_85 = arith.constant 1 : index
    %c0_86 = arith.constant 0 : index
    %c0_87 = arith.constant 0 : index
    %196 = vector.load %arg7[%c1_85, %c0_86, %c0_87] : memref<2x32x32xbf16, #tpu.memory_space<vmem>>, vector<1x32x32xbf16>
    %197 = vector.shape_cast %196 : vector<1x32x32xbf16> to vector<32x32xbf16>
    %cst_88 = arith.constant 0.000000e+00 : f32
    %198 = vector.broadcast %cst_88 : f32 to vector<18x32xf32>
    %199 = vector.extract_strided_slice %195 {offsets = [0, 0], sizes = [18, 8], strides = [1, 1]} : vector<18x96xf32> to vector<18x8xf32>
    %200 = vector.extract_strided_slice %195 {offsets = [0, 32], sizes = [18, 8], strides = [1, 1]} : vector<18x96xf32> to vector<18x8xf32>
    %201 = vector.extract_strided_slice %195 {offsets = [0, 64], sizes = [18, 8], strides = [1, 1]} : vector<18x96xf32> to vector<18x8xf32>
    %202 = arith.truncf %199 : vector<18x8xf32> to vector<18x8xbf16>
    %203 = arith.truncf %200 : vector<18x8xf32> to vector<18x8xbf16>
    %cst_89 = arith.constant dense<0.000000e+00> : vector<18x18xf32>
    %204 = tpu.matmul %202, %203, %cst_89 {dimension_numbers = #tpu.dot_dimension_numbers<[1], [1], [0], [0], [0, 0, 1, 0], [], []>} : vector<18x8xbf16>, vector<18x8xbf16>, vector<18x18xf32> -> vector<18x18xf32>
    %cst_90 = arith.constant dense<0xFF800000> : vector<18xf32>
    %205 = vector.multi_reduction <maximumf>, %204, %cst_90 [1] : vector<18x18xf32> to vector<18xf32>
    %206 = vector.shape_cast %205 : vector<18xf32> to vector<18x1xf32>
    %207 = vector.broadcast %206 : vector<18x1xf32> to vector<18x18xf32>
    %208 = arith.subf %204, %207 : vector<18x18xf32>
    %209 = math.exp %208 : vector<18x18xf32>
    %cst_91 = arith.constant dense<0.000000e+00> : vector<18xf32>
    %210 = vector.multi_reduction <add>, %209, %cst_91 [1] : vector<18x18xf32> to vector<18xf32>
    %211 = vector.shape_cast %210 : vector<18xf32> to vector<18x1xf32>
    %212 = tpu.reciprocal %211 {approx = true} : vector<18x1xf32> -> vector<18x1xf32>
    %213 = arith.truncf %209 : vector<18x18xf32> to vector<18x18xbf16>
    %214 = arith.truncf %201 : vector<18x8xf32> to vector<18x8xbf16>
    %cst_92 = arith.constant dense<0.000000e+00> : vector<18x8xf32>
    %215 = tpu.matmul %213, %214, %cst_92 {dimension_numbers = #tpu.dot_dimension_numbers<[1], [0], [0], [1], [0, 0, 1, 1], [], []>} : vector<18x18xbf16>, vector<18x8xbf16>, vector<18x8xf32> -> vector<18x8xf32>
    %216 = vector.broadcast %212 : vector<18x1xf32> to vector<18x8xf32>
    %217 = arith.mulf %215, %216 : vector<18x8xf32>
    %218 = vector.extract_strided_slice %197 {offsets = [0, 0], sizes = [32, 8], strides = [1, 1]} : vector<32x32xbf16> to vector<32x8xbf16>
    %219 = arith.truncf %217 : vector<18x8xf32> to vector<18x8xbf16>
    %cst_93 = arith.constant dense<0.000000e+00> : vector<18x32xf32>
    %220 = tpu.matmul %219, %218, %cst_93 {dimension_numbers = #tpu.dot_dimension_numbers<[1], [1], [0], [0], [0, 0, 1, 0], [], []>} : vector<18x8xbf16>, vector<32x8xbf16>, vector<18x32xf32> -> vector<18x32xf32>
    %221 = arith.addf %198, %220 : vector<18x32xf32>
    %222 = vector.extract_strided_slice %195 {offsets = [0, 8], sizes = [18, 8], strides = [1, 1]} : vector<18x96xf32> to vector<18x8xf32>
    %223 = vector.extract_strided_slice %195 {offsets = [0, 40], sizes = [18, 8], strides = [1, 1]} : vector<18x96xf32> to vector<18x8xf32>
    %224 = vector.extract_strided_slice %195 {offsets = [0, 72], sizes = [18, 8], strides = [1, 1]} : vector<18x96xf32> to vector<18x8xf32>
    %225 = arith.truncf %222 : vector<18x8xf32> to vector<18x8xbf16>
    %226 = arith.truncf %223 : vector<18x8xf32> to vector<18x8xbf16>
    %cst_94 = arith.constant dense<0.000000e+00> : vector<18x18xf32>
    %227 = tpu.matmul %225, %226, %cst_94 {dimension_numbers = #tpu.dot_dimension_numbers<[1], [1], [0], [0], [0, 0, 1, 0], [], []>} : vector<18x8xbf16>, vector<18x8xbf16>, vector<18x18xf32> -> vector<18x18xf32>
    %cst_95 = arith.constant dense<0xFF800000> : vector<18xf32>
    %228 = vector.multi_reduction <maximumf>, %227, %cst_95 [1] : vector<18x18xf32> to vector<18xf32>
    %229 = vector.shape_cast %228 : vector<18xf32> to vector<18x1xf32>
    %230 = vector.broadcast %229 : vector<18x1xf32> to vector<18x18xf32>
    %231 = arith.subf %227, %230 : vector<18x18xf32>
    %232 = math.exp %231 : vector<18x18xf32>
    %cst_96 = arith.constant dense<0.000000e+00> : vector<18xf32>
    %233 = vector.multi_reduction <add>, %232, %cst_96 [1] : vector<18x18xf32> to vector<18xf32>
    %234 = vector.shape_cast %233 : vector<18xf32> to vector<18x1xf32>
    %235 = tpu.reciprocal %234 {approx = true} : vector<18x1xf32> -> vector<18x1xf32>
    %236 = arith.truncf %232 : vector<18x18xf32> to vector<18x18xbf16>
    %237 = arith.truncf %224 : vector<18x8xf32> to vector<18x8xbf16>
    %cst_97 = arith.constant dense<0.000000e+00> : vector<18x8xf32>
    %238 = tpu.matmul %236, %237, %cst_97 {dimension_numbers = #tpu.dot_dimension_numbers<[1], [0], [0], [1], [0, 0, 1, 1], [], []>} : vector<18x18xbf16>, vector<18x8xbf16>, vector<18x8xf32> -> vector<18x8xf32>
    %239 = vector.broadcast %235 : vector<18x1xf32> to vector<18x8xf32>
    %240 = arith.mulf %238, %239 : vector<18x8xf32>
    %241 = vector.extract_strided_slice %197 {offsets = [0, 8], sizes = [32, 8], strides = [1, 1]} : vector<32x32xbf16> to vector<32x8xbf16>
    %242 = arith.truncf %240 : vector<18x8xf32> to vector<18x8xbf16>
    %cst_98 = arith.constant dense<0.000000e+00> : vector<18x32xf32>
    %243 = tpu.matmul %242, %241, %cst_98 {dimension_numbers = #tpu.dot_dimension_numbers<[1], [1], [0], [0], [0, 0, 1, 0], [], []>} : vector<18x8xbf16>, vector<32x8xbf16>, vector<18x32xf32> -> vector<18x32xf32>
    %244 = arith.addf %221, %243 : vector<18x32xf32>
    %245 = vector.extract_strided_slice %195 {offsets = [0, 16], sizes = [18, 8], strides = [1, 1]} : vector<18x96xf32> to vector<18x8xf32>
    %246 = vector.extract_strided_slice %195 {offsets = [0, 48], sizes = [18, 8], strides = [1, 1]} : vector<18x96xf32> to vector<18x8xf32>
    %247 = vector.extract_strided_slice %195 {offsets = [0, 80], sizes = [18, 8], strides = [1, 1]} : vector<18x96xf32> to vector<18x8xf32>
    %248 = arith.truncf %245 : vector<18x8xf32> to vector<18x8xbf16>
    %249 = arith.truncf %246 : vector<18x8xf32> to vector<18x8xbf16>
    %cst_99 = arith.constant dense<0.000000e+00> : vector<18x18xf32>
    %250 = tpu.matmul %248, %249, %cst_99 {dimension_numbers = #tpu.dot_dimension_numbers<[1], [1], [0], [0], [0, 0, 1, 0], [], []>} : vector<18x8xbf16>, vector<18x8xbf16>, vector<18x18xf32> -> vector<18x18xf32>
    %cst_100 = arith.constant dense<0xFF800000> : vector<18xf32>
    %251 = vector.multi_reduction <maximumf>, %250, %cst_100 [1] : vector<18x18xf32> to vector<18xf32>
    %252 = vector.shape_cast %251 : vector<18xf32> to vector<18x1xf32>
    %253 = vector.broadcast %252 : vector<18x1xf32> to vector<18x18xf32>
    %254 = arith.subf %250, %253 : vector<18x18xf32>
    %255 = math.exp %254 : vector<18x18xf32>
    %cst_101 = arith.constant dense<0.000000e+00> : vector<18xf32>
    %256 = vector.multi_reduction <add>, %255, %cst_101 [1] : vector<18x18xf32> to vector<18xf32>
    %257 = vector.shape_cast %256 : vector<18xf32> to vector<18x1xf32>
    %258 = tpu.reciprocal %257 {approx = true} : vector<18x1xf32> -> vector<18x1xf32>
    %259 = arith.truncf %255 : vector<18x18xf32> to vector<18x18xbf16>
    %260 = arith.truncf %247 : vector<18x8xf32> to vector<18x8xbf16>
    %cst_102 = arith.constant dense<0.000000e+00> : vector<18x8xf32>
    %261 = tpu.matmul %259, %260, %cst_102 {dimension_numbers = #tpu.dot_dimension_numbers<[1], [0], [0], [1], [0, 0, 1, 1], [], []>} : vector<18x18xbf16>, vector<18x8xbf16>, vector<18x8xf32> -> vector<18x8xf32>
    %262 = vector.broadcast %258 : vector<18x1xf32> to vector<18x8xf32>
    %263 = arith.mulf %261, %262 : vector<18x8xf32>
    %264 = vector.extract_strided_slice %197 {offsets = [0, 16], sizes = [32, 8], strides = [1, 1]} : vector<32x32xbf16> to vector<32x8xbf16>
    %265 = arith.truncf %263 : vector<18x8xf32> to vector<18x8xbf16>
    %cst_103 = arith.constant dense<0.000000e+00> : vector<18x32xf32>
    %266 = tpu.matmul %265, %264, %cst_103 {dimension_numbers = #tpu.dot_dimension_numbers<[1], [1], [0], [0], [0, 0, 1, 0], [], []>} : vector<18x8xbf16>, vector<32x8xbf16>, vector<18x32xf32> -> vector<18x32xf32>
    %267 = arith.addf %244, %266 : vector<18x32xf32>
    %268 = vector.extract_strided_slice %195 {offsets = [0, 24], sizes = [18, 8], strides = [1, 1]} : vector<18x96xf32> to vector<18x8xf32>
    %269 = vector.extract_strided_slice %195 {offsets = [0, 56], sizes = [18, 8], strides = [1, 1]} : vector<18x96xf32> to vector<18x8xf32>
    %270 = vector.extract_strided_slice %195 {offsets = [0, 88], sizes = [18, 8], strides = [1, 1]} : vector<18x96xf32> to vector<18x8xf32>
    %271 = arith.truncf %268 : vector<18x8xf32> to vector<18x8xbf16>
    %272 = arith.truncf %269 : vector<18x8xf32> to vector<18x8xbf16>
    %cst_104 = arith.constant dense<0.000000e+00> : vector<18x18xf32>
    %273 = tpu.matmul %271, %272, %cst_104 {dimension_numbers = #tpu.dot_dimension_numbers<[1], [1], [0], [0], [0, 0, 1, 0], [], []>} : vector<18x8xbf16>, vector<18x8xbf16>, vector<18x18xf32> -> vector<18x18xf32>
    %cst_105 = arith.constant dense<0xFF800000> : vector<18xf32>
    %274 = vector.multi_reduction <maximumf>, %273, %cst_105 [1] : vector<18x18xf32> to vector<18xf32>
    %275 = vector.shape_cast %274 : vector<18xf32> to vector<18x1xf32>
    %276 = vector.broadcast %275 : vector<18x1xf32> to vector<18x18xf32>
    %277 = arith.subf %273, %276 : vector<18x18xf32>
    %278 = math.exp %277 : vector<18x18xf32>
    %cst_106 = arith.constant dense<0.000000e+00> : vector<18xf32>
    %279 = vector.multi_reduction <add>, %278, %cst_106 [1] : vector<18x18xf32> to vector<18xf32>
    %280 = vector.shape_cast %279 : vector<18xf32> to vector<18x1xf32>
    %281 = tpu.reciprocal %280 {approx = true} : vector<18x1xf32> -> vector<18x1xf32>
    %282 = arith.truncf %278 : vector<18x18xf32> to vector<18x18xbf16>
    %283 = arith.truncf %270 : vector<18x8xf32> to vector<18x8xbf16>
    %cst_107 = arith.constant dense<0.000000e+00> : vector<18x8xf32>
    %284 = tpu.matmul %282, %283, %cst_107 {dimension_numbers = #tpu.dot_dimension_numbers<[1], [0], [0], [1], [0, 0, 1, 1], [], []>} : vector<18x18xbf16>, vector<18x8xbf16>, vector<18x8xf32> -> vector<18x8xf32>
    %285 = vector.broadcast %281 : vector<18x1xf32> to vector<18x8xf32>
    %286 = arith.mulf %284, %285 : vector<18x8xf32>
    %287 = vector.extract_strided_slice %197 {offsets = [0, 24], sizes = [32, 8], strides = [1, 1]} : vector<32x32xbf16> to vector<32x8xbf16>
    %288 = arith.truncf %286 : vector<18x8xf32> to vector<18x8xbf16>
    %cst_108 = arith.constant dense<0.000000e+00> : vector<18x32xf32>
    %289 = tpu.matmul %288, %287, %cst_108 {dimension_numbers = #tpu.dot_dimension_numbers<[1], [1], [0], [0], [0, 0, 1, 0], [], []>} : vector<18x8xbf16>, vector<32x8xbf16>, vector<18x32xf32> -> vector<18x32xf32>
    %290 = arith.addf %267, %289 : vector<18x32xf32>
    %c1_109 = arith.constant 1 : index
    %c0_110 = arith.constant 0 : index
    %c0_111 = arith.constant 0 : index
    %291 = vector.load %arg8[%c1_109, %c0_110, %c0_111] : memref<2x1x32xf32, #tpu.memory_space<vmem>>, vector<1x1x32xf32>
    %292 = vector.shape_cast %291 : vector<1x1x32xf32> to vector<1x32xf32>
    %293 = vector.broadcast %292 : vector<1x32xf32> to vector<18x32xf32>
    %294 = arith.addf %290, %293 : vector<18x32xf32>
    %295 = arith.addf %187, %294 : vector<18x32xf32>
    %c1_112 = arith.constant 1 : index
    %c0_113 = arith.constant 0 : index
    %c0_114 = arith.constant 0 : index
    %296 = vector.load %arg9[%c1_112, %c0_113, %c0_114] : memref<2x1x32xf32, #tpu.memory_space<vmem>>, vector<1x1x32xf32>
    %297 = vector.shape_cast %296 : vector<1x1x32xf32> to vector<1x32xf32>
    %c1_115 = arith.constant 1 : index
    %c0_116 = arith.constant 0 : index
    %c0_117 = arith.constant 0 : index
    %298 = vector.load %arg10[%c1_115, %c0_116, %c0_117] : memref<2x1x32xf32, #tpu.memory_space<vmem>>, vector<1x1x32xf32>
    %299 = vector.shape_cast %298 : vector<1x1x32xf32> to vector<1x32xf32>
    %cst_118 = arith.constant dense<0.000000e+00> : vector<18xf32>
    %300 = vector.multi_reduction <add>, %295, %cst_118 [1] : vector<18x32xf32> to vector<18xf32>
    %301 = vector.shape_cast %300 : vector<18xf32> to vector<18x1xf32>
    %cst_119 = arith.constant 3.200000e+01 : f32
    %302 = vector.broadcast %cst_119 : f32 to vector<18x1xf32>
    %303 = arith.divf %301, %302 : vector<18x1xf32>
    %304 = vector.broadcast %303 : vector<18x1xf32> to vector<18x32xf32>
    %305 = arith.subf %295, %304 : vector<18x32xf32>
    %306 = arith.mulf %305, %305 : vector<18x32xf32>
    %cst_120 = arith.constant dense<0.000000e+00> : vector<18xf32>
    %307 = vector.multi_reduction <add>, %306, %cst_120 [1] : vector<18x32xf32> to vector<18xf32>
    %308 = vector.shape_cast %307 : vector<18xf32> to vector<18x1xf32>
    %cst_121 = arith.constant 3.200000e+01 : f32
    %309 = vector.broadcast %cst_121 : f32 to vector<18x1xf32>
    %310 = arith.divf %308, %309 : vector<18x1xf32>
    %311 = vector.broadcast %303 : vector<18x1xf32> to vector<18x32xf32>
    %312 = arith.subf %295, %311 : vector<18x32xf32>
    %cst_122 = arith.constant 9.99999974E-6 : f32
    %313 = vector.broadcast %cst_122 : f32 to vector<18x1xf32>
    %314 = arith.addf %310, %313 : vector<18x1xf32>
    %315 = math.rsqrt %314 : vector<18x1xf32>
    %316 = vector.broadcast %315 : vector<18x1xf32> to vector<18x32xf32>
    %317 = arith.mulf %312, %316 : vector<18x32xf32>
    %318 = vector.broadcast %297 : vector<1x32xf32> to vector<18x32xf32>
    %319 = arith.mulf %317, %318 : vector<18x32xf32>
    %320 = vector.broadcast %299 : vector<1x32xf32> to vector<18x32xf32>
    %321 = arith.addf %319, %320 : vector<18x32xf32>
    %c1_123 = arith.constant 1 : index
    %c0_124 = arith.constant 0 : index
    %c0_125 = arith.constant 0 : index
    %322 = vector.load %arg11[%c1_123, %c0_124, %c0_125] : memref<2x64x32xbf16, #tpu.memory_space<vmem>>, vector<1x64x32xbf16>
    %323 = vector.shape_cast %322 : vector<1x64x32xbf16> to vector<64x32xbf16>
    %324 = arith.truncf %321 : vector<18x32xf32> to vector<18x32xbf16>
    %cst_126 = arith.constant dense<0.000000e+00> : vector<18x64xf32>
    %325 = tpu.matmul %324, %323, %cst_126 {dimension_numbers = #tpu.dot_dimension_numbers<[1], [1], [0], [0], [0, 0, 1, 0], [], []>} : vector<18x32xbf16>, vector<64x32xbf16>, vector<18x64xf32> -> vector<18x64xf32>
    %c1_127 = arith.constant 1 : index
    %c0_128 = arith.constant 0 : index
    %c0_129 = arith.constant 0 : index
    %326 = vector.load %arg12[%c1_127, %c0_128, %c0_129] : memref<2x1x64xf32, #tpu.memory_space<vmem>>, vector<1x1x64xf32>
    %327 = vector.shape_cast %326 : vector<1x1x64xf32> to vector<1x64xf32>
    %328 = vector.broadcast %327 : vector<1x64xf32> to vector<18x64xf32>
    %329 = arith.addf %325, %328 : vector<18x64xf32>
    %cst_130 = arith.constant 0.000000e+00 : f32
    %330 = vector.broadcast %cst_130 : f32 to vector<18x64xf32>
    %331 = arith.maximumf %329, %330 : vector<18x64xf32>
    %c1_131 = arith.constant 1 : index
    %c0_132 = arith.constant 0 : index
    %c0_133 = arith.constant 0 : index
    %332 = vector.load %arg13[%c1_131, %c0_132, %c0_133] : memref<2x32x64xbf16, #tpu.memory_space<vmem>>, vector<1x32x64xbf16>
    %333 = vector.shape_cast %332 : vector<1x32x64xbf16> to vector<32x64xbf16>
    %334 = arith.truncf %331 : vector<18x64xf32> to vector<18x64xbf16>
    %cst_134 = arith.constant dense<0.000000e+00> : vector<18x32xf32>
    %335 = tpu.matmul %334, %333, %cst_134 {dimension_numbers = #tpu.dot_dimension_numbers<[1], [1], [0], [0], [0, 0, 1, 0], [], []>} : vector<18x64xbf16>, vector<32x64xbf16>, vector<18x32xf32> -> vector<18x32xf32>
    %c1_135 = arith.constant 1 : index
    %c0_136 = arith.constant 0 : index
    %c0_137 = arith.constant 0 : index
    %336 = vector.load %arg14[%c1_135, %c0_136, %c0_137] : memref<2x1x32xf32, #tpu.memory_space<vmem>>, vector<1x1x32xf32>
    %337 = vector.shape_cast %336 : vector<1x1x32xf32> to vector<1x32xf32>
    %338 = vector.broadcast %337 : vector<1x32xf32> to vector<18x32xf32>
    %339 = arith.addf %335, %338 : vector<18x32xf32>
    %340 = arith.addf %321, %339 : vector<18x32xf32>
    %c1_138 = arith.constant 1 : index
    %c0_139 = arith.constant 0 : index
    %c0_140 = arith.constant 0 : index
    %341 = vector.load %arg15[%c1_138, %c0_139, %c0_140] : memref<2x1x32xf32, #tpu.memory_space<vmem>>, vector<1x1x32xf32>
    %342 = vector.shape_cast %341 : vector<1x1x32xf32> to vector<1x32xf32>
    %c1_141 = arith.constant 1 : index
    %c0_142 = arith.constant 0 : index
    %c0_143 = arith.constant 0 : index
    %343 = vector.load %arg16[%c1_141, %c0_142, %c0_143] : memref<2x1x32xf32, #tpu.memory_space<vmem>>, vector<1x1x32xf32>
    %344 = vector.shape_cast %343 : vector<1x1x32xf32> to vector<1x32xf32>
    %cst_144 = arith.constant dense<0.000000e+00> : vector<18xf32>
    %345 = vector.multi_reduction <add>, %340, %cst_144 [1] : vector<18x32xf32> to vector<18xf32>
    %346 = vector.shape_cast %345 : vector<18xf32> to vector<18x1xf32>
    %cst_145 = arith.constant 3.200000e+01 : f32
    %347 = vector.broadcast %cst_145 : f32 to vector<18x1xf32>
    %348 = arith.divf %346, %347 : vector<18x1xf32>
    %349 = vector.broadcast %348 : vector<18x1xf32> to vector<18x32xf32>
    %350 = arith.subf %340, %349 : vector<18x32xf32>
    %351 = arith.mulf %350, %350 : vector<18x32xf32>
    %cst_146 = arith.constant dense<0.000000e+00> : vector<18xf32>
    %352 = vector.multi_reduction <add>, %351, %cst_146 [1] : vector<18x32xf32> to vector<18xf32>
    %353 = vector.shape_cast %352 : vector<18xf32> to vector<18x1xf32>
    %cst_147 = arith.constant 3.200000e+01 : f32
    %354 = vector.broadcast %cst_147 : f32 to vector<18x1xf32>
    %355 = arith.divf %353, %354 : vector<18x1xf32>
    %356 = vector.broadcast %348 : vector<18x1xf32> to vector<18x32xf32>
    %357 = arith.subf %340, %356 : vector<18x32xf32>
    %cst_148 = arith.constant 9.99999974E-6 : f32
    %358 = vector.broadcast %cst_148 : f32 to vector<18x1xf32>
    %359 = arith.addf %355, %358 : vector<18x1xf32>
    %360 = math.rsqrt %359 : vector<18x1xf32>
    %361 = vector.broadcast %360 : vector<18x1xf32> to vector<18x32xf32>
    %362 = arith.mulf %357, %361 : vector<18x32xf32>
    %363 = vector.broadcast %342 : vector<1x32xf32> to vector<18x32xf32>
    %364 = arith.mulf %362, %363 : vector<18x32xf32>
    %365 = vector.broadcast %344 : vector<1x32xf32> to vector<18x32xf32>
    %366 = arith.addf %364, %365 : vector<18x32xf32>
    %c0_149 = arith.constant 0 : index
    %c0_150 = arith.constant 0 : index
    %c0_151 = arith.constant 0 : index
    %367 = vector.load %arg17[%c0_149, %c0_150, %c0_151] : memref<1x18x32xf32, #tpu.memory_space<vmem>>, vector<1x18x32xf32>
    %368 = vector.shape_cast %367 : vector<1x18x32xf32> to vector<18x32xf32>
    %369 = vector.shape_cast %366 : vector<18x32xf32> to vector<1x18x32xf32>
    tpu.vector_store %arg17[%c0_149, %c0_150, %c0_151], %369 {strides = array<i32>} : memref<1x18x32xf32, #tpu.memory_space<vmem>>, vector<1x18x32xf32>,
    return
  }
  func.func @transform_0(%arg0: i32) -> (i32, i32, i32) {
    %c0_i32 = arith.constant 0 : i32
    %c0_i32_0 = arith.constant 0 : i32
    %c0_i32_1 = arith.constant 0 : i32
    return %arg0, %c0_i32, %c0_i32_0 : i32, i32, i32
  }
  func.func @transform_1(%arg0: i32) -> (i32, i32) {
    %c0_i32 = arith.constant 0 : i32
    %c0_i32_0 = arith.constant 0 : i32
    %c0_i32_1 = arith.constant 0 : i32
    return %c0_i32, %c0_i32_0 : i32, i32
  }
  func.func @transform_2(%arg0: i32) -> (i32, i32) {
    %c0_i32 = arith.constant 0 : i32
    %c0_i32_0 = arith.constant 0 : i32
    %c0_i32_1 = arith.constant 0 : i32
    return %c0_i32, %c0_i32_0 : i32, i32
  }
  func.func @transform_3(%arg0: i32) -> (i32, i32) {
    %c0_i32 = arith.constant 0 : i32
    %c0_i32_0 = arith.constant 0 : i32
    %c0_i32_1 = arith.constant 0 : i32
    return %c0_i32, %c0_i32_0 : i32, i32
  }
  func.func @transform_4(%arg0: i32) -> (i32, i32, i32) {
    %c0_i32 = arith.constant 0 : i32
    %c0_i32_0 = arith.constant 0 : i32
    %c0_i32_1 = arith.constant 0 : i32
    %c0_i32_2 = arith.constant 0 : i32
    return %c0_i32, %c0_i32_0, %c0_i32_1 : i32, i32, i32
  }
  func.func @transform_5(%arg0: i32) -> (i32, i32, i32) {
    %c0_i32 = arith.constant 0 : i32
    %c0_i32_0 = arith.constant 0 : i32
    %c0_i32_1 = arith.constant 0 : i32
    %c0_i32_2 = arith.constant 0 : i32
    return %c0_i32, %c0_i32_0, %c0_i32_1 : i32, i32, i32
  }
  func.func @transform_6(%arg0: i32) -> (i32, i32, i32) {
    %c0_i32 = arith.constant 0 : i32
    %c0_i32_0 = arith.constant 0 : i32
    %c0_i32_1 = arith.constant 0 : i32
    %c0_i32_2 = arith.constant 0 : i32
    return %c0_i32, %c0_i32_0, %c0_i32_1 : i32, i32, i32
  }
  func.func @transform_7(%arg0: i32) -> (i32, i32, i32) {
    %c0_i32 = arith.constant 0 : i32
    %c0_i32_0 = arith.constant 0 : i32
    %c0_i32_1 = arith.constant 0 : i32
    %c0_i32_2 = arith.constant 0 : i32
    return %c0_i32, %c0_i32_0, %c0_i32_1 : i32, i32, i32
  }
  func.func @transform_8(%arg0: i32) -> (i32, i32, i32) {
    %c0_i32 = arith.constant 0 : i32
    %c0_i32_0 = arith.constant 0 : i32
    %c0_i32_1 = arith.constant 0 : i32
    %c0_i32_2 = arith.constant 0 : i32
    return %c0_i32, %c0_i32_0, %c0_i32_1 : i32, i32, i32
  }
  func.func @transform_9(%arg0: i32) -> (i32, i32, i32) {
    %c0_i32 = arith.constant 0 : i32
    %c0_i32_0 = arith.constant 0 : i32
    %c0_i32_1 = arith.constant 0 : i32
    %c0_i32_2 = arith.constant 0 : i32
    return %c0_i32, %c0_i32_0, %c0_i32_1 : i32, i32, i32
  }
  func.func @transform_10(%arg0: i32) -> (i32, i32, i32) {
    %c0_i32 = arith.constant 0 : i32
    %c0_i32_0 = arith.constant 0 : i32
    %c0_i32_1 = arith.constant 0 : i32
    %c0_i32_2 = arith.constant 0 : i32
    return %c0_i32, %c0_i32_0, %c0_i32_1 : i32, i32, i32
  }
  func.func @transform_11(%arg0: i32) -> (i32, i32, i32) {
    %c0_i32 = arith.constant 0 : i32
    %c0_i32_0 = arith.constant 0 : i32
    %c0_i32_1 = arith.constant 0 : i32
    %c0_i32_2 = arith.constant 0 : i32
    return %c0_i32, %c0_i32_0, %c0_i32_1 : i32, i32, i32
  }
  func.func @transform_12(%arg0: i32) -> (i32, i32, i32) {
    %c0_i32 = arith.constant 0 : i32
    %c0_i32_0 = arith.constant 0 : i32
    %c0_i32_1 = arith.constant 0 : i32
    %c0_i32_2 = arith.constant 0 : i32
    return %c0_i32, %c0_i32_0, %c0_i32_1 : i32, i32, i32
  }
  func.func @transform_13(%arg0: i32) -> (i32, i32, i32) {
    %c0_i32 = arith.constant 0 : i32
    %c0_i32_0 = arith.constant 0 : i32
    %c0_i32_1 = arith.constant 0 : i32
    %c0_i32_2 = arith.constant 0 : i32
    return %c0_i32, %c0_i32_0, %c0_i32_1 : i32, i32, i32
  }
  func.func @transform_14(%arg0: i32) -> (i32, i32, i32) {
    %c0_i32 = arith.constant 0 : i32
    %c0_i32_0 = arith.constant 0 : i32
    %c0_i32_1 = arith.constant 0 : i32
    %c0_i32_2 = arith.constant 0 : i32
    return %c0_i32, %c0_i32_0, %c0_i32_1 : i32, i32, i32
  }
  func.func @transform_15(%arg0: i32) -> (i32, i32, i32) {
    %c0_i32 = arith.constant 0 : i32
    %c0_i32_0 = arith.constant 0 : i32
    %c0_i32_1 = arith.constant 0 : i32
    %c0_i32_2 = arith.constant 0 : i32
    return %c0_i32, %c0_i32_0, %c0_i32_1 : i32, i32, i32
  }
  func.func @transform_16(%arg0: i32) -> (i32, i32, i32) {
    %c0_i32 = arith.constant 0 : i32
    %c0_i32_0 = arith.constant 0 : i32
    %c0_i32_1 = arith.constant 0 : i32
    return %arg0, %c0_i32, %c0_i32_0 : i32, i32, i32
  }
}

</mosaic_0001>

<llo_original>
// kernel: split.9
$region0: #{split.9}
  #allocation0 [shape = 'u32[2048]{0}', space=vmem, size = 0x2000, scoped, tag = 'scoped memory for split.9']
  #allocation1 [shape = 'u32[2048]{0}', space=vmem, size = 0x2000, scoped, tag = 'scoped memory for split.9']
  #allocation2 [shape = 'u32[2048]{0}', space=vmem, size = 0x2000, scoped, tag = 'scoped memory for split.9']
  #allocation3 [shape = 'u32[2048]{0}', space=vmem, size = 0x2000, scoped, tag = 'scoped memory for split.9']
  #allocation4 [shape = 'u32[2048]{0}', space=vmem, size = 0x2000, scoped, tag = 'scoped memory for split.9']
  #allocation5 [shape = 's32[1]{0}', space=sflag, size = 0x4, scoped, tag = 'scoped memory for split.9']
  %s0 = inlined_call_operand.vmem [shape: f32[2,96,32], index: 0, kind: input, shape index: {}]
  %s1 = inlined_call_operand.vmem [shape: bf16[2,64,32], index: 1, kind: output, shape index: {}]
  %v2 = vld [vmem:[%s0] sm:$0xff]
  %v3 = vlaneseq
  %v4 = vand.u32 %v3, 127
  %vm5 = vcmp.lt.s32.totalorder %v4, 32
  %v6 = vsel %vm5, 0, %v2
  %7 = vrot.lane.b32.xlu0 %v6, 96
  %v8 = vpop.permute.xlu0 %7
  %v9 = vpack.i.bf16 %v8, 0.0
  %v10 = vpack.c.bf16 0.0, %v9
  %11 = vst [vmem:[%s1] sm:$0xf] %v10
  %s12 = scalar_lea.vmem %s0, 32
  %v13 = vld [vmem:[%s12] sm:$0xff]
  %v14 = vlaneseq
  %v15 = vand.u32 %v14, 127
  %vm16 = vcmp.lt.s32.totalorder %v15, 32
  %v17 = vsel %vm16, 0, %v13
  %18 = vrot.lane.b32.xlu0 %v17, 96
  %v19 = vpop.permute.xlu0 %18
  %v20 = vpack.i.bf16 %v19, 0.0
  %s21 = scalar_lea.vmem %s1, 16
  %v22 = vpack.c.bf16 0.0, %v20
  %23 = vst [vmem:[%s21] sm:$0xf] %v22
  %s24 = scalar_lea.vmem %s0, 8
  %v25 = vld [vmem:[%s24] sm:$0xff]
  %v26 = vlaneseq
  %v27 = vand.u32 %v26, 127
  %vm28 = vcmp.lt.s32.totalorder %v27, 32
  %v29 = vsel %vm28, 0, %v25
  %30 = vrot.lane.b32.xlu0 %v29, 96
  %v31 = vpop.permute.xlu0 %30
  %v32 = vpack.i.bf16 %v31, 0.0
  %s33 = scalar_lea.vmem %s1, 4
  %v34 = vpack.c.bf16 0.0, %v32
  %35 = vst [vmem:[%s33] sm:$0xf] %v34
  %s36 = scalar_lea.vmem %s0, 40
  %v37 = vld [vmem:[%s36] sm:$0xff]
  %v38 = vlaneseq
  %v39 = vand.u32 %v38, 127
  %vm40 = vcmp.lt.s32.totalorder %v39, 32
  %v41 = vsel %vm40, 0, %v37
  %42 = vrot.lane.b32.xlu0 %v41, 96
  %v43 = vpop.permute.xlu0 %42
  %v44 = vpack.i.bf16 %v43, 0.0
  %s45 = scalar_lea.vmem %s1, 20
  %v46 = vpack.c.bf16 0.0, %v44
  %47 = vst [vmem:[%s45] sm:$0xf] %v46
  %s48 = scalar_lea.vmem %s0, 16
  %v49 = vld [vmem:[%s48] sm:$0xff]
  %v50 = vlaneseq
  %v51 = vand.u32 %v50, 127
  %vm52 = vcmp.lt.s32.totalorder %v51, 32
  %v53 = vsel %vm52, 0, %v49
  %54 = vrot.lane.b32.xlu0 %v53, 96
  %v55 = vpop.permute.xlu0 %54
  %v56 = vpack.i.bf16 %v55, 0.0
  %s57 = scalar_lea.vmem %s1, 8
  %v58 = vpack.c.bf16 0.0, %v56
  %59 = vst [vmem:[%s57] sm:$0xf] %v58
  %s60 = scalar_lea.vmem %s0, 48
  %v61 = vld [vmem:[%s60] sm:$0xff]
  %v62 = vlaneseq
  %v63 = vand.u32 %v62, 127
  %vm64 = vcmp.lt.s32.totalorder %v63, 32
  %v65 = vsel %vm64, 0, %v61
  %66 = vrot.lane.b32.xlu0 %v65, 96
  %v67 = vpop.permute.xlu0 %66
  %v68 = vpack.i.bf16 %v67, 0.0
  %s69 = scalar_lea.vmem %s1, 24
  %v70 = vpack.c.bf16 0.0, %v68
  %71 = vst [vmem:[%s69] sm:$0xf] %v70
  %s72 = scalar_lea.vmem %s0, 24
  %v73 = vld [vmem:[%s72] sm:$0xff]
  %v74 = vlaneseq
  %v75 = vand.u32 %v74, 127
  %vm76 = vcmp.lt.s32.totalorder %v75, 32
  %v77 = vsel %vm76, 0, %v73
  %78 = vrot.lane.b32.xlu0 %v77, 96
  %v79 = vpop.permute.xlu0 %78
  %v80 = vpack.i.bf16 %v79, 0.0
  %s81 = scalar_lea.vmem %s1, 12
  %v82 = vpack.c.bf16 0.0, %v80
  %83 = vst [vmem:[%s81] sm:$0xf] %v82
  %s84 = scalar_lea.vmem %s0, 56
  %v85 = vld [vmem:[%s84] sm:$0xff]
  %v86 = vlaneseq
  %v87 = vand.u32 %v86, 127
  %vm88 = vcmp.lt.s32.totalorder %v87, 32
  %v89 = vsel %vm88, 0, %v85
  %90 = vrot.lane.b32.xlu0 %v89, 96
  %v91 = vpop.permute.xlu0 %90
  %v92 = vpack.i.bf16 %v91, 0.0
  %s93 = scalar_lea.vmem %s1, 28
  %v94 = vpack.c.bf16 0.0, %v92
  %95 = vst [vmem:[%s93] sm:$0xf] %v94

// kernel: split.7
$region0: #{split.7}
  #allocation0 [shape = 'u32[2048]{0}', space=vmem, size = 0x2000, scoped, tag = 'scoped memory for split.7']
  #allocation1 [shape = 'u32[2048]{0}', space=vmem, size = 0x2000, scoped, tag = 'scoped memory for split.7']
  #allocation2 [shape = 'u32[2048]{0}', space=vmem, size = 0x2000, scoped, tag = 'scoped memory for split.7']
  #allocation3 [shape = 'u32[2048]{0}', space=vmem, size = 0x2000, scoped, tag = 'scoped memory for split.7']
  #allocation4 [shape = 'u32[2048]{0}', space=vmem, size = 0x2000, scoped, tag = 'scoped memory for split.7']
  #allocation5 [shape = 's32[1]{0}', space=sflag, size = 0x4, scoped, tag = 'scoped memory for split.7']
  %s0 = inlined_call_operand.vmem [shape: f32[2,1,96], index: 0, kind: input, shape index: {}]
  %s1 = inlined_call_operand.vmem [shape: f32[2,1,64], index: 1, kind: output, shape index: {}]
  %v2 = vld [vmem:[%s0] sm:$0x1]
  %v3 = vlaneseq
  %v4 = vand.u32 %v3, 127
  %vm5 = vcmp.lt.s32.totalorder %v4, 32
  %v6 = vsel %vm5, 0, %v2
  %7 = vrot.lane.b32.xlu0 %v6, 96
  %v8 = vpop.permute.xlu0 %7
  %9 = vst [vmem:[%s1] sm:$0x1] %v8
  %s10 = scalar_lea.vmem %s0, 1
  %v11 = vld [vmem:[%s10] sm:$0x1]
  %v12 = vlaneseq
  %v13 = vand.u32 %v12, 127
  %vm14 = vcmp.lt.s32.totalorder %v13, 32
  %v15 = vsel %vm14, 0, %v11
  %16 = vrot.lane.b32.xlu0 %v15, 96
  %v17 = vpop.permute.xlu0 %16
  %s18 = scalar_lea.vmem %s1, 1
  %19 = vst [vmem:[%s18] sm:$0x1] %v17

// kernel: ast_forward.1
$region0: #{ast_forward.1}
  #allocation0 [shape = 'u32[]', space=smem, size = 0x4, offset = 0x4, fixed_abs, tag = 'smem constant byte address 0x4 - core index']
  #allocation1 [shape = 'u32[144,128]{1,0:T(1,128)}', space=vmem, size = 0x12000, scoped, tag = 'internal scratch']
  %s0 = inlined_call_operand.vmem [shape: f32[2,16,16], index: 0, kind: input, shape index: {}]
  %s1 = inlined_call_operand.vmem [shape: bf16[32,16], index: 1, kind: input, shape index: {}]
  %s2 = inlined_call_operand.vmem [shape: f32[16,32], index: 2, kind: input, shape index: {}]
  %s3 = inlined_call_operand.vmem [shape: f32[2,32], index: 3, kind: input, shape index: {}]
  %s4 = inlined_call_operand.vmem [shape: bf16[2,96,32], index: 4, kind: input, shape index: {}]
  %s5 = inlined_call_operand.vmem [shape: f32[2,1,96], index: 5, kind: input, shape index: {}]
  %s6 = inlined_call_operand.vmem [shape: bf16[2,32,32], index: 6, kind: input, shape index: {}]
  %s7 = inlined_call_operand.vmem [shape: f32[2,1,32], index: 7, kind: input, shape index: {}]
  %s8 = inlined_call_operand.vmem [shape: f32[2,1,32], index: 8, kind: input, shape index: {}]
  %s9 = inlined_call_operand.vmem [shape: f32[2,1,32], index: 9, kind: input, shape index: {}]
  %s10 = inlined_call_operand.vmem [shape: bf16[2,64,32], index: 10, kind: input, shape index: {}]
  %s11 = inlined_call_operand.vmem [shape: f32[2,1,64], index: 11, kind: input, shape index: {}]
  %s12 = inlined_call_operand.vmem [shape: bf16[2,32,64], index: 12, kind: input, shape index: {}]
  %s13 = inlined_call_operand.vmem [shape: f32[2,1,32], index: 13, kind: input, shape index: {}]
  %s14 = inlined_call_operand.vmem [shape: f32[2,1,32], index: 14, kind: input, shape index: {}]
  %s15 = inlined_call_operand.vmem [shape: f32[2,1,32], index: 15, kind: input, shape index: {}]
  %s16 = inlined_call_operand.vmem [shape: f32[2,18,32], index: 16, kind: output, shape index: {}]
  %s17 = sld [smem:[#allocation0]]
  $region97: #{ast_forward.1} parent=0
    _
  %s19 = ssub.s32 1, %s17
  %s20 = scalar_select 0, %s19, %s17
  loop: start=0, step=1, limit=4
  $region2: #{ast_forward.1} parent=0 // loop_pre_header
    _
  $region3: #{ast_forward.1} parent=0 // loop_header
    %s22 = sphi 0, %s26
    %p23 = scmp.ge.s32.totalorder %s22, 4
    %s32 = sphi 0, %s34
    %s35 = sphi 0, %s32
    %s36 = sphi 0, %s35
    %s52 = sphi 0, %s36
    %s56 = sphi 0, %s56
    %s58 = sphi 0, %s56
    %s59 = sphi 0, %s58
    %s73 = sphi 0, %s59
    %s77 = sphi 0, %s77
    %s79 = sphi 0, %s77
    %s80 = sphi 0, %s79
    %s94 = sphi 0, %s80
    %s98 = sphi 0, %s98
    %s100 = sphi 0, %s98
    %s101 = sphi 0, %s100
    %s115 = sphi 0, %s101
    %s119 = sphi 0, %s119
    %s121 = sphi 0, %s119
    %s122 = sphi 0, %s121
    %s136 = sphi 0, %s122
    %s140 = sphi 0, %s140
    %s142 = sphi 0, %s140
    %s143 = sphi 0, %s142
    %s157 = sphi 0, %s143
    %s161 = sphi 0, %s161
    %s163 = sphi 0, %s161
    %s164 = sphi 0, %s163
    %s178 = sphi 0, %s164
    %s182 = sphi 0, %s182
    %s184 = sphi 0, %s182
    %s185 = sphi 0, %s184
    %s199 = sphi 0, %s185
    %s203 = sphi 0, %s203
    %s205 = sphi 0, %s203
    %s206 = sphi 0, %s205
    %s220 = sphi 0, %s206
    %s224 = sphi 0, %s224
    %s226 = sphi 0, %s224
    %s227 = sphi 0, %s226
    %s241 = sphi 0, %s227
    %s245 = sphi 0, %s245
    %s247 = sphi 0, %s245
    %s248 = sphi 0, %s247
    %s262 = sphi 0, %s248
    %s266 = sphi 0, %s266
    %s268 = sphi 0, %s266
    %s269 = sphi 0, %s268
    %s283 = sphi 0, %s269
    %s287 = sphi 0, %s287
    %s289 = sphi 0, %s287
    %s290 = sphi 0, %s289
    %s304 = sphi 0, %s290
    %s308 = sphi 0, %s308
    %s310 = sphi 0, %s308
    %s311 = sphi 0, %s310
    %s325 = sphi 0, %s311
    %s329 = sphi 0, %s329
    %s331 = sphi 0, %s329
    %s332 = sphi 0, %s331
    %s346 = sphi 0, %s332
    %s350 = sphi 0, %s350
    %s352 = sphi 0, %s350
    %s353 = sphi 0, %s352
    %s367 = sphi 0, %s353
    %s373 = sphi 0, %s375
    %s376 = sphi 0, %s373
    %s377 = sphi 0, %s376
    %s393 = sphi 0, %s377
  $region4: #{ast_forward.1} parent=0 // loop_header_branch
    %25 = sbr.rel (%p23) target = $region8
  $region5: #{ast_forward.1} parent=0 // loop_body
    %s27 = ssub.s32 %s22, 1
    %s28 = ssub.s32 %s22, 2
    %s29 = sadd.s32 %s22, 1
    %s30 = ssub.s32 %s22, %s29
    %p31 = scmp.eq.s32.totalorder %s30, 0
    %s33 = sadd.s32 %s32, 1
    %s34 = scalar_select %p31, %s32, %s33
    %p37 = pneg %p31
    %p38 = scmp.eq.s32.totalorder %s22, 1
    %p39 = por %p37, %p38
    %p40 = scmp.ne.s32.totalorder %s32, %s35
    %p41 = scmp.eq.s32.totalorder %s22, 0
    %p42 = por %p40, %p41
    %p43 = scmp.ne.s32.totalorder %s32, %s35
    %p44 = scmp.eq.s32.totalorder %s27, 1
    %p45 = por %p43, %p44
    %p46 = scmp.ne.s32.totalorder %s35, %s36
    %p47 = scmp.eq.s32.totalorder %s27, 0
    %p48 = por %p46, %p47
    %p49 = scmp.ne.s32.totalorder %s35, %s36
    %p50 = scmp.eq.s32.totalorder %s28, 1
    %p51 = por %p49, %p50
    %p53 = scmp.ne.s32.totalorder %s36, %s52
    %p54 = scmp.eq.s32.totalorder %s28, 0
    %p55 = por %p53, %p54
    %s57 = sadd.s32 %s56, 1
    %p60 = scmp.eq.s32.totalorder %s22, 1
    %p61 = scmp.ne.s32.totalorder %s56, %s58
    %p62 = scmp.eq.s32.totalorder %s22, 0
    %p63 = por %p61, %p62
    %p64 = scmp.ne.s32.totalorder %s56, %s58
    %p65 = scmp.eq.s32.totalorder %s27, 1
    %p66 = por %p64, %p65
    %p67 = scmp.ne.s32.totalorder %s58, %s59
    %p68 = scmp.eq.s32.totalorder %s27, 0
    %p69 = por %p67, %p68
    %p70 = scmp.ne.s32.totalorder %s58, %s59
    %p71 = scmp.eq.s32.totalorder %s28, 1
    %p72 = por %p70, %p71
    %p74 = scmp.ne.s32.totalorder %s59, %s73
    %p75 = scmp.eq.s32.totalorder %s28, 0
    %p76 = por %p74, %p75
    %s78 = sadd.s32 %s77, 1
    %p81 = scmp.eq.s32.totalorder %s22, 1
    %p82 = scmp.ne.s32.totalorder %s77, %s79
    %p83 = scmp.eq.s32.totalorder %s22, 0
    %p84 = por %p82, %p83
    %p85 = scmp.ne.s32.totalorder %s77, %s79
    %p86 = scmp.eq.s32.totalorder %s27, 1
    %p87 = por %p85, %p86
    %p88 = scmp.ne.s32.totalorder %s79, %s80
    %p89 = scmp.eq.s32.totalorder %s27, 0
    %p90 = por %p88, %p89
    %p91 = scmp.ne.s32.totalorder %s79, %s80
    %p92 = scmp.eq.s32.totalorder %s28, 1
    %p93 = por %p91, %p92
    %p95 = scmp.ne.s32.totalorder %s80, %s94
    %p96 = scmp.eq.s32.totalorder %s28, 0
    %p97 = por %p95, %p96
    %s99 = sadd.s32 %s98, 1
    %p102 = scmp.eq.s32.totalorder %s22, 1
    %p103 = scmp.ne.s32.totalorder %s98, %s100
    %p104 = scmp.eq.s32.totalorder %s22, 0
    %p105 = por %p103, %p104
    %p106 = scmp.ne.s32.totalorder %s98, %s100
    %p107 = scmp.eq.s32.totalorder %s27, 1
    %p108 = por %p106, %p107
    %p109 = scmp.ne.s32.totalorder %s100, %s101
    %p110 = scmp.eq.s32.totalorder %s27, 0
    %p111 = por %p109, %p110
    %p112 = scmp.ne.s32.totalorder %s100, %s101
    %p113 = scmp.eq.s32.totalorder %s28, 1
    %p114 = por %p112, %p113
    %p116 = scmp.ne.s32.totalorder %s101, %s115
    %p117 = scmp.eq.s32.totalorder %s28, 0
    %p118 = por %p116, %p117
    %s120 = sadd.s32 %s119, 1
    %p123 = scmp.eq.s32.totalorder %s22, 1
    %p124 = scmp.ne.s32.totalorder %s119, %s121
    %p125 = scmp.eq.s32.totalorder %s22, 0
    %p126 = por %p124, %p125
    %p127 = scmp.ne.s32.totalorder %s119, %s121
    %p128 = scmp.eq.s32.totalorder %s27, 1
    %p129 = por %p127, %p128
    %p130 = scmp.ne.s32.totalorder %s121, %s122
    %p131 = scmp.eq.s32.totalorder %s27, 0
    %p132 = por %p130, %p131
    %p133 = scmp.ne.s32.totalorder %s121, %s122
    %p134 = scmp.eq.s32.totalorder %s28, 1
    %p135 = por %p133, %p134
    %p137 = scmp.ne.s32.totalorder %s122, %s136
    %p138 = scmp.eq.s32.totalorder %s28, 0
    %p139 = por %p137, %p138
    %s141 = sadd.s32 %s140, 1
    %p144 = scmp.eq.s32.totalorder %s22, 1
    %p145 = scmp.ne.s32.totalorder %s140, %s142
    %p146 = scmp.eq.s32.totalorder %s22, 0
    %p147 = por %p145, %p146
    %p148 = scmp.ne.s32.totalorder %s140, %s142
    %p149 = scmp.eq.s32.totalorder %s27, 1
    %p150 = por %p148, %p149
    %p151 = scmp.ne.s32.totalorder %s142, %s143
    %p152 = scmp.eq.s32.totalorder %s27, 0
    %p153 = por %p151, %p152
    %p154 = scmp.ne.s32.totalorder %s142, %s143
    %p155 = scmp.eq.s32.totalorder %s28, 1
    %p156 = por %p154, %p155
    %p158 = scmp.ne.s32.totalorder %s143, %s157
    %p159 = scmp.eq.s32.totalorder %s28, 0
    %p160 = por %p158, %p159
    %s162 = sadd.s32 %s161, 1
    %p165 = scmp.eq.s32.totalorder %s22, 1
    %p166 = scmp.ne.s32.totalorder %s161, %s163
    %p167 = scmp.eq.s32.totalorder %s22, 0
    %p168 = por %p166, %p167
    %p169 = scmp.ne.s32.totalorder %s161, %s163
    %p170 = scmp.eq.s32.totalorder %s27, 1
    %p171 = por %p169, %p170
    %p172 = scmp.ne.s32.totalorder %s163, %s164
    %p173 = scmp.eq.s32.totalorder %s27, 0
    %p174 = por %p172, %p173
    %p175 = scmp.ne.s32.totalorder %s163, %s164
    %p176 = scmp.eq.s32.totalorder %s28, 1
    %p177 = por %p175, %p176
    %p179 = scmp.ne.s32.totalorder %s164, %s178
    %p180 = scmp.eq.s32.totalorder %s28, 0
    %p181 = por %p179, %p180
    %s183 = sadd.s32 %s182, 1
    %p186 = scmp.eq.s32.totalorder %s22, 1
    %p187 = scmp.ne.s32.totalorder %s182, %s184
    %p188 = scmp.eq.s32.totalorder %s22, 0
    %p189 = por %p187, %p188
    %p190 = scmp.ne.s32.totalorder %s182, %s184
    %p191 = scmp.eq.s32.totalorder %s27, 1
    %p192 = por %p190, %p191
    %p193 = scmp.ne.s32.totalorder %s184, %s185
    %p194 = scmp.eq.s32.totalorder %s27, 0
    %p195 = por %p193, %p194
    %p196 = scmp.ne.s32.totalorder %s184, %s185
    %p197 = scmp.eq.s32.totalorder %s28, 1
    %p198 = por %p196, %p197
    %p200 = scmp.ne.s32.totalorder %s185, %s199
    %p201 = scmp.eq.s32.totalorder %s28, 0
    %p202 = por %p200, %p201
    %s204 = sadd.s32 %s203, 1
    %p207 = scmp.eq.s32.totalorder %s22, 1
    %p208 = scmp.ne.s32.totalorder %s203, %s205
    %p209 = scmp.eq.s32.totalorder %s22, 0
    %p210 = por %p208, %p209
    %p211 = scmp.ne.s32.totalorder %s203, %s205
    %p212 = scmp.eq.s32.totalorder %s27, 1
    %p213 = por %p211, %p212
    %p214 = scmp.ne.s32.totalorder %s205, %s206
    %p215 = scmp.eq.s32.totalorder %s27, 0
    %p216 = por %p214, %p215
    %p217 = scmp.ne.s32.totalorder %s205, %s206
    %p218 = scmp.eq.s32.totalorder %s28, 1
    %p219 = por %p217, %p218
    %p221 = scmp.ne.s32.totalorder %s206, %s220
    %p222 = scmp.eq.s32.totalorder %s28, 0
    %p223 = por %p221, %p222
    %s225 = sadd.s32 %s224, 1
    %p228 = scmp.eq.s32.totalorder %s22, 1
    %p229 = scmp.ne.s32.totalorder %s224, %s226
    %p230 = scmp.eq.s32.totalorder %s22, 0
    %p231 = por %p229, %p230
    %p232 = scmp.ne.s32.totalorder %s224, %s226
    %p233 = scmp.eq.s32.totalorder %s27, 1
    %p234 = por %p232, %p233
    %p235 = scmp.ne.s32.totalorder %s226, %s227
    %p236 = scmp.eq.s32.totalorder %s27, 0
    %p237 = por %p235, %p236
    %p238 = scmp.ne.s32.totalorder %s226, %s227
    %p239 = scmp.eq.s32.totalorder %s28, 1
    %p240 = por %p238, %p239
    %p242 = scmp.ne.s32.totalorder %s227, %s241
    %p243 = scmp.eq.s32.totalorder %s28, 0
    %p244 = por %p242, %p243
    %s246 = sadd.s32 %s245, 1
    %p249 = scmp.eq.s32.totalorder %s22, 1
    %p250 = scmp.ne.s32.totalorder %s245, %s247
    %p251 = scmp.eq.s32.totalorder %s22, 0
    %p252 = por %p250, %p251
    %p253 = scmp.ne.s32.totalorder %s245, %s247
    %p254 = scmp.eq.s32.totalorder %s27, 1
    %p255 = por %p253, %p254
    %p256 = scmp.ne.s32.totalorder %s247, %s248
    %p257 = scmp.eq.s32.totalorder %s27, 0
    %p258 = por %p256, %p257
    %p259 = scmp.ne.s32.totalorder %s247, %s248
    %p260 = scmp.eq.s32.totalorder %s28, 1
    %p261 = por %p259, %p260
    %p263 = scmp.ne.s32.totalorder %s248, %s262
    %p264 = scmp.eq.s32.totalorder %s28, 0
    %p265 = por %p263, %p264
    %s267 = sadd.s32 %s266, 1
    %p270 = scmp.eq.s32.totalorder %s22, 1
    %p271 = scmp.ne.s32.totalorder %s266, %s268
    %p272 = scmp.eq.s32.totalorder %s22, 0
    %p273 = por %p271, %p272
    %p274 = scmp.ne.s32.totalorder %s266, %s268
    %p275 = scmp.eq.s32.totalorder %s27, 1
    %p276 = por %p274, %p275
    %p277 = scmp.ne.s32.totalorder %s268, %s269
    %p278 = scmp.eq.s32.totalorder %s27, 0
    %p279 = por %p277, %p278
    %p280 = scmp.ne.s32.totalorder %s268, %s269
    %p281 = scmp.eq.s32.totalorder %s28, 1
    %p282 = por %p280, %p281
    %p284 = scmp.ne.s32.totalorder %s269, %s283
    %p285 = scmp.eq.s32.totalorder %s28, 0
    %p286 = por %p284, %p285
    %s288 = sadd.s32 %s287, 1
    %p291 = scmp.eq.s32.totalorder %s22, 1
    %p292 = scmp.ne.s32.totalorder %s287, %s289
    %p293 = scmp.eq.s32.totalorder %s22, 0
    %p294 = por %p292, %p293
    %p295 = scmp.ne.s32.totalorder %s287, %s289
    %p296 = scmp.eq.s32.totalorder %s27, 1
    %p297 = por %p295, %p296
    %p298 = scmp.ne.s32.totalorder %s289, %s290
    %p299 = scmp.eq.s32.totalorder %s27, 0
    %p300 = por %p298, %p299
    %p301 = scmp.ne.s32.totalorder %s289, %s290
    %p302 = scmp.eq.s32.totalorder %s28, 1
    %p303 = por %p301, %p302
    %p305 = scmp.ne.s32.totalorder %s290, %s304
    %p306 = scmp.eq.s32.totalorder %s28, 0
    %p307 = por %p305, %p306
    %s309 = sadd.s32 %s308, 1
    %p312 = scmp.eq.s32.totalorder %s22, 1
    %p313 = scmp.ne.s32.totalorder %s308, %s310
    %p314 = scmp.eq.s32.totalorder %s22, 0
    %p315 = por %p313, %p314
    %p316 = scmp.ne.s32.totalorder %s308, %s310
    %p317 = scmp.eq.s32.totalorder %s27, 1
    %p318 = por %p316, %p317
    %p319 = scmp.ne.s32.totalorder %s310, %s311
    %p320 = scmp.eq.s32.totalorder %s27, 0
    %p321 = por %p319, %p320
    %p322 = scmp.ne.s32.totalorder %s310, %s311
    %p323 = scmp.eq.s32.totalorder %s28, 1
    %p324 = por %p322, %p323
    %p326 = scmp.ne.s32.totalorder %s311, %s325
    %p327 = scmp.eq.s32.totalorder %s28, 0
    %p328 = por %p326, %p327
    %s330 = sadd.s32 %s329, 1
    %p333 = scmp.eq.s32.totalorder %s22, 1
    %p334 = scmp.ne.s32.totalorder %s329, %s331
    %p335 = scmp.eq.s32.totalorder %s22, 0
    %p336 = por %p334, %p335
    %p337 = scmp.ne.s32.totalorder %s329, %s331
    %p338 = scmp.eq.s32.totalorder %s27, 1
    %p339 = por %p337, %p338
    %p340 = scmp.ne.s32.totalorder %s331, %s332
    %p341 = scmp.eq.s32.totalorder %s27, 0
    %p342 = por %p340, %p341
    %p343 = scmp.ne.s32.totalorder %s331, %s332
    %p344 = scmp.eq.s32.totalorder %s28, 1
    %p345 = por %p343, %p344
    %p347 = scmp.ne.s32.totalorder %s332, %s346
    %p348 = scmp.eq.s32.totalorder %s28, 0
    %p349 = por %p347, %p348
    %s351 = sadd.s32 %s350, 1
    %p354 = scmp.eq.s32.totalorder %s22, 1
    %p355 = scmp.ne.s32.totalorder %s350, %s352
    %p356 = scmp.eq.s32.totalorder %s22, 0
    %p357 = por %p355, %p356
    %p358 = scmp.ne.s32.totalorder %s350, %s352
    %p359 = scmp.eq.s32.totalorder %s27, 1
    %p360 = por %p358, %p359
    %p361 = scmp.ne.s32.totalorder %s352, %s353
    %p362 = scmp.eq.s32.totalorder %s27, 0
    %p363 = por %p361, %p362
    %p364 = scmp.ne.s32.totalorder %s352, %s353
    %p365 = scmp.eq.s32.totalorder %s28, 1
    %p366 = por %p364, %p365
    %p368 = scmp.ne.s32.totalorder %s353, %s367
    %p369 = scmp.eq.s32.totalorder %s28, 0
    %p370 = por %p368, %p369
    %s371 = ssub.s32 %s22, %s29
    %p372 = scmp.eq.s32.totalorder %s371, 0
    %s374 = sadd.s32 %s373, 1
    %s375 = scalar_select %p372, %s373, %s374
    %p378 = pneg %p372
    %p379 = scmp.eq.s32.totalorder %s22, 1
    %p380 = por %p378, %p379
    %p381 = scmp.ne.s32.totalorder %s373, %s376
    %p382 = scmp.eq.s32.totalorder %s22, 0
    %p383 = por %p381, %p382
    %p384 = scmp.ne.s32.totalorder %s373, %s376
    %p385 = scmp.eq.s32.totalorder %s27, 1
    %p386 = por %p384, %p385
    %p387 = scmp.ne.s32.totalorder %s376, %s377
    %p388 = scmp.eq.s32.totalorder %s27, 0
    %p389 = por %p387, %p388
    %p390 = scmp.ne.s32.totalorder %s376, %s377
    %p391 = scmp.eq.s32.totalorder %s28, 1
    %p392 = por %p390, %p391
    %p394 = scmp.ne.s32.totalorder %s377, %s393
    %p395 = scmp.eq.s32.totalorder %s28, 0
    %p396 = por %p394, %p395
    %p397 = scmp.le.s32.totalorder 1, %s22
    %p398 = scmp.lt.s32.totalorder %s22, 3
    %p399 = pnand %p397, %p398
    %p400 = pneg %p399
    // Predicated region
    $region9: #{ast_forward.1} parent=5 // pred_check
      _
    $region10: #{ast_forward.1} parent=5 // pred_check_branch
      %402 = sbr.rel (%p399) target = $region12
    $region11: #{ast_forward.1} parent=5 // pred_region
      %s403 = ssub.s32 %s22, 1
      // Predicated region
      $region13: #{ast_forward.1} parent=11 // pred_check
        %p404 = pneg %p69
      $region14: #{ast_forward.1} parent=11 // pred_check_branch
        %406 = sbr.rel (%p404) target = $region16
      $region15: #{ast_forward.1} parent=11 // pred_region
        _
      $region16: #{ast_forward.1} parent=11 // pred_fallthru
        _
      // Predicated region
      $region17: #{ast_forward.1} parent=11 // pred_check
        %p407 = pneg %p90
      $region18: #{ast_forward.1} parent=11 // pred_check_branch
        %409 = sbr.rel (%p407) target = $region20
      $region19: #{ast_forward.1} parent=11 // pred_region
        _
      $region20: #{ast_forward.1} parent=11 // pred_fallthru
        _
      // Predicated region
      $region21: #{ast_forward.1} parent=11 // pred_check
        %p410 = pneg %p111
      $region22: #{ast_forward.1} parent=11 // pred_check_branch
        %412 = sbr.rel (%p410) target = $region24
      $region23: #{ast_forward.1} parent=11 // pred_region
        _
      $region24: #{ast_forward.1} parent=11 // pred_fallthru
        _
      // Predicated region
      $region25: #{ast_forward.1} parent=11 // pred_check
        %p413 = pneg %p132
      $region26: #{ast_forward.1} parent=11 // pred_check_branch
        %415 = sbr.rel (%p413) target = $region28
      $region27: #{ast_forward.1} parent=11 // pred_region
        _
      $region28: #{ast_forward.1} parent=11 // pred_fallthru
        _
      // Predicated region
      $region29: #{ast_forward.1} parent=11 // pred_check
        %p416 = pneg %p153
      $region30: #{ast_forward.1} parent=11 // pred_check_branch
        %418 = sbr.rel (%p416) target = $region32
      $region31: #{ast_forward.1} parent=11 // pred_region
        _
      $region32: #{ast_forward.1} parent=11 // pred_fallthru
        _
      // Predicated region
      $region33: #{ast_forward.1} parent=11 // pred_check
        %p419 = pneg %p174
      $region34: #{ast_forward.1} parent=11 // pred_check_branch
        %421 = sbr.rel (%p419) target = $region36
      $region35: #{ast_forward.1} parent=11 // pred_region
        _
      $region36: #{ast_forward.1} parent=11 // pred_fallthru
        _
      // Predicated region
      $region37: #{ast_forward.1} parent=11 // pred_check
        %p422 = pneg %p195
      $region38: #{ast_forward.1} parent=11 // pred_check_branch
        %424 = sbr.rel (%p422) target = $region40
      $region39: #{ast_forward.1} parent=11 // pred_region
        _
      $region40: #{ast_forward.1} parent=11 // pred_fallthru
        _
      // Predicated region
      $region41: #{ast_forward.1} parent=11 // pred_check
        %p425 = pneg %p216
      $region42: #{ast_forward.1} parent=11 // pred_check_branch
        %427 = sbr.rel (%p425) target = $region44
      $region43: #{ast_forward.1} parent=11 // pred_region
        _
      $region44: #{ast_forward.1} parent=11 // pred_fallthru
        _
      // Predicated region
      $region45: #{ast_forward.1} parent=11 // pred_check
        %p428 = pneg %p237
      $region46: #{ast_forward.1} parent=11 // pred_check_branch
        %430 = sbr.rel (%p428) target = $region48
      $region47: #{ast_forward.1} parent=11 // pred_region
        _
      $region48: #{ast_forward.1} parent=11 // pred_fallthru
        _
      // Predicated region
      $region49: #{ast_forward.1} parent=11 // pred_check
        %p431 = pneg %p258
      $region50: #{ast_forward.1} parent=11 // pred_check_branch
        %433 = sbr.rel (%p431) target = $region52
      $region51: #{ast_forward.1} parent=11 // pred_region
        _
      $region52: #{ast_forward.1} parent=11 // pred_fallthru
        _
      // Predicated region
      $region53: #{ast_forward.1} parent=11 // pred_check
        %p434 = pneg %p279
      $region54: #{ast_forward.1} parent=11 // pred_check_branch
        %436 = sbr.rel (%p434) target = $region56
      $region55: #{ast_forward.1} parent=11 // pred_region
        _
      $region56: #{ast_forward.1} parent=11 // pred_fallthru
        _
      // Predicated region
      $region57: #{ast_forward.1} parent=11 // pred_check
        %p437 = pneg %p300
      $region58: #{ast_forward.1} parent=11 // pred_check_branch
        %439 = sbr.rel (%p437) target = $region60
      $region59: #{ast_forward.1} parent=11 // pred_region
        _
      $region60: #{ast_forward.1} parent=11 // pred_fallthru
        _
      // Predicated region
      $region61: #{ast_forward.1} parent=11 // pred_check
        %p440 = pneg %p321
      $region62: #{ast_forward.1} parent=11 // pred_check_branch
        %442 = sbr.rel (%p440) target = $region64
      $region63: #{ast_forward.1} parent=11 // pred_region
        _
      $region64: #{ast_forward.1} parent=11 // pred_fallthru
        _
      // Predicated region
      $region65: #{ast_forward.1} parent=11 // pred_check
        %p443 = pneg %p342
      $region66: #{ast_forward.1} parent=11 // pred_check_branch
        %445 = sbr.rel (%p443) target = $region68
      $region67: #{ast_forward.1} parent=11 // pred_region
        _
      $region68: #{ast_forward.1} parent=11 // pred_fallthru
        _
      // Predicated region
      $region69: #{ast_forward.1} parent=11 // pred_check
        %p446 = pneg %p363
      $region70: #{ast_forward.1} parent=11 // pred_check_branch
        %448 = sbr.rel (%p446) target = $region72
      $region71: #{ast_forward.1} parent=11 // pred_region
        _
      $region72: #{ast_forward.1} parent=11 // pred_fallthru
        _
    $region12: #{ast_forward.1} parent=5 // pred_fallthru
      _
    %p449 = scmp.lt.s32.totalorder %s22, 2
    // Predicated region
    $region73: #{ast_forward.1} parent=5 // pred_check
      %p450 = pneg %p449
    $region74: #{ast_forward.1} parent=5 // pred_check_branch
      %452 = sbr.rel (%p450) target = $region76
    $region75: #{ast_forward.1} parent=5 // pred_region
      // Predicated region
      $region77: #{ast_forward.1} parent=75 // pred_check
        %p453 = pneg %p42
      $region78: #{ast_forward.1} parent=75 // pred_check_branch
        %455 = sbr.rel (%p453) target = $region80
      $region79: #{ast_forward.1} parent=75 // pred_region
        %p456 = scmp.lt.s32.totalorder %s22, 1
        %s457 = scalar_select %p456, %s22, 1
        %s458 = smul.addr %s457, 2
        %s459 = smul.addr %s458, 8
        %s460 = scalar_lea.vmem %s0, %s459
      $region80: #{ast_forward.1} parent=75 // pred_fallthru
        _
    $region76: #{ast_forward.1} parent=5 // pred_fallthru
      _
    %p461 = scmp.le.s32.totalorder 1, %s22
    %p462 = scmp.lt.s32.totalorder %s22, 3
    %p463 = pnand %p461, %p462
    %p464 = pneg %p463
    // Predicated region
    $region81: #{ast_forward.1} parent=5 // pred_check
      _
    $region82: #{ast_forward.1} parent=5 // pred_check_branch
      %466 = sbr.rel (%p463) target = $region84
    $region83: #{ast_forward.1} parent=5 // pred_region
      %s467 = ssub.s32 %s22, 1
      %p468 = scmp.lt.s32.totalorder %s27, 1
      %s469 = scalar_select %p468, %s27, 1
      %s470 = smul.addr %s469, 2
      %s471 = smul.addr %s470, 8
      %s472 = scalar_lea.vmem %s0, %s471
      %p473 = pneg %p48
      %p474 = pneg %p45
      %p475 = pneg %p69
      %p476 = pneg %p66
      %p477 = pneg %p90
      %p478 = pneg %p87
      %p479 = pneg %p111
      %p480 = pneg %p108
      %p481 = pneg %p132
      %p482 = pneg %p129
      %p483 = pneg %p153
      %p484 = pneg %p150
      %p485 = pneg %p174
      %p486 = pneg %p171
      %p487 = pneg %p195
      %p488 = pneg %p192
      %p489 = pneg %p216
      %p490 = pneg %p213
      %p491 = pneg %p237
      %p492 = pneg %p234
      %p493 = pneg %p258
      %p494 = pneg %p255
      %p495 = pneg %p279
      %p496 = pneg %p276
      %p497 = pneg %p300
      %p498 = pneg %p297
      %p499 = pneg %p321
      %p500 = pneg %p318
      %p501 = pneg %p342
      %p502 = pneg %p339
      %p503 = pneg %p363
      %p504 = pneg %p360
      %p505 = pneg %p389
      %p506 = pneg %p386
      %p507 = scmp.lt.s32.totalorder %s27, 1
      %s508 = scalar_select %p507, %s27, 1
      %s509 = smul.addr %s508, 3
      %s510 = smul.addr %s509, 8
      %s511 = scalar_lea.vmem %s16, %s510
      %p512 = scmp.lt.s32.totalorder %s27, 1
      %s513 = scalar_select %p512, %s27, 1
      %s514 = smul.addr %s513, 2
      %s515 = smul.addr %s514, 8
      %s516 = scalar_lea.vmem %s0, %s515
      %p517 = scmp.lt.s32.totalorder %s27, 1
      %s518 = scalar_select %p517, %s27, 1
      %s519 = smul.addr %s518, 3
      %s520 = smul.addr %s519, 8
      %s521 = scalar_lea.vmem %s16, %s520
      %v523 = vld [vmem:[%s516] sm:$0xff]
      %v524 = vld [vmem:[%s516 + $0x8] sm:$0xff]
      %v525 = vld [vmem:[%s1] sm:$0xf]
      %v526 = vld [vmem:[%s1 + $0x4] sm:$0xf]
      %v527 = vld [vmem:[%s1 + $0x8] sm:$0xf]
      %v528 = vld [vmem:[%s1 + $0xc] sm:$0xf]
      %v529 = vpack.c.bf16 %v524, %v523
      %v530 = vld [vmem:[%s2] sm:$0xff]
      %v531 = vld [vmem:[%s2 + $0x8] sm:$0xff]
      %v536 = vunpack.c.l.b16 %v525
      %v537 = vunpack.c.l.b16 %v526
      %v538 = vunpack.c.l.b16 %v527
      %v539 = vunpack.c.l.b16 %v528
      %v540 = vpack.c.b16 %v537, %v536
      %v541 = vpack.c.b16 %v539, %v538
      %vm542 = vcmask 130048
      %v544 = vsel %vm542, %v529, 0
      %v547 = vsel %vm542, %v540, 0
      %v550 = vsel %vm542, %v541, 0
      %552 = vmatprep.subr.bf16.mxu0 0
      %553 = vmatpush1.bf16.xpose.msra.mxu0 %v547
      %554 = vmatprep.subr.bf16.mxu0 0
      %555 = vmatpush1.bf16.xpose.msra.mxu0 %v550
      %556 = vmatprep.subr.bf16.mxu0 0
      %557 = vmatpush1.bf16.xpose.msra.mxu0 0
      %558 = vmatprep.subr.bf16.mxu0 0
      %559 = vmatpush1.bf16.xpose.msra.mxu0 0
      %560 = vmatprep.subr.bf16.mxu0 0
      %561 = vmatpush1.bf16.xpose.msra.mxu0 0
      %562 = vmatprep.subr.bf16.mxu0 0
      %563 = vmatpush1.bf16.xpose.msra.mxu0 0
      %564 = vmatprep.subr.bf16.mxu0 0
      %565 = vmatpush1.bf16.xpose.msra.mxu0 0
      %566 = vmatprep.subr.bf16.mxu0 0
      %567 = vmatpush1.bf16.xpose.msra.mxu0 0
      %568 = vmatprep.subr.bf16.mxu0 0
      %569 = vmatpush1.bf16.xpose.msra.mxu0 0
      %570 = vmatprep.subr.bf16.mxu0 0
      %571 = vmatpush1.bf16.xpose.msra.mxu0 0
      %572 = vmatprep.subr.bf16.mxu0 0
      %573 = vmatpush1.bf16.xpose.msra.mxu0 0
      %574 = vmatprep.subr.bf16.mxu0 0
      %575 = vmatpush1.bf16.xpose.msra.mxu0 0
      %576 = vmatprep.subr.bf16.mxu0 0
      %577 = vmatpush1.bf16.xpose.msra.mxu0 0
      %578 = vmatprep.subr.bf16.mxu0 0
      %579 = vmatpush1.bf16.xpose.msra.mxu0 0
      %580 = vmatprep.subr.bf16.mxu0 0
      %581 = vmatpush1.bf16.xpose.msra.mxu0 0
      %582 = vmatprep.subr.bf16.mxu0 0
      %583 = vmatpush1.bf16.xpose.msra.mxu0 0
      %584 = vmatprep.mubr.bf16.mxu0 0
      %585 = vmatmul.mubr.bf16.gmra.mrb[0].mxu0 %v544
      %v586 = vpop.f32.mrb[0].mxu0
      %v587 = vadd.f32 %v530, %v586
      %v588 = vpop.f32.mrb[0].mxu0
      %v589 = vpop.f32.mrb[0].mxu0
      %v590 = vadd.f32 %v531, %v589
      %v591 = vpop.f32.mrb[0].mxu0
      %592 = vdwg.mxu0
      %v593 = vld [vmem:[%s3] sm:$0x3]
      %vm596 = vcmask 1041408
      %v597 = vrot.slane %v587, 6
      %v598 = vrot.slane %v590, 6
      %v599 = vsel %vm596, %v597, %v598
      %v603 = vsel %vm596, %v593, %v597
      %v604 = vld [vmem:[%s4] sm:$0xf]
      %v605 = vld [vmem:[%s4 + $0x4] sm:$0xf]
      %v606 = vld [vmem:[%s4 + $0x8] sm:$0xf]
      %v607 = vld [vmem:[%s4 + $0xc] sm:$0xf]
      %v608 = vld [vmem:[%s4 + $0x10] sm:$0xf]
      %v609 = vld [vmem:[%s4 + $0x14] sm:$0xf]
      %v610 = vld [vmem:[%s4 + $0x18] sm:$0xf]
      %v611 = vld [vmem:[%s4 + $0x1c] sm:$0xf]
      %v612 = vld [vmem:[%s4 + $0x20] sm:$0xf]
      %v613 = vld [vmem:[%s4 + $0x24] sm:$0xf]
      %v614 = vld [vmem:[%s4 + $0x28] sm:$0xf]
      %v615 = vld [vmem:[%s4 + $0x2c] sm:$0xf]
      %v616 = vpack.c.bf16 %v599, %v603
      %v617 = vpack.c.bf16 %v598, %v598
      %v618 = vld [vmem:[%s5] sm:$0x1]
      %v620 = vlaneseq
      %v621 = vshrl.u32 %v620, 7
      %v622 = vsub.s32 0, %v621
      %v623 = vrot.slane %v618, %v622
      %v637 = vunpack.c.l.b16 %v604
      %v638 = vunpack.c.l.b16 %v605
      %v639 = vunpack.c.l.b16 %v606
      %v640 = vunpack.c.l.b16 %v607
      %v641 = vunpack.c.l.b16 %v608
      %v642 = vunpack.c.l.b16 %v609
      %v643 = vunpack.c.l.b16 %v610
      %v644 = vunpack.c.l.b16 %v611
      %v645 = vunpack.c.l.b16 %v612
      %v646 = vunpack.c.l.b16 %v613
      %v647 = vunpack.c.l.b16 %v614
      %v648 = vunpack.c.l.b16 %v615
      %v649 = vpack.c.b16 %v638, %v637
      %v650 = vpack.c.b16 %v640, %v639
      %v651 = vpack.c.b16 %v642, %v641
      %v652 = vpack.c.b16 %v644, %v643
      %v653 = vpack.c.b16 %v646, %v645
      %v654 = vpack.c.b16 %v648, %v647
      %vm655 = vcmask 261120
      %v657 = vsel %vm655, %v616, 0
      %v660 = vsel %vm655, %v617, 0
      %v663 = vsel %vm655, %v649, 0
      %v666 = vsel %vm655, %v650, 0
      %v669 = vsel %vm655, %v651, 0
      %v672 = vsel %vm655, %v652, 0
      %v675 = vsel %vm655, %v653, 0
      %v678 = vsel %vm655, %v654, 0
      %680 = vmatprep.subr.bf16.mxu0 0
      %681 = vmatpush1.bf16.xpose.msra.mxu0 %v663
      %682 = vmatprep.subr.bf16.mxu0 0
      %683 = vmatpush1.bf16.xpose.msra.mxu0 %v666
      %684 = vmatprep.subr.bf16.mxu0 0
      %685 = vmatpush1.bf16.xpose.msra.mxu0 %v669
      %686 = vmatprep.subr.bf16.mxu0 0
      %687 = vmatpush1.bf16.xpose.msra.mxu0 %v672
      %688 = vmatprep.subr.bf16.mxu0 0
      %689 = vmatpush1.bf16.xpose.msra.mxu0 %v675
      %690 = vmatprep.subr.bf16.mxu0 0
      %691 = vmatpush1.bf16.xpose.msra.mxu0 %v678
      %692 = vmatprep.subr.bf16.mxu0 0
      %693 = vmatpush1.bf16.xpose.msra.mxu0 0
      %694 = vmatprep.subr.bf16.mxu0 0
      %695 = vmatpush1.bf16.xpose.msra.mxu0 0
      %696 = vmatprep.subr.bf16.mxu0 0
      %697 = vmatpush1.bf16.xpose.msra.mxu0 0
      %698 = vmatprep.subr.bf16.mxu0 0
      %699 = vmatpush1.bf16.xpose.msra.mxu0 0
      %700 = vmatprep.subr.bf16.mxu0 0
      %701 = vmatpush1.bf16.xpose.msra.mxu0 0
      %702 = vmatprep.subr.bf16.mxu0 0
      %703 = vmatpush1.bf16.xpose.msra.mxu0 0
      %704 = vmatprep.subr.bf16.mxu0 0
      %705 = vmatpush1.bf16.xpose.msra.mxu0 0
      %706 = vmatprep.subr.bf16.mxu0 0
      %707 = vmatpush1.bf16.xpose.msra.mxu0 0
      %708 = vmatprep.subr.bf16.mxu0 0
      %709 = vmatpush1.bf16.xpose.msra.mxu0 0
      %710 = vmatprep.subr.bf16.mxu0 0
      %711 = vmatpush1.bf16.xpose.msra.mxu0 0
      %712 = vmatprep.mubr.bf16.mxu0 0
      %713 = vmatmul.mubr.bf16.gmra.mrb[0].mxu0 %v657
      %v714 = vpop.f32.mrb[0].mxu0
      %v715 = vadd.f32 %v623, %v714
      %v716 = vpop.f32.mrb[0].mxu0
      %v717 = vpop.f32.mrb[0].mxu0
      %v718 = vadd.f32 %v623, %v717
      %v719 = vpop.f32.mrb[0].mxu0
      %720 = vmatprep.mubr.bf16.mxu0 0
      %721 = vmatmul.mubr.bf16.gmra.mrb[0].mxu0 %v660
      %v722 = vpop.f32.mrb[0].mxu0
      %v723 = vadd.f32 %v623, %v722
      %v724 = vpop.f32.mrb[0].mxu0
      %v725 = vpop.f32.mrb[0].mxu0
      %v726 = vpop.f32.mrb[0].mxu0
      %727 = vdwg.mxu0
      %v728 = vld [vmem:[%s6] sm:$0xf]
      %v729 = vld [vmem:[%s6 + $0x4] sm:$0xf]
      %v730 = vld [vmem:[%s6 + $0x8] sm:$0xf]
      %v731 = vld [vmem:[%s6 + $0xc] sm:$0xf]
      %v732 = vpack.c.bf16 %v718, %v715
      %v733 = vpack.c.bf16 %v723, %v723
      %736 = vrot.lane.b32.xlu0 %v732, 96
      %v737 = vpop.permute.xlu0 %736
      %738 = vrot.lane.b32.xlu0 %v733, 96
      %v739 = vpop.permute.xlu0 %738
      %vm740 = vcmask 64512
      %v742 = vsel %vm740, %v732, 0
      %v745 = vsel %vm740, %v733, 0
      %v748 = vsel %vm740, %v737, 0
      %v751 = vsel %vm740, %v739, 0
      %753 = vmatprep.subr.bf16.mxu0 0
      %754 = vmatpush1.bf16.xpose.msra.mxu0 %v748
      %755 = vmatprep.subr.bf16.mxu0 0
      %756 = vmatpush1.bf16.xpose.msra.mxu0 %v751
      %757 = vmatprep.subr.bf16.mxu0 0
      %758 = vmatpush1.bf16.xpose.msra.mxu0 0
      %759 = vmatprep.subr.bf16.mxu0 0
      %760 = vmatpush1.bf16.xpose.msra.mxu0 0
      %761 = vmatprep.subr.bf16.mxu0 0
      %762 = vmatpush1.bf16.xpose.msra.mxu0 0
      %763 = vmatprep.subr.bf16.mxu0 0
      %764 = vmatpush1.bf16.xpose.msra.mxu0 0
      %765 = vmatprep.subr.bf16.mxu0 0
      %766 = vmatpush1.bf16.xpose.msra.mxu0 0
      %767 = vmatprep.subr.bf16.mxu0 0
      %768 = vmatpush1.bf16.xpose.msra.mxu0 0
      %769 = vmatprep.subr.bf16.mxu0 0
      %770 = vmatpush1.bf16.xpose.msra.mxu0 0
      %771 = vmatprep.subr.bf16.mxu0 0
      %772 = vmatpush1.bf16.xpose.msra.mxu0 0
      %773 = vmatprep.subr.bf16.mxu0 0
      %774 = vmatpush1.bf16.xpose.msra.mxu0 0
      %775 = vmatprep.subr.bf16.mxu0 0
      %776 = vmatpush1.bf16.xpose.msra.mxu0 0
      %777 = vmatprep.subr.bf16.mxu0 0
      %778 = vmatpush1.bf16.xpose.msra.mxu0 0
      %779 = vmatprep.subr.bf16.mxu0 0
      %780 = vmatpush1.bf16.xpose.msra.mxu0 0
      %781 = vmatprep.subr.bf16.mxu0 0
      %782 = vmatpush1.bf16.xpose.msra.mxu0 0
      %783 = vmatprep.subr.bf16.mxu0 0
      %784 = vmatpush1.bf16.xpose.msra.mxu0 0
      %785 = vmatprep.mubr.bf16.mxu0 0
      %786 = vmatmul.mubr.bf16.gmra.mrb[0].mxu0 %v742
      %v787 = vpop.f32.mrb[0].mxu0
      %v788 = vadd.f32 0.0, %v787
      %v789 = vpop.f32.mrb[0].mxu0
      %v790 = vpop.f32.mrb[0].mxu0
      %v791 = vadd.f32 0.0, %v790
      %v792 = vpop.f32.mrb[0].mxu0
      %793 = vmatprep.mubr.bf16.mxu0 0
      %794 = vmatmul.mubr.bf16.gmra.mrb[0].mxu0 %v745
      %v795 = vpop.f32.mrb[0].mxu0
      %v796 = vadd.f32 0.0, %v795
      %v797 = vpop.f32.mrb[0].mxu0
      %v798 = vpop.f32.mrb[0].mxu0
      %v799 = vpop.f32.mrb[0].mxu0
      %800 = vdwg.mxu0
      %vm801 = vcmask 146432
      %v802 = vsel %vm801, %v788, -inf
      %803 = vmax.xlane.f32.xlu0 %v802
      %v804 = vpop.xlane.xlu0 %803
      %v805 = vsel %vm801, %v791, -inf
      %806 = vmax.xlane.f32.xlu0 %v805
      %v807 = vpop.xlane.xlu0 %806
      %vm808 = vcmask 140288
      %v809 = vsel %vm808, %v796, -inf
      %810 = vmax.xlane.f32.xlu0 %v809
      %v811 = vpop.xlane.xlu0 %810
      %v812 = vsub.f32 %v788, %v804
      %v813 = vsub.f32 %v791, %v807
      %v814 = vsub.f32 %v796, %v811
      %v815 = vmul.f32 %v812, 1.442695
      %v816 = vpow.pop %v815
      %v817 = vmul.f32 %v813, 1.442695
      %v818 = vpow.pop %v817
      %v819 = vmul.f32 %v814, 1.442695
      %v820 = vpow.pop %v819
      %v821 = vsel %vm801, %v816, 0.0
      %822 = vadd.xlane.f32.xlu0 %v821
      %v823 = vpop.xlane.xlu0 %822
      %v824 = vsel %vm801, %v818, 0.0
      %825 = vadd.xlane.f32.xlu0 %v824
      %v826 = vpop.xlane.xlu0 %825
      %v827 = vsel %vm808, %v820, 0.0
      %828 = vadd.xlane.f32.xlu0 %v827
      %v829 = vpop.xlane.xlu0 %828
      %v830 = vrcp.pop %v823
      %v831 = vrcp.pop %v826
      %v832 = vrcp.pop %v829
      %v833 = vpack.c.bf16 %v818, %v816
      %v834 = vpack.c.bf16 %v820, %v820
      %835 = vrot.lane.b32.xlu0 %v732, 64
      %v836 = vpop.permute.xlu0 %835
      %837 = vrot.lane.b32.xlu0 %v733, 64
      %v838 = vpop.permute.xlu0 %837
      %v841 = vsel %vm801, %v833, 0
      %v844 = vsel %vm801, %v834, 0
      %vm846 = vcmask 1040384
      %v848 = vsel %vm846, %v838, 0
      %850 = vmatprep.subr.bf16.mxu0 0
      %851 = vmatpush1.bf16.msra.mxu0 %v836
      %852 = vmatprep.subr.bf16.mxu0 0
      %853 = vmatpush1.bf16.msra.mxu0 %v848
      %854 = vmatprep.subr.bf16.mxu0 0
      %855 = vmatpush1.bf16.msra.mxu0 0
      %856 = vmatprep.subr.bf16.mxu0 0
      %857 = vmatpush1.bf16.msra.mxu0 0
      %858 = vmatprep.subr.bf16.mxu0 0
      %859 = vmatpush1.bf16.msra.mxu0 0
      %860 = vmatprep.subr.bf16.mxu0 0
      %861 = vmatpush1.bf16.msra.mxu0 0
      %862 = vmatprep.subr.bf16.mxu0 0
      %863 = vmatpush1.bf16.msra.mxu0 0
      %864 = vmatprep.subr.bf16.mxu0 0
      %865 = vmatpush1.bf16.msra.mxu0 0
      %866 = vmatprep.subr.bf16.mxu0 0
      %867 = vmatpush1.bf16.msra.mxu0 0
      %868 = vmatprep.subr.bf16.mxu0 0
      %869 = vmatpush1.bf16.msra.mxu0 0
      %870 = vmatprep.subr.bf16.mxu0 0
      %871 = vmatpush1.bf16.msra.mxu0 0
      %872 = vmatprep.subr.bf16.mxu0 0
      %873 = vmatpush1.bf16.msra.mxu0 0
      %874 = vmatprep.subr.bf16.mxu0 0
      %875 = vmatpush1.bf16.msra.mxu0 0
      %876 = vmatprep.subr.bf16.mxu0 0
      %877 = vmatpush1.bf16.msra.mxu0 0
      %878 = vmatprep.subr.bf16.mxu0 0
      %879 = vmatpush1.bf16.msra.mxu0 0
      %880 = vmatprep.subr.bf16.mxu0 0
      %881 = vmatpush1.bf16.msra.mxu0 0
      %882 = vmatprep.mubr.bf16.mxu0 0
      %883 = vmatmul.mubr.bf16.gmra.mrb[0].mxu0 %v841
      %v884 = vpop.f32.mrb[0].mxu0
      %v885 = vadd.f32 0.0, %v884
      %v886 = vpop.f32.mrb[0].mxu0
      %v887 = vpop.f32.mrb[0].mxu0
      %v888 = vadd.f32 0.0, %v887
      %v889 = vpop.f32.mrb[0].mxu0
      %890 = vmatprep.mubr.bf16.mxu0 0
      %891 = vmatmul.mubr.bf16.gmra.mrb[0].mxu0 %v844
      %v892 = vpop.f32.mrb[0].mxu0
      %v893 = vadd.f32 0.0, %v892
      %v894 = vpop.f32.mrb[0].mxu0
      %v895 = vpop.f32.mrb[0].mxu0
      %v896 = vpop.f32.mrb[0].mxu0
      %897 = vdwg.mxu0
      %v898 = vmul.f32 %v885, %v830
      %v899 = vmul.f32 %v888, %v831
      %v900 = vmul.f32 %v893, %v832
      %v901 = vpack.c.bf16 %v899, %v898
      %v902 = vpack.c.bf16 %v900, %v900
      %903 = vrot.lane.b32.xlu0 %v732, 120
      %v904 = vpop.permute.xlu0 %903
      %905 = vrot.lane.b32.xlu0 %v733, 120
      %v906 = vpop.permute.xlu0 %905
      %907 = vrot.lane.b32.xlu0 %v732, 88
      %v908 = vpop.permute.xlu0 %907
      %909 = vrot.lane.b32.xlu0 %v733, 88
      %v910 = vpop.permute.xlu0 %909
      %v912 = vsel %vm740, %v904, 0
      %v915 = vsel %vm740, %v906, 0
      %v918 = vsel %vm740, %v908, 0
      %v921 = vsel %vm740, %v910, 0
      %923 = vmatprep.subr.bf16.mxu0 0
      %924 = vmatpush1.bf16.xpose.msra.mxu0 %v918
      %925 = vmatprep.subr.bf16.mxu0 0
      %926 = vmatpush1.bf16.xpose.msra.mxu0 %v921
      %927 = vmatprep.subr.bf16.mxu0 0
      %928 = vmatpush1.bf16.xpose.msra.mxu0 0
      %929 = vmatprep.subr.bf16.mxu0 0
      %930 = vmatpush1.bf16.xpose.msra.mxu0 0
      %931 = vmatprep.subr.bf16.mxu0 0
      %932 = vmatpush1.bf16.xpose.msra.mxu0 0
      %933 = vmatprep.subr.bf16.mxu0 0
      %934 = vmatpush1.bf16.xpose.msra.mxu0 0
      %935 = vmatprep.subr.bf16.mxu0 0
      %936 = vmatpush1.bf16.xpose.msra.mxu0 0
      %937 = vmatprep.subr.bf16.mxu0 0
      %938 = vmatpush1.bf16.xpose.msra.mxu0 0
      %939 = vmatprep.subr.bf16.mxu0 0
      %940 = vmatpush1.bf16.xpose.msra.mxu0 0
      %941 = vmatprep.subr.bf16.mxu0 0
      %942 = vmatpush1.bf16.xpose.msra.mxu0 0
      %943 = vmatprep.subr.bf16.mxu0 0
      %944 = vmatpush1.bf16.xpose.msra.mxu0 0
      %945 = vmatprep.subr.bf16.mxu0 0
      %946 = vmatpush1.bf16.xpose.msra.mxu0 0
      %947 = vmatprep.subr.bf16.mxu0 0
      %948 = vmatpush1.bf16.xpose.msra.mxu0 0
      %949 = vmatprep.subr.bf16.mxu0 0
      %950 = vmatpush1.bf16.xpose.msra.mxu0 0
      %951 = vmatprep.subr.bf16.mxu0 0
      %952 = vmatpush1.bf16.xpose.msra.mxu0 0
      %953 = vmatprep.subr.bf16.mxu0 0
      %954 = vmatpush1.bf16.xpose.msra.mxu0 0
      %955 = vmatprep.mubr.bf16.mxu0 0
      %956 = vmatmul.mubr.bf16.gmra.mrb[0].mxu0 %v912
      %v957 = vpop.f32.mrb[0].mxu0
      %v958 = vadd.f32 0.0, %v957
      %v959 = vpop.f32.mrb[0].mxu0
      %v960 = vpop.f32.mrb[0].mxu0
      %v961 = vadd.f32 0.0, %v960
      %v962 = vpop.f32.mrb[0].mxu0
      %963 = vmatprep.mubr.bf16.mxu0 0
      %964 = vmatmul.mubr.bf16.gmra.mrb[0].mxu0 %v915
      %v965 = vpop.f32.mrb[0].mxu0
      %v966 = vadd.f32 0.0, %v965
      %v967 = vpop.f32.mrb[0].mxu0
      %v968 = vpop.f32.mrb[0].mxu0
      %v969 = vpop.f32.mrb[0].mxu0
      %970 = vdwg.mxu0
      %v971 = vsel %vm801, %v958, -inf
      %972 = vmax.xlane.f32.xlu0 %v971
      %v973 = vpop.xlane.xlu0 %972
      %v974 = vsel %vm801, %v961, -inf
      %975 = vmax.xlane.f32.xlu0 %v974
      %v976 = vpop.xlane.xlu0 %975
      %v977 = vsel %vm808, %v966, -inf
      %978 = vmax.xlane.f32.xlu0 %v977
      %v979 = vpop.xlane.xlu0 %978
      %v980 = vsub.f32 %v958, %v973
      %v981 = vsub.f32 %v961, %v976
      %v982 = vsub.f32 %v966, %v979
      %v983 = vmul.f32 %v980, 1.442695
      %v984 = vpow.pop %v983
      %v985 = vmul.f32 %v981, 1.442695
      %v986 = vpow.pop %v985
      %v987 = vmul.f32 %v982, 1.442695
      %v988 = vpow.pop %v987
      %v989 = vsel %vm801, %v984, 0.0
      %990 = vadd.xlane.f32.xlu0 %v989
      %v991 = vpop.xlane.xlu0 %990
      %v992 = vsel %vm801, %v986, 0.0
      %993 = vadd.xlane.f32.xlu0 %v992
      %v994 = vpop.xlane.xlu0 %993
      %v995 = vsel %vm808, %v988, 0.0
      %996 = vadd.xlane.f32.xlu0 %v995
      %v997 = vpop.xlane.xlu0 %996
      %v998 = vrcp.pop %v991
      %v999 = vrcp.pop %v994
      %v1000 = vrcp.pop %v997
      %v1001 = vpack.c.bf16 %v986, %v984
      %v1002 = vpack.c.bf16 %v988, %v988
      %1003 = vrot.lane.b32.xlu0 %v732, 56
      %v1004 = vpop.permute.xlu0 %1003
      %1005 = vrot.lane.b32.xlu0 %v733, 56
      %v1006 = vpop.permute.xlu0 %1005
      %v1009 = vsel %vm801, %v1001, 0
      %v1012 = vsel %vm801, %v1002, 0
      %v1015 = vsel %vm846, %v1006, 0
      %1017 = vmatprep.subr.bf16.mxu0 0
      %1018 = vmatpush1.bf16.msra.mxu0 %v1004
      %1019 = vmatprep.subr.bf16.mxu0 0
      %1020 = vmatpush1.bf16.msra.mxu0 %v1015
      %1021 = vmatprep.subr.bf16.mxu0 0
      %1022 = vmatpush1.bf16.msra.mxu0 0
      %1023 = vmatprep.subr.bf16.mxu0 0
      %1024 = vmatpush1.bf16.msra.mxu0 0
      %1025 = vmatprep.subr.bf16.mxu0 0
      %1026 = vmatpush1.bf16.msra.mxu0 0
      %1027 = vmatprep.subr.bf16.mxu0 0
      %1028 = vmatpush1.bf16.msra.mxu0 0
      %1029 = vmatprep.subr.bf16.mxu0 0
      %1030 = vmatpush1.bf16.msra.mxu0 0
      %1031 = vmatprep.subr.bf16.mxu0 0
      %1032 = vmatpush1.bf16.msra.mxu0 0
      %1033 = vmatprep.subr.bf16.mxu0 0
      %1034 = vmatpush1.bf16.msra.mxu0 0
      %1035 = vmatprep.subr.bf16.mxu0 0
      %1036 = vmatpush1.bf16.msra.mxu0 0
      %1037 = vmatprep.subr.bf16.mxu0 0
      %1038 = vmatpush1.bf16.msra.mxu0 0
      %1039 = vmatprep.subr.bf16.mxu0 0
      %1040 = vmatpush1.bf16.msra.mxu0 0
      %1041 = vmatprep.subr.bf16.mxu0 0
      %1042 = vmatpush1.bf16.msra.mxu0 0
      %1043 = vmatprep.subr.bf16.mxu0 0
      %1044 = vmatpush1.bf16.msra.mxu0 0
      %1045 = vmatprep.subr.bf16.mxu0 0
      %1046 = vmatpush1.bf16.msra.mxu0 0
      %1047 = vmatprep.subr.bf16.mxu0 0
      %1048 = vmatpush1.bf16.msra.mxu0 0
      %1049 = vmatprep.mubr.bf16.mxu0 0
      %1050 = vmatmul.mubr.bf16.gmra.mrb[0].mxu0 %v1009
      %v1051 = vpop.f32.mrb[0].mxu0
      %v1052 = vadd.f32 0.0, %v1051
      %v1053 = vpop.f32.mrb[0].mxu0
      %v1054 = vpop.f32.mrb[0].mxu0
      %v1055 = vadd.f32 0.0, %v1054
      %v1056 = vpop.f32.mrb[0].mxu0
      %1057 = vmatprep.mubr.bf16.mxu0 0
      %1058 = vmatmul.mubr.bf16.gmra.mrb[0].mxu0 %v1012
      %v1059 = vpop.f32.mrb[0].mxu0
      %v1060 = vadd.f32 0.0, %v1059
      %v1061 = vpop.f32.mrb[0].mxu0
      %v1062 = vpop.f32.mrb[0].mxu0
      %v1063 = vpop.f32.mrb[0].mxu0
      %1064 = vdwg.mxu0
      %v1065 = vmul.f32 %v1052, %v998
      %v1066 = vmul.f32 %v1055, %v999
      %v1067 = vmul.f32 %v1060, %v1000
      %v1068 = vpack.c.bf16 %v1066, %v1065
      %v1069 = vpack.c.bf16 %v1067, %v1067
      %v1074 = vunpack.c.l.b16 %v728
      %v1075 = vunpack.c.l.b16 %v729
      %v1076 = vunpack.c.l.b16 %v730
      %v1077 = vunpack.c.l.b16 %v731
      %v1078 = vpack.c.b16 %v1075, %v1074
      %v1079 = vpack.c.b16 %v1077, %v1076
      %1080 = vrot.lane.b32.xlu0 %v1078, 120
      %v1081 = vpop.permute.xlu0 %1080
      %1082 = vrot.lane.b32.xlu0 %v1079, 120
      %v1083 = vpop.permute.xlu0 %1082
      %v1085 = vsel %vm740, %v1068, 0
      %v1088 = vsel %vm740, %v1069, 0
      %v1091 = vsel %vm740, %v1081, 0
      %v1094 = vsel %vm740, %v1083, 0
      %1096 = vmatprep.subr.bf16.mxu0 0
      %1097 = vmatpush1.bf16.xpose.msra.mxu0 %v1091
      %1098 = vmatprep.subr.bf16.mxu0 0
      %1099 = vmatpush1.bf16.xpose.msra.mxu0 %v1094
      %1100 = vmatprep.subr.bf16.mxu0 0
      %1101 = vmatpush1.bf16.xpose.msra.mxu0 0
      %1102 = vmatprep.subr.bf16.mxu0 0
      %1103 = vmatpush1.bf16.xpose.msra.mxu0 0
      %1104 = vmatprep.subr.bf16.mxu0 0
      %1105 = vmatpush1.bf16.xpose.msra.mxu0 0
      %1106 = vmatprep.subr.bf16.mxu0 0
      %1107 = vmatpush1.bf16.xpose.msra.mxu0 0
      %1108 = vmatprep.subr.bf16.mxu0 0
      %1109 = vmatpush1.bf16.xpose.msra.mxu0 0
      %1110 = vmatprep.subr.bf16.mxu0 0
      %1111 = vmatpush1.bf16.xpose.msra.mxu0 0
      %1112 = vmatprep.subr.bf16.mxu0 0
      %1113 = vmatpush1.bf16.xpose.msra.mxu0 0
      %1114 = vmatprep.subr.bf16.mxu0 0
      %1115 = vmatpush1.bf16.xpose.msra.mxu0 0
      %1116 = vmatprep.subr.bf16.mxu0 0
      %1117 = vmatpush1.bf16.xpose.msra.mxu0 0
      %1118 = vmatprep.subr.bf16.mxu0 0
      %1119 = vmatpush1.bf16.xpose.msra.mxu0 0
      %1120 = vmatprep.subr.bf16.mxu0 0
      %1121 = vmatpush1.bf16.xpose.msra.mxu0 0
      %1122 = vmatprep.subr.bf16.mxu0 0
      %1123 = vmatpush1.bf16.xpose.msra.mxu0 0
      %1124 = vmatprep.subr.bf16.mxu0 0
      %1125 = vmatpush1.bf16.xpose.msra.mxu0 0
      %1126 = vmatprep.subr.bf16.mxu0 0
      %1127 = vmatpush1.bf16.xpose.msra.mxu0 0
      %1128 = vmatprep.mubr.bf16.mxu0 0
      %1129 = vmatmul.mubr.bf16.gmra.mrb[0].mxu0 %v1085
      %v1130 = vpop.f32.mrb[0].mxu0
      %v1131 = vadd.f32 0.0, %v1130
      %v1132 = vpop.f32.mrb[0].mxu0
      %v1133 = vpop.f32.mrb[0].mxu0
      %v1134 = vadd.f32 0.0, %v1133
      %v1135 = vpop.f32.mrb[0].mxu0
      %1136 = vmatprep.mubr.bf16.mxu0 0
      %1137 = vmatmul.mubr.bf16.gmra.mrb[0].mxu0 %v1088
      %v1138 = vpop.f32.mrb[0].mxu0
      %v1139 = vadd.f32 0.0, %v1138
      %v1140 = vpop.f32.mrb[0].mxu0
      %v1141 = vpop.f32.mrb[0].mxu0
      %v1142 = vpop.f32.mrb[0].mxu0
      %1143 = vdwg.mxu0
      %v1145 = vsel %vm740, %v901, 0
      %v1148 = vsel %vm740, %v902, 0
      %v1151 = vsel %vm740, %v1078, 0
      %v1154 = vsel %vm740, %v1079, 0
      %1156 = vmatprep.subr.bf16.mxu0 0
      %1157 = vmatpush1.bf16.xpose.msra.mxu0 %v1151
      %1158 = vmatprep.subr.bf16.mxu0 0
      %1159 = vmatpush1.bf16.xpose.msra.mxu0 %v1154
      %1160 = vmatprep.subr.bf16.mxu0 0
      %1161 = vmatpush1.bf16.xpose.msra.mxu0 0
      %1162 = vmatprep.subr.bf16.mxu0 0
      %1163 = vmatpush1.bf16.xpose.msra.mxu0 0
      %1164 = vmatprep.subr.bf16.mxu0 0
      %1165 = vmatpush1.bf16.xpose.msra.mxu0 0
      %1166 = vmatprep.subr.bf16.mxu0 0
      %1167 = vmatpush1.bf16.xpose.msra.mxu0 0
      %1168 = vmatprep.subr.bf16.mxu0 0
      %1169 = vmatpush1.bf16.xpose.msra.mxu0 0
      %1170 = vmatprep.subr.bf16.mxu0 0
      %1171 = vmatpush1.bf16.xpose.msra.mxu0 0
      %1172 = vmatprep.subr.bf16.mxu0 0
      %1173 = vmatpush1.bf16.xpose.msra.mxu0 0
      %1174 = vmatprep.subr.bf16.mxu0 0
      %1175 = vmatpush1.bf16.xpose.msra.mxu0 0
      %1176 = vmatprep.subr.bf16.mxu0 0
      %1177 = vmatpush1.bf16.xpose.msra.mxu0 0
      %1178 = vmatprep.subr.bf16.mxu0 0
      %1179 = vmatpush1.bf16.xpose.msra.mxu0 0
      %1180 = vmatprep.subr.bf16.mxu0 0
      %1181 = vmatpush1.bf16.xpose.msra.mxu0 0
      %1182 = vmatprep.subr.bf16.mxu0 0
      %1183 = vmatpush1.bf16.xpose.msra.mxu0 0
      %1184 = vmatprep.subr.bf16.mxu0 0
      %1185 = vmatpush1.bf16.xpose.msra.mxu0 0
      %1186 = vmatprep.subr.bf16.mxu0 0
      %1187 = vmatpush1.bf16.xpose.msra.mxu0 0
      %1188 = vmatprep.mubr.bf16.mxu0 0
      %1189 = vmatmul.mubr.bf16.gmra.mrb[0].mxu0 %v1145
      %v1190 = vpop.f32.mrb[0].mxu0
      %v1191 = vadd.f32 %v1131, %v1190
      %v1192 = vpop.f32.mrb[0].mxu0
      %v1193 = vpop.f32.mrb[0].mxu0
      %v1194 = vadd.f32 %v1134, %v1193
      %v1195 = vpop.f32.mrb[0].mxu0
      %1196 = vmatprep.mubr.bf16.mxu0 0
      %1197 = vmatmul.mubr.bf16.gmra.mrb[0].mxu0 %v1148
      %v1198 = vpop.f32.mrb[0].mxu0
      %v1199 = vadd.f32 %v1139, %v1198
      %v1200 = vpop.f32.mrb[0].mxu0
      %v1201 = vpop.f32.mrb[0].mxu0
      %v1202 = vpop.f32.mrb[0].mxu0
      %1203 = vdwg.mxu0
      %1204 = vrot.lane.b32.xlu0 %v732, 112
      %v1205 = vpop.permute.xlu0 %1204
      %1206 = vrot.lane.b32.xlu0 %v733, 112
      %v1207 = vpop.permute.xlu0 %1206
      %1208 = vrot.lane.b32.xlu0 %v732, 80
      %v1209 = vpop.permute.xlu0 %1208
      %1210 = vrot.lane.b32.xlu0 %v733, 80
      %v1211 = vpop.permute.xlu0 %1210
      %v1213 = vsel %vm740, %v1205, 0
      %v1216 = vsel %vm740, %v1207, 0
      %v1219 = vsel %vm740, %v1209, 0
      %v1222 = vsel %vm740, %v1211, 0
      %1224 = vmatprep.subr.bf16.mxu0 0
      %1225 = vmatpush1.bf16.xpose.msra.mxu0 %v1219
      %1226 = vmatprep.subr.bf16.mxu0 0
      %1227 = vmatpush1.bf16.xpose.msra.mxu0 %v1222
      %1228 = vmatprep.subr.bf16.mxu0 0
      %1229 = vmatpush1.bf16.xpose.msra.mxu0 0
      %1230 = vmatprep.subr.bf16.mxu0 0
      %1231 = vmatpush1.bf16.xpose.msra.mxu0 0
      %1232 = vmatprep.subr.bf16.mxu0 0
      %1233 = vmatpush1.bf16.xpose.msra.mxu0 0
      %1234 = vmatprep.subr.bf16.mxu0 0
      %1235 = vmatpush1.bf16.xpose.msra.mxu0 0
      %1236 = vmatprep.subr.bf16.mxu0 0
      %1237 = vmatpush1.bf16.xpose.msra.mxu0 0
      %1238 = vmatprep.subr.bf16.mxu0 0
      %1239 = vmatpush1.bf16.xpose.msra.mxu0 0
      %1240 = vmatprep.subr.bf16.mxu0 0
      %1241 = vmatpush1.bf16.xpose.msra.mxu0 0
      %1242 = vmatprep.subr.bf16.mxu0 0
      %1243 = vmatpush1.bf16.xpose.msra.mxu0 0
      %1244 = vmatprep.subr.bf16.mxu0 0
      %1245 = vmatpush1.bf16.xpose.msra.mxu0 0
      %1246 = vmatprep.subr.bf16.mxu0 0
      %1247 = vmatpush1.bf16.xpose.msra.mxu0 0
      %1248 = vmatprep.subr.bf16.mxu0 0
      %1249 = vmatpush1.bf16.xpose.msra.mxu0 0
      %1250 = vmatprep.subr.bf16.mxu0 0
      %1251 = vmatpush1.bf16.xpose.msra.mxu0 0
      %1252 = vmatprep.subr.bf16.mxu0 0
      %1253 = vmatpush1.bf16.xpose.msra.mxu0 0
      %1254 = vmatprep.subr.bf16.mxu0 0
      %1255 = vmatpush1.bf16.xpose.msra.mxu0 0
      %1256 = vmatprep.mubr.bf16.mxu0 0
      %1257 = vmatmul.mubr.bf16.gmra.mrb[0].mxu0 %v1213
      %v1258 = vpop.f32.mrb[0].mxu0
      %v1259 = vadd.f32 0.0, %v1258
      %v1260 = vpop.f32.mrb[0].mxu0
      %v1261 = vpop.f32.mrb[0].mxu0
      %v1262 = vadd.f32 0.0, %v1261
      %v1263 = vpop.f32.mrb[0].mxu0
      %1264 = vmatprep.mubr.bf16.mxu0 0
      %1265 = vmatmul.mubr.bf16.gmra.mrb[0].mxu0 %v1216
      %v1266 = vpop.f32.mrb[0].mxu0
      %v1267 = vadd.f32 0.0, %v1266
      %v1268 = vpop.f32.mrb[0].mxu0
      %v1269 = vpop.f32.mrb[0].mxu0
      %v1270 = vpop.f32.mrb[0].mxu0
      %1271 = vdwg.mxu0
      %v1272 = vsel %vm801, %v1259, -inf
      %1273 = vmax.xlane.f32.xlu0 %v1272
      %v1274 = vpop.xlane.xlu0 %1273
      %v1275 = vsel %vm801, %v1262, -inf
      %1276 = vmax.xlane.f32.xlu0 %v1275
      %v1277 = vpop.xlane.xlu0 %1276
      %v1278 = vsel %vm808, %v1267, -inf
      %1279 = vmax.xlane.f32.xlu0 %v1278
      %v1280 = vpop.xlane.xlu0 %1279
      %v1281 = vsub.f32 %v1259, %v1274
      %v1282 = vsub.f32 %v1262, %v1277
      %v1283 = vsub.f32 %v1267, %v1280
      %v1284 = vmul.f32 %v1281, 1.442695
      %v1285 = vpow.pop %v1284
      %v1286 = vmul.f32 %v1282, 1.442695
      %v1287 = vpow.pop %v1286
      %v1288 = vmul.f32 %v1283, 1.442695
      %v1289 = vpow.pop %v1288
      %v1290 = vsel %vm801, %v1285, 0.0
      %1291 = vadd.xlane.f32.xlu0 %v1290
      %v1292 = vpop.xlane.xlu0 %1291
      %v1293 = vsel %vm801, %v1287, 0.0
      %1294 = vadd.xlane.f32.xlu0 %v1293
      %v1295 = vpop.xlane.xlu0 %1294
      %v1296 = vsel %vm808, %v1289, 0.0
      %1297 = vadd.xlane.f32.xlu0 %v1296
      %v1298 = vpop.xlane.xlu0 %1297
      %v1299 = vrcp.pop %v1292
      %v1300 = vrcp.pop %v1295
      %v1301 = vrcp.pop %v1298
      %v1302 = vpack.c.bf16 %v1287, %v1285
      %v1303 = vpack.c.bf16 %v1289, %v1289
      %1304 = vrot.lane.b32.xlu0 %v732, 48
      %v1305 = vpop.permute.xlu0 %1304
      %1306 = vrot.lane.b32.xlu0 %v733, 48
      %v1307 = vpop.permute.xlu0 %1306
      %v1310 = vsel %vm801, %v1302, 0
      %v1313 = vsel %vm801, %v1303, 0
      %v1316 = vsel %vm846, %v1307, 0
      %1318 = vmatprep.subr.bf16.mxu0 0
      %1319 = vmatpush1.bf16.msra.mxu0 %v1305
      %1320 = vmatprep.subr.bf16.mxu0 0
      %1321 = vmatpush1.bf16.msra.mxu0 %v1316
      %1322 = vmatprep.subr.bf16.mxu0 0
      %1323 = vmatpush1.bf16.msra.mxu0 0
      %1324 = vmatprep.subr.bf16.mxu0 0
      %1325 = vmatpush1.bf16.msra.mxu0 0
      %1326 = vmatprep.subr.bf16.mxu0 0
      %1327 = vmatpush1.bf16.msra.mxu0 0
      %1328 = vmatprep.subr.bf16.mxu0 0
      %1329 = vmatpush1.bf16.msra.mxu0 0
      %1330 = vmatprep.subr.bf16.mxu0 0
      %1331 = vmatpush1.bf16.msra.mxu0 0
      %1332 = vmatprep.subr.bf16.mxu0 0
      %1333 = vmatpush1.bf16.msra.mxu0 0
      %1334 = vmatprep.subr.bf16.mxu0 0
      %1335 = vmatpush1.bf16.msra.mxu0 0
      %1336 = vmatprep.subr.bf16.mxu0 0
      %1337 = vmatpush1.bf16.msra.mxu0 0
      %1338 = vmatprep.subr.bf16.mxu0 0
      %1339 = vmatpush1.bf16.msra.mxu0 0
      %1340 = vmatprep.subr.bf16.mxu0 0
      %1341 = vmatpush1.bf16.msra.mxu0 0
      %1342 = vmatprep.subr.bf16.mxu0 0
      %1343 = vmatpush1.bf16.msra.mxu0 0
      %1344 = vmatprep.subr.bf16.mxu0 0
      %1345 = vmatpush1.bf16.msra.mxu0 0
      %1346 = vmatprep.subr.bf16.mxu0 0
      %1347 = vmatpush1.bf16.msra.mxu0 0
      %1348 = vmatprep.subr.bf16.mxu0 0
      %1349 = vmatpush1.bf16.msra.mxu0 0
      %1350 = vmatprep.mubr.bf16.mxu0 0
      %1351 = vmatmul.mubr.bf16.gmra.mrb[0].mxu0 %v1310
      %v1352 = vpop.f32.mrb[0].mxu0
      %v1353 = vadd.f32 0.0, %v1352
      %v1354 = vpop.f32.mrb[0].mxu0
      %v1355 = vpop.f32.mrb[0].mxu0
      %v1356 = vadd.f32 0.0, %v1355
      %v1357 = vpop.f32.mrb[0].mxu0
      %1358 = vmatprep.mubr.bf16.mxu0 0
      %1359 = vmatmul.mubr.bf16.gmra.mrb[0].mxu0 %v1313
      %v1360 = vpop.f32.mrb[0].mxu0
      %v1361 = vadd.f32 0.0, %v1360
      %v1362 = vpop.f32.mrb[0].mxu0
      %v1363 = vpop.f32.mrb[0].mxu0
      %v1364 = vpop.f32.mrb[0].mxu0
      %1365 = vdwg.mxu0
      %v1366 = vmul.f32 %v1353, %v1299
      %v1367 = vmul.f32 %v1356, %v1300
      %v1368 = vmul.f32 %v1361, %v1301
      %v1369 = vpack.c.bf16 %v1367, %v1366
      %v1370 = vpack.c.bf16 %v1368, %v1368
      %1371 = vrot.lane.b32.xlu0 %v1078, 112
      %v1372 = vpop.permute.xlu0 %1371
      %1373 = vrot.lane.b32.xlu0 %v1079, 112
      %v1374 = vpop.permute.xlu0 %1373
      %v1376 = vsel %vm740, %v1369, 0
      %v1379 = vsel %vm740, %v1370, 0
      %v1382 = vsel %vm740, %v1372, 0
      %v1385 = vsel %vm740, %v1374, 0
      %1387 = vmatprep.subr.bf16.mxu0 0
      %1388 = vmatpush1.bf16.xpose.msra.mxu0 %v1382
      %1389 = vmatprep.subr.bf16.mxu0 0
      %1390 = vmatpush1.bf16.xpose.msra.mxu0 %v1385
      %1391 = vmatprep.subr.bf16.mxu0 0
      %1392 = vmatpush1.bf16.xpose.msra.mxu0 0
      %1393 = vmatprep.subr.bf16.mxu0 0
      %1394 = vmatpush1.bf16.xpose.msra.mxu0 0
      %1395 = vmatprep.subr.bf16.mxu0 0
      %1396 = vmatpush1.bf16.xpose.msra.mxu0 0
      %1397 = vmatprep.subr.bf16.mxu0 0
      %1398 = vmatpush1.bf16.xpose.msra.mxu0 0
      %1399 = vmatprep.subr.bf16.mxu0 0
      %1400 = vmatpush1.bf16.xpose.msra.mxu0 0
      %1401 = vmatprep.subr.bf16.mxu0 0
      %1402 = vmatpush1.bf16.xpose.msra.mxu0 0
      %1403 = vmatprep.subr.bf16.mxu0 0
      %1404 = vmatpush1.bf16.xpose.msra.mxu0 0
      %1405 = vmatprep.subr.bf16.mxu0 0
      %1406 = vmatpush1.bf16.xpose.msra.mxu0 0
      %1407 = vmatprep.subr.bf16.mxu0 0
      %1408 = vmatpush1.bf16.xpose.msra.mxu0 0
      %1409 = vmatprep.subr.bf16.mxu0 0
      %1410 = vmatpush1.bf16.xpose.msra.mxu0 0
      %1411 = vmatprep.subr.bf16.mxu0 0
      %1412 = vmatpush1.bf16.xpose.msra.mxu0 0
      %1413 = vmatprep.subr.bf16.mxu0 0
      %1414 = vmatpush1.bf16.xpose.msra.mxu0 0
      %1415 = vmatprep.subr.bf16.mxu0 0
      %1416 = vmatpush1.bf16.xpose.msra.mxu0 0
      %1417 = vmatprep.subr.bf16.mxu0 0
      %1418 = vmatpush1.bf16.xpose.msra.mxu0 0
      %1419 = vmatprep.mubr.bf16.mxu0 0
      %1420 = vmatmul.mubr.bf16.gmra.mrb[0].mxu0 %v1376
      %v1421 = vpop.f32.mrb[0].mxu0
      %v1422 = vadd.f32 0.0, %v1421
      %v1423 = vpop.f32.mrb[0].mxu0
      %v1424 = vpop.f32.mrb[0].mxu0
      %v1425 = vadd.f32 0.0, %v1424
      %v1426 = vpop.f32.mrb[0].mxu0
      %1427 = vmatprep.mubr.bf16.mxu0 0
      %1428 = vmatmul.mubr.bf16.gmra.mrb[0].mxu0 %v1379
      %v1429 = vpop.f32.mrb[0].mxu0
      %v1430 = vadd.f32 0.0, %v1429
      %v1431 = vpop.f32.mrb[0].mxu0
      %v1432 = vpop.f32.mrb[0].mxu0
      %v1433 = vpop.f32.mrb[0].mxu0
      %1434 = vdwg.mxu0
      %v1435 = vadd.f32 %v1191, %v1422
      %v1436 = vadd.f32 %v1194, %v1425
      %v1437 = vadd.f32 %v1199, %v1430
      %1438 = vrot.lane.b32.xlu0 %v732, 104
      %v1439 = vpop.permute.xlu0 %1438
      %1440 = vrot.lane.b32.xlu0 %v733, 104
      %v1441 = vpop.permute.xlu0 %1440
      %1442 = vrot.lane.b32.xlu0 %v732, 72
      %v1443 = vpop.permute.xlu0 %1442
      %1444 = vrot.lane.b32.xlu0 %v733, 72
      %v1445 = vpop.permute.xlu0 %1444
      %v1447 = vsel %vm740, %v1439, 0
      %v1450 = vsel %vm740, %v1441, 0
      %v1453 = vsel %vm740, %v1443, 0
      %v1456 = vsel %vm740, %v1445, 0
      %1458 = vmatprep.subr.bf16.mxu0 0
      %1459 = vmatpush1.bf16.xpose.msra.mxu0 %v1453
      %1460 = vmatprep.subr.bf16.mxu0 0
      %1461 = vmatpush1.bf16.xpose.msra.mxu0 %v1456
      %1462 = vmatprep.subr.bf16.mxu0 0
      %1463 = vmatpush1.bf16.xpose.msra.mxu0 0
      %1464 = vmatprep.subr.bf16.mxu0 0
      %1465 = vmatpush1.bf16.xpose.msra.mxu0 0
      %1466 = vmatprep.subr.bf16.mxu0 0
      %1467 = vmatpush1.bf16.xpose.msra.mxu0 0
      %1468 = vmatprep.subr.bf16.mxu0 0
      %1469 = vmatpush1.bf16.xpose.msra.mxu0 0
      %1470 = vmatprep.subr.bf16.mxu0 0
      %1471 = vmatpush1.bf16.xpose.msra.mxu0 0
      %1472 = vmatprep.subr.bf16.mxu0 0
      %1473 = vmatpush1.bf16.xpose.msra.mxu0 0
      %1474 = vmatprep.subr.bf16.mxu0 0
      %1475 = vmatpush1.bf16.xpose.msra.mxu0 0
      %1476 = vmatprep.subr.bf16.mxu0 0
      %1477 = vmatpush1.bf16.xpose.msra.mxu0 0
      %1478 = vmatprep.subr.bf16.mxu0 0
      %1479 = vmatpush1.bf16.xpose.msra.mxu0 0
      %1480 = vmatprep.subr.bf16.mxu0 0
      %1481 = vmatpush1.bf16.xpose.msra.mxu0 0
      %1482 = vmatprep.subr.bf16.mxu0 0
      %1483 = vmatpush1.bf16.xpose.msra.mxu0 0
      %1484 = vmatprep.subr.bf16.mxu0 0
      %1485 = vmatpush1.bf16.xpose.msra.mxu0 0
      %1486 = vmatprep.subr.bf16.mxu0 0
      %1487 = vmatpush1.bf16.xpose.msra.mxu0 0
      %1488 = vmatprep.subr.bf16.mxu0 0
      %1489 = vmatpush1.bf16.xpose.msra.mxu0 0
      %1490 = vmatprep.mubr.bf16.mxu0 0
      %1491 = vmatmul.mubr.bf16.gmra.mrb[0].mxu0 %v1447
      %v1492 = vpop.f32.mrb[0].mxu0
      %v1493 = vadd.f32 0.0, %v1492
      %v1494 = vpop.f32.mrb[0].mxu0
      %v1495 = vpop.f32.mrb[0].mxu0
      %v1496 = vadd.f32 0.0, %v1495
      %v1497 = vpop.f32.mrb[0].mxu0
      %1498 = vmatprep.mubr.bf16.mxu0 0
      %1499 = vmatmul.mubr.bf16.gmra.mrb[0].mxu0 %v1450
      %v1500 = vpop.f32.mrb[0].mxu0
      %v1501 = vadd.f32 0.0, %v1500
      %v1502 = vpop.f32.mrb[0].mxu0
      %v1503 = vpop.f32.mrb[0].mxu0
      %v1504 = vpop.f32.mrb[0].mxu0
      %1505 = vdwg.mxu0
      %v1506 = vsel %vm801, %v1493, -inf
      %1507 = vmax.xlane.f32.xlu0 %v1506
      %v1508 = vpop.xlane.xlu0 %1507
      %v1509 = vsel %vm801, %v1496, -inf
      %1510 = vmax.xlane.f32.xlu0 %v1509
      %v1511 = vpop.xlane.xlu0 %1510
      %v1512 = vsel %vm808, %v1501, -inf
      %1513 = vmax.xlane.f32.xlu0 %v1512
      %v1514 = vpop.xlane.xlu0 %1513
      %v1515 = vsub.f32 %v1493, %v1508
      %v1516 = vsub.f32 %v1496, %v1511
      %v1517 = vsub.f32 %v1501, %v1514
      %v1518 = vmul.f32 %v1515, 1.442695
      %v1519 = vpow.pop %v1518
      %v1520 = vmul.f32 %v1516, 1.442695
      %v1521 = vpow.pop %v1520
      %v1522 = vmul.f32 %v1517, 1.442695
      %v1523 = vpow.pop %v1522
      %v1524 = vsel %vm801, %v1519, 0.0
      %1525 = vadd.xlane.f32.xlu0 %v1524
      %v1526 = vpop.xlane.xlu0 %1525
      %v1527 = vsel %vm801, %v1521, 0.0
      %1528 = vadd.xlane.f32.xlu0 %v1527
      %v1529 = vpop.xlane.xlu0 %1528
      %v1530 = vsel %vm808, %v1523, 0.0
      %1531 = vadd.xlane.f32.xlu0 %v1530
      %v1532 = vpop.xlane.xlu0 %1531
      %v1533 = vrcp.pop %v1526
      %v1534 = vrcp.pop %v1529
      %v1535 = vrcp.pop %v1532
      %v1536 = vpack.c.bf16 %v1521, %v1519
      %v1537 = vpack.c.bf16 %v1523, %v1523
      %1538 = vrot.lane.b32.xlu0 %v732, 40
      %v1539 = vpop.permute.xlu0 %1538
      %1540 = vrot.lane.b32.xlu0 %v733, 40
      %v1541 = vpop.permute.xlu0 %1540
      %v1544 = vsel %vm801, %v1536, 0
      %v1547 = vsel %vm801, %v1537, 0
      %v1550 = vsel %vm846, %v1541, 0
      %1552 = vmatprep.subr.bf16.mxu0 0
      %1553 = vmatpush1.bf16.msra.mxu0 %v1539
      %1554 = vmatprep.subr.bf16.mxu0 0
      %1555 = vmatpush1.bf16.msra.mxu0 %v1550
      %1556 = vmatprep.subr.bf16.mxu0 0
      %1557 = vmatpush1.bf16.msra.mxu0 0
      %1558 = vmatprep.subr.bf16.mxu0 0
      %1559 = vmatpush1.bf16.msra.mxu0 0
      %1560 = vmatprep.subr.bf16.mxu0 0
      %1561 = vmatpush1.bf16.msra.mxu0 0
      %1562 = vmatprep.subr.bf16.mxu0 0
      %1563 = vmatpush1.bf16.msra.mxu0 0
      %1564 = vmatprep.subr.bf16.mxu0 0
      %1565 = vmatpush1.bf16.msra.mxu0 0
      %1566 = vmatprep.subr.bf16.mxu0 0
      %1567 = vmatpush1.bf16.msra.mxu0 0
      %1568 = vmatprep.subr.bf16.mxu0 0
      %1569 = vmatpush1.bf16.msra.mxu0 0
      %1570 = vmatprep.subr.bf16.mxu0 0
      %1571 = vmatpush1.bf16.msra.mxu0 0
      %1572 = vmatprep.subr.bf16.mxu0 0
      %1573 = vmatpush1.bf16.msra.mxu0 0
      %1574 = vmatprep.subr.bf16.mxu0 0
      %1575 = vmatpush1.bf16.msra.mxu0 0
      %1576 = vmatprep.subr.bf16.mxu0 0
      %1577 = vmatpush1.bf16.msra.mxu0 0
      %1578 = vmatprep.subr.bf16.mxu0 0
      %1579 = vmatpush1.bf16.msra.mxu0 0
      %1580 = vmatprep.subr.bf16.mxu0 0
      %1581 = vmatpush1.bf16.msra.mxu0 0
      %1582 = vmatprep.subr.bf16.mxu0 0
      %1583 = vmatpush1.bf16.msra.mxu0 0
      %1584 = vmatprep.mubr.bf16.mxu0 0
      %1585 = vmatmul.mubr.bf16.gmra.mrb[0].mxu0 %v1544
      %v1586 = vpop.f32.mrb[0].mxu0
      %v1587 = vadd.f32 0.0, %v1586
      %v1588 = vpop.f32.mrb[0].mxu0
      %v1589 = vpop.f32.mrb[0].mxu0
      %v1590 = vadd.f32 0.0, %v1589
      %v1591 = vpop.f32.mrb[0].mxu0
      %1592 = vmatprep.mubr.bf16.mxu0 0
      %1593 = vmatmul.mubr.bf16.gmra.mrb[0].mxu0 %v1547
      %v1594 = vpop.f32.mrb[0].mxu0
      %v1595 = vadd.f32 0.0, %v1594
      %v1596 = vpop.f32.mrb[0].mxu0
      %v1597 = vpop.f32.mrb[0].mxu0
      %v1598 = vpop.f32.mrb[0].mxu0
      %1599 = vdwg.mxu0
      %v1600 = vmul.f32 %v1587, %v1533
      %v1601 = vmul.f32 %v1590, %v1534
      %v1602 = vmul.f32 %v1595, %v1535
      %v1603 = vpack.c.bf16 %v1601, %v1600
      %v1604 = vpack.c.bf16 %v1602, %v1602
      %1605 = vrot.lane.b32.xlu0 %v1078, 104
      %v1606 = vpop.permute.xlu0 %1605
      %1607 = vrot.lane.b32.xlu0 %v1079, 104
      %v1608 = vpop.permute.xlu0 %1607
      %v1610 = vsel %vm740, %v1603, 0
      %v1613 = vsel %vm740, %v1604, 0
      %v1616 = vsel %vm740, %v1606, 0
      %v1619 = vsel %vm740, %v1608, 0
      %1621 = vmatprep.subr.bf16.mxu0 0
      %1622 = vmatpush1.bf16.xpose.msra.mxu0 %v1616
      %1623 = vmatprep.subr.bf16.mxu0 0
      %1624 = vmatpush1.bf16.xpose.msra.mxu0 %v1619
      %1625 = vmatprep.subr.bf16.mxu0 0
      %1626 = vmatpush1.bf16.xpose.msra.mxu0 0
      %1627 = vmatprep.subr.bf16.mxu0 0
      %1628 = vmatpush1.bf16.xpose.msra.mxu0 0
      %1629 = vmatprep.subr.bf16.mxu0 0
      %1630 = vmatpush1.bf16.xpose.msra.mxu0 0
      %1631 = vmatprep.subr.bf16.mxu0 0
      %1632 = vmatpush1.bf16.xpose.msra.mxu0 0
      %1633 = vmatprep.subr.bf16.mxu0 0
      %1634 = vmatpush1.bf16.xpose.msra.mxu0 0
      %1635 = vmatprep.subr.bf16.mxu0 0
      %1636 = vmatpush1.bf16.xpose.msra.mxu0 0
      %1637 = vmatprep.subr.bf16.mxu0 0
      %1638 = vmatpush1.bf16.xpose.msra.mxu0 0
      %1639 = vmatprep.subr.bf16.mxu0 0
      %1640 = vmatpush1.bf16.xpose.msra.mxu0 0
      %1641 = vmatprep.subr.bf16.mxu0 0
      %1642 = vmatpush1.bf16.xpose.msra.mxu0 0
      %1643 = vmatprep.subr.bf16.mxu0 0
      %1644 = vmatpush1.bf16.xpose.msra.mxu0 0
      %1645 = vmatprep.subr.bf16.mxu0 0
      %1646 = vmatpush1.bf16.xpose.msra.mxu0 0
      %1647 = vmatprep.subr.bf16.mxu0 0
      %1648 = vmatpush1.bf16.xpose.msra.mxu0 0
      %1649 = vmatprep.subr.bf16.mxu0 0
      %1650 = vmatpush1.bf16.xpose.msra.mxu0 0
      %1651 = vmatprep.subr.bf16.mxu0 0
      %1652 = vmatpush1.bf16.xpose.msra.mxu0 0
      %1653 = vmatprep.mubr.bf16.mxu0 0
      %1654 = vmatmul.mubr.bf16.gmra.mrb[0].mxu0 %v1610
      %v1655 = vpop.f32.mrb[0].mxu0
      %v1656 = vadd.f32 0.0, %v1655
      %v1657 = vpop.f32.mrb[0].mxu0
      %v1658 = vpop.f32.mrb[0].mxu0
      %v1659 = vadd.f32 0.0, %v1658
      %v1660 = vpop.f32.mrb[0].mxu0
      %1661 = vmatprep.mubr.bf16.mxu0 0
      %1662 = vmatmul.mubr.bf16.gmra.mrb[0].mxu0 %v1613
      %v1663 = vpop.f32.mrb[0].mxu0
      %v1664 = vadd.f32 0.0, %v1663
      %v1665 = vpop.f32.mrb[0].mxu0
      %v1666 = vpop.f32.mrb[0].mxu0
      %v1667 = vpop.f32.mrb[0].mxu0
      %1668 = vdwg.mxu0
      %v1669 = vadd.f32 %v1435, %v1656
      %v1670 = vadd.f32 %v1436, %v1659
      %v1671 = vadd.f32 %v1437, %v1664
      %v1672 = vld [vmem:[%s7] sm:$0x1]
      %v1674 = vlaneseq
      %v1675 = vshrl.u32 %v1674, 7
      %v1676 = vsub.s32 0, %v1675
      %v1677 = vrot.slane %v1672, %v1676
      %v1679 = vadd.f32 %v1669, %v1677
      %v1680 = vadd.f32 %v1670, %v1677
      %v1681 = vadd.f32 %v1671, %v1677
      %v1682 = vadd.f32 %v603, %v1679
      %v1683 = vadd.f32 %v599, %v1680
      %v1684 = vadd.f32 %v598, %v1681
      %v1685 = vld [vmem:[%s8] sm:$0x1]
      %v1686 = vld [vmem:[%s9] sm:$0x1]
      %v1687 = vsel %vm655, %v1682, 0.0
      %1688 = vadd.xlane.f32.xlu0 %v1687
      %v1689 = vpop.xlane.xlu0 %1688
      %v1690 = vsel %vm655, %v1683, 0.0
      %1691 = vadd.xlane.f32.xlu0 %v1690
      %v1692 = vpop.xlane.xlu0 %1691
      %vm1693 = vcmask 254976
      %v1694 = vsel %vm1693, %v1684, 0.0
      %1695 = vadd.xlane.f32.xlu0 %v1694
      %v1696 = vpop.xlane.xlu0 %1695
      %v1697 = vrcp.pop 32.0
      %v1698 = vmul.f32 %v1689, %v1697
      %v1699 = vmul.f32 %v1692, %v1697
      %v1700 = vmul.f32 %v1696, %v1697
      %v1701 = vsub.f32 %v1682, %v1698
      %v1702 = vsub.f32 %v1683, %v1699
      %v1703 = vsub.f32 %v1684, %v1700
      %v1704 = vmul.f32 %v1701, %v1701
      %v1705 = vmul.f32 %v1702, %v1702
      %v1706 = vmul.f32 %v1703, %v1703
      %v1707 = vsel %vm655, %v1704, 0.0
      %1708 = vadd.xlane.f32.xlu0 %v1707
      %v1709 = vpop.xlane.xlu0 %1708
      %v1710 = vsel %vm655, %v1705, 0.0
      %1711 = vadd.xlane.f32.xlu0 %v1710
      %v1712 = vpop.xlane.xlu0 %1711
      %v1713 = vsel %vm1693, %v1706, 0.0
      %1714 = vadd.xlane.f32.xlu0 %v1713
      %v1715 = vpop.xlane.xlu0 %1714
      %v1716 = vmul.f32 %v1709, %v1697
      %v1717 = vmul.f32 %v1712, %v1697
      %v1718 = vmul.f32 %v1715, %v1697
      %v1719 = vadd.f32 %v1716, 1e-05
      %v1720 = vadd.f32 %v1717, 1e-05
      %v1721 = vadd.f32 %v1718, 1e-05
      %v1722 = vrsqrt.pop %v1719
      %v1723 = vrsqrt.pop %v1720
      %v1724 = vrsqrt.pop %v1721
      %v1725 = vmul.f32 %v1701, %v1722
      %v1726 = vmul.f32 %v1702, %v1723
      %v1727 = vmul.f32 %v1703, %v1724
      %v1729 = vlaneseq
      %v1730 = vshrl.u32 %v1729, 7
      %v1731 = vsub.s32 0, %v1730
      %v1732 = vrot.slane %v1685, %v1731
      %v1734 = vmul.f32 %v1725, %v1732
      %v1735 = vmul.f32 %v1726, %v1732
      %v1736 = vmul.f32 %v1727, %v1732
      %v1738 = vlaneseq
      %v1739 = vshrl.u32 %v1738, 7
      %v1740 = vsub.s32 0, %v1739
      %v1741 = vrot.slane %v1686, %v1740
      %v1743 = vadd.f32 %v1734, %v1741
      %v1744 = vadd.f32 %v1735, %v1741
      %v1745 = vadd.f32 %v1736, %v1741
      %v1746 = vld [vmem:[%s10] sm:$0xf]
      %v1747 = vld [vmem:[%s10 + $0x4] sm:$0xf]
      %v1748 = vld [vmem:[%s10 + $0x8] sm:$0xf]
      %v1749 = vld [vmem:[%s10 + $0xc] sm:$0xf]
      %v1750 = vld [vmem:[%s10 + $0x10] sm:$0xf]
      %v1751 = vld [vmem:[%s10 + $0x14] sm:$0xf]
      %v1752 = vld [vmem:[%s10 + $0x18] sm:$0xf]
      %v1753 = vld [vmem:[%s10 + $0x1c] sm:$0xf]
      %v1754 = vpack.c.bf16 %v1744, %v1743
      %v1755 = vpack.c.bf16 %v1745, %v1745
      %v1756 = vld [vmem:[%s11] sm:$0x1]
      %v1758 = vlaneseq
      %v1759 = vshrl.u32 %v1758, 7
      %v1760 = vsub.s32 0, %v1759
      %v1761 = vrot.slane %v1756, %v1760
      %v1771 = vunpack.c.l.b16 %v1746
      %v1772 = vunpack.c.l.b16 %v1747
      %v1773 = vunpack.c.l.b16 %v1748
      %v1774 = vunpack.c.l.b16 %v1749
      %v1775 = vunpack.c.l.b16 %v1750
      %v1776 = vunpack.c.l.b16 %v1751
      %v1777 = vunpack.c.l.b16 %v1752
      %v1778 = vunpack.c.l.b16 %v1753
      %v1779 = vpack.c.b16 %v1772, %v1771
      %v1780 = vpack.c.b16 %v1774, %v1773
      %v1781 = vpack.c.b16 %v1776, %v1775
      %v1782 = vpack.c.b16 %v1778, %v1777
      %v1784 = vsel %vm655, %v1754, 0
      %v1787 = vsel %vm655, %v1755, 0
      %v1790 = vsel %vm655, %v1779, 0
      %v1793 = vsel %vm655, %v1780, 0
      %v1796 = vsel %vm655, %v1781, 0
      %v1799 = vsel %vm655, %v1782, 0
      %1801 = vmatprep.subr.bf16.mxu0 0
      %1802 = vmatpush1.bf16.xpose.msra.mxu0 %v1790
      %1803 = vmatprep.subr.bf16.mxu0 0
      %1804 = vmatpush1.bf16.xpose.msra.mxu0 %v1793
      %1805 = vmatprep.subr.bf16.mxu0 0
      %1806 = vmatpush1.bf16.xpose.msra.mxu0 %v1796
      %1807 = vmatprep.subr.bf16.mxu0 0
      %1808 = vmatpush1.bf16.xpose.msra.mxu0 %v1799
      %1809 = vmatprep.subr.bf16.mxu0 0
      %1810 = vmatpush1.bf16.xpose.msra.mxu0 0
      %1811 = vmatprep.subr.bf16.mxu0 0
      %1812 = vmatpush1.bf16.xpose.msra.mxu0 0
      %1813 = vmatprep.subr.bf16.mxu0 0
      %1814 = vmatpush1.bf16.xpose.msra.mxu0 0
      %1815 = vmatprep.subr.bf16.mxu0 0
      %1816 = vmatpush1.bf16.xpose.msra.mxu0 0
      %1817 = vmatprep.subr.bf16.mxu0 0
      %1818 = vmatpush1.bf16.xpose.msra.mxu0 0
      %1819 = vmatprep.subr.bf16.mxu0 0
      %1820 = vmatpush1.bf16.xpose.msra.mxu0 0
      %1821 = vmatprep.subr.bf16.mxu0 0
      %1822 = vmatpush1.bf16.xpose.msra.mxu0 0
      %1823 = vmatprep.subr.bf16.mxu0 0
      %1824 = vmatpush1.bf16.xpose.msra.mxu0 0
      %1825 = vmatprep.subr.bf16.mxu0 0
      %1826 = vmatpush1.bf16.xpose.msra.mxu0 0
      %1827 = vmatprep.subr.bf16.mxu0 0
      %1828 = vmatpush1.bf16.xpose.msra.mxu0 0
      %1829 = vmatprep.subr.bf16.mxu0 0
      %1830 = vmatpush1.bf16.xpose.msra.mxu0 0
      %1831 = vmatprep.subr.bf16.mxu0 0
      %1832 = vmatpush1.bf16.xpose.msra.mxu0 0
      %1833 = vmatprep.mubr.bf16.mxu0 0
      %1834 = vmatmul.mubr.bf16.gmra.mrb[0].mxu0 %v1784
      %v1835 = vpop.f32.mrb[0].mxu0
      %v1836 = vadd.f32 %v1761, %v1835
      %v1837 = vpop.f32.mrb[0].mxu0
      %v1838 = vpop.f32.mrb[0].mxu0
      %v1839 = vadd.f32 %v1761, %v1838
      %v1840 = vpop.f32.mrb[0].mxu0
      %1841 = vmatprep.mubr.bf16.mxu0 0
      %1842 = vmatmul.mubr.bf16.gmra.mrb[0].mxu0 %v1787
      %v1843 = vpop.f32.mrb[0].mxu0
      %v1844 = vadd.f32 %v1761, %v1843
      %v1845 = vpop.f32.mrb[0].mxu0
      %v1846 = vpop.f32.mrb[0].mxu0
      %v1847 = vpop.f32.mrb[0].mxu0
      %1848 = vdwg.mxu0
      %v1849 = vmax.f32 %v1836, 0.0
      %v1850 = vmax.f32 %v1839, 0.0
      %v1851 = vmax.f32 %v1844, 0.0
      %v1852 = vld [vmem:[%s12] sm:$0xf]
      %v1853 = vld [vmem:[%s12 + $0x4] sm:$0xf]
      %v1854 = vld [vmem:[%s12 + $0x8] sm:$0xf]
      %v1855 = vld [vmem:[%s12 + $0xc] sm:$0xf]
      %v1856 = vpack.c.bf16 %v1850, %v1849
      %v1857 = vpack.c.bf16 %v1851, %v1851
      %v1858 = vld [vmem:[%s13] sm:$0x1]
      %v1860 = vlaneseq
      %v1861 = vshrl.u32 %v1860, 7
      %v1862 = vsub.s32 0, %v1861
      %v1863 = vrot.slane %v1858, %v1862
      %v1869 = vunpack.c.l.b16 %v1852
      %v1870 = vunpack.c.l.b16 %v1853
      %v1871 = vunpack.c.l.b16 %v1854
      %v1872 = vunpack.c.l.b16 %v1855
      %v1873 = vpack.c.b16 %v1870, %v1869
      %v1874 = vpack.c.b16 %v1872, %v1871
      %vm1875 = vcmask 523264
      %v1877 = vsel %vm1875, %v1856, 0
      %v1880 = vsel %vm1875, %v1857, 0
      %v1883 = vsel %vm1875, %v1873, 0
      %v1886 = vsel %vm1875, %v1874, 0
      %1888 = vmatprep.subr.bf16.mxu0 0
      %1889 = vmatpush1.bf16.xpose.msra.mxu0 %v1883
      %1890 = vmatprep.subr.bf16.mxu0 0
      %1891 = vmatpush1.bf16.xpose.msra.mxu0 %v1886
      %1892 = vmatprep.subr.bf16.mxu0 0
      %1893 = vmatpush1.bf16.xpose.msra.mxu0 0
      %1894 = vmatprep.subr.bf16.mxu0 0
      %1895 = vmatpush1.bf16.xpose.msra.mxu0 0
      %1896 = vmatprep.subr.bf16.mxu0 0
      %1897 = vmatpush1.bf16.xpose.msra.mxu0 0
      %1898 = vmatprep.subr.bf16.mxu0 0
      %1899 = vmatpush1.bf16.xpose.msra.mxu0 0
      %1900 = vmatprep.subr.bf16.mxu0 0
      %1901 = vmatpush1.bf16.xpose.msra.mxu0 0
      %1902 = vmatprep.subr.bf16.mxu0 0
      %1903 = vmatpush1.bf16.xpose.msra.mxu0 0
      %1904 = vmatprep.subr.bf16.mxu0 0
      %1905 = vmatpush1.bf16.xpose.msra.mxu0 0
      %1906 = vmatprep.subr.bf16.mxu0 0
      %1907 = vmatpush1.bf16.xpose.msra.mxu0 0
      %1908 = vmatprep.subr.bf16.mxu0 0
      %1909 = vmatpush1.bf16.xpose.msra.mxu0 0
      %1910 = vmatprep.subr.bf16.mxu0 0
      %1911 = vmatpush1.bf16.xpose.msra.mxu0 0
      %1912 = vmatprep.subr.bf16.mxu0 0
      %1913 = vmatpush1.bf16.xpose.msra.mxu0 0
      %1914 = vmatprep.subr.bf16.mxu0 0
      %1915 = vmatpush1.bf16.xpose.msra.mxu0 0
      %1916 = vmatprep.subr.bf16.mxu0 0
      %1917 = vmatpush1.bf16.xpose.msra.mxu0 0
      %1918 = vmatprep.subr.bf16.mxu0 0
      %1919 = vmatpush1.bf16.xpose.msra.mxu0 0
      %1920 = vmatprep.mubr.bf16.mxu0 0
      %1921 = vmatmul.mubr.bf16.gmra.mrb[0].mxu0 %v1877
      %v1922 = vpop.f32.mrb[0].mxu0
      %v1923 = vadd.f32 %v1863, %v1922
      %v1924 = vpop.f32.mrb[0].mxu0
      %v1925 = vpop.f32.mrb[0].mxu0
      %v1926 = vadd.f32 %v1863, %v1925
      %v1927 = vpop.f32.mrb[0].mxu0
      %1928 = vmatprep.mubr.bf16.mxu0 0
      %1929 = vmatmul.mubr.bf16.gmra.mrb[0].mxu0 %v1880
      %v1930 = vpop.f32.mrb[0].mxu0
      %v1931 = vadd.f32 %v1863, %v1930
      %v1932 = vpop.f32.mrb[0].mxu0
      %v1933 = vpop.f32.mrb[0].mxu0
      %v1934 = vpop.f32.mrb[0].mxu0
      %1935 = vdwg.mxu0
      %v1936 = vadd.f32 %v1743, %v1923
      %v1937 = vadd.f32 %v1744, %v1926
      %v1938 = vadd.f32 %v1745, %v1931
      %v1939 = vld [vmem:[%s14] sm:$0x1]
      %v1940 = vld [vmem:[%s15] sm:$0x1]
      %v1941 = vsel %vm655, %v1936, 0.0
      %1942 = vadd.xlane.f32.xlu0 %v1941
      %v1943 = vpop.xlane.xlu0 %1942
      %v1944 = vsel %vm655, %v1937, 0.0
      %1945 = vadd.xlane.f32.xlu0 %v1944
      %v1946 = vpop.xlane.xlu0 %1945
      %v1947 = vsel %vm1693, %v1938, 0.0
      %1948 = vadd.xlane.f32.xlu0 %v1947
      %v1949 = vpop.xlane.xlu0 %1948
      %v1950 = vmul.f32 %v1943, %v1697
      %v1951 = vmul.f32 %v1946, %v1697
      %v1952 = vmul.f32 %v1949, %v1697
      %v1953 = vsub.f32 %v1936, %v1950
      %v1954 = vsub.f32 %v1937, %v1951
      %v1955 = vsub.f32 %v1938, %v1952
      %v1956 = vmul.f32 %v1953, %v1953
      %v1957 = vmul.f32 %v1954, %v1954
      %v1958 = vmul.f32 %v1955, %v1955
      %v1959 = vsel %vm655, %v1956, 0.0
      %1960 = vadd.xlane.f32.xlu0 %v1959
      %v1961 = vpop.xlane.xlu0 %1960
      %v1962 = vsel %vm655, %v1957, 0.0
      %1963 = vadd.xlane.f32.xlu0 %v1962
      %v1964 = vpop.xlane.xlu0 %1963
      %v1965 = vsel %vm1693, %v1958, 0.0
      %1966 = vadd.xlane.f32.xlu0 %v1965
      %v1967 = vpop.xlane.xlu0 %1966
      %v1968 = vmul.f32 %v1961, %v1697
      %v1969 = vmul.f32 %v1964, %v1697
      %v1970 = vmul.f32 %v1967, %v1697
      %v1971 = vadd.f32 %v1968, 1e-05
      %v1972 = vadd.f32 %v1969, 1e-05
      %v1973 = vadd.f32 %v1970, 1e-05
      %v1974 = vrsqrt.pop %v1971
      %v1975 = vrsqrt.pop %v1972
      %v1976 = vrsqrt.pop %v1973
      %v1977 = vmul.f32 %v1953, %v1974
      %v1978 = vmul.f32 %v1954, %v1975
      %v1979 = vmul.f32 %v1955, %v1976
      %v1981 = vlaneseq
      %v1982 = vshrl.u32 %v1981, 7
      %v1983 = vsub.s32 0, %v1982
      %v1984 = vrot.slane %v1939, %v1983
      %v1986 = vmul.f32 %v1977, %v1984
      %v1987 = vmul.f32 %v1978, %v1984
      %v1988 = vmul.f32 %v1979, %v1984
      %v1990 = vlaneseq
      %v1991 = vshrl.u32 %v1990, 7
      %v1992 = vsub.s32 0, %v1991
      %v1993 = vrot.slane %v1940, %v1992
      %v1995 = vadd.f32 %v1986, %v1993
      %v1996 = vadd.f32 %v1987, %v1993
      %v1997 = vadd.f32 %v1988, %v1993
      %s1998 = scalar_lea.vmem %s4, 48
      %v1999 = vld [vmem:[%s1998] sm:$0xf]
      %v2000 = vld [vmem:[%s1998 + $0x4] sm:$0xf]
      %v2001 = vld [vmem:[%s1998 + $0x8] sm:$0xf]
      %v2002 = vld [vmem:[%s1998 + $0xc] sm:$0xf]
      %v2003 = vld [vmem:[%s1998 + $0x10] sm:$0xf]
      %v2004 = vld [vmem:[%s1998 + $0x14] sm:$0xf]
      %v2005 = vld [vmem:[%s1998 + $0x18] sm:$0xf]
      %v2006 = vld [vmem:[%s1998 + $0x1c] sm:$0xf]
      %v2007 = vld [vmem:[%s1998 + $0x20] sm:$0xf]
      %v2008 = vld [vmem:[%s1998 + $0x24] sm:$0xf]
      %v2009 = vld [vmem:[%s1998 + $0x28] sm:$0xf]
      %v2010 = vld [vmem:[%s1998 + $0x2c] sm:$0xf]
      %v2011 = vpack.c.bf16 %v1996, %v1995
      %v2012 = vpack.c.bf16 %v1997, %v1997
      %s2013 = scalar_lea.vmem %s5, 1
      %v2014 = vld [vmem:[%s2013] sm:$0x1]
      %v2016 = vlaneseq
      %v2017 = vshrl.u32 %v2016, 7
      %v2018 = vsub.s32 0, %v2017
      %v2019 = vrot.slane %v2014, %v2018
      %v2033 = vunpack.c.l.b16 %v1999
      %v2034 = vunpack.c.l.b16 %v2000
      %v2035 = vunpack.c.l.b16 %v2001
      %v2036 = vunpack.c.l.b16 %v2002
      %v2037 = vunpack.c.l.b16 %v2003
      %v2038 = vunpack.c.l.b16 %v2004
      %v2039 = vunpack.c.l.b16 %v2005
      %v2040 = vunpack.c.l.b16 %v2006
      %v2041 = vunpack.c.l.b16 %v2007
      %v2042 = vunpack.c.l.b16 %v2008
      %v2043 = vunpack.c.l.b16 %v2009
      %v2044 = vunpack.c.l.b16 %v2010
      %v2045 = vpack.c.b16 %v2034, %v2033
      %v2046 = vpack.c.b16 %v2036, %v2035
      %v2047 = vpack.c.b16 %v2038, %v2037
      %v2048 = vpack.c.b16 %v2040, %v2039
      %v2049 = vpack.c.b16 %v2042, %v2041
      %v2050 = vpack.c.b16 %v2044, %v2043
      %v2052 = vsel %vm655, %v2011, 0
      %v2055 = vsel %vm655, %v2012, 0
      %v2058 = vsel %vm655, %v2045, 0
      %v2061 = vsel %vm655, %v2046, 0
      %v2064 = vsel %vm655, %v2047, 0
      %v2067 = vsel %vm655, %v2048, 0
      %v2070 = vsel %vm655, %v2049, 0
      %v2073 = vsel %vm655, %v2050, 0
      %2075 = vmatprep.subr.bf16.mxu0 0
      %2076 = vmatpush1.bf16.xpose.msra.mxu0 %v2058
      %2077 = vmatprep.subr.bf16.mxu0 0
      %2078 = vmatpush1.bf16.xpose.msra.mxu0 %v2061
      %2079 = vmatprep.subr.bf16.mxu0 0
      %2080 = vmatpush1.bf16.xpose.msra.mxu0 %v2064
      %2081 = vmatprep.subr.bf16.mxu0 0
      %2082 = vmatpush1.bf16.xpose.msra.mxu0 %v2067
      %2083 = vmatprep.subr.bf16.mxu0 0
      %2084 = vmatpush1.bf16.xpose.msra.mxu0 %v2070
      %2085 = vmatprep.subr.bf16.mxu0 0
      %2086 = vmatpush1.bf16.xpose.msra.mxu0 %v2073
      %2087 = vmatprep.subr.bf16.mxu0 0
      %2088 = vmatpush1.bf16.xpose.msra.mxu0 0
      %2089 = vmatprep.subr.bf16.mxu0 0
      %2090 = vmatpush1.bf16.xpose.msra.mxu0 0
      %2091 = vmatprep.subr.bf16.mxu0 0
      %2092 = vmatpush1.bf16.xpose.msra.mxu0 0
      %2093 = vmatprep.subr.bf16.mxu0 0
      %2094 = vmatpush1.bf16.xpose.msra.mxu0 0
      %2095 = vmatprep.subr.bf16.mxu0 0
      %2096 = vmatpush1.bf16.xpose.msra.mxu0 0
      %2097 = vmatprep.subr.bf16.mxu0 0
      %2098 = vmatpush1.bf16.xpose.msra.mxu0 0
      %2099 = vmatprep.subr.bf16.mxu0 0
      %2100 = vmatpush1.bf16.xpose.msra.mxu0 0
      %2101 = vmatprep.subr.bf16.mxu0 0
      %2102 = vmatpush1.bf16.xpose.msra.mxu0 0
      %2103 = vmatprep.subr.bf16.mxu0 0
      %2104 = vmatpush1.bf16.xpose.msra.mxu0 0
      %2105 = vmatprep.subr.bf16.mxu0 0
      %2106 = vmatpush1.bf16.xpose.msra.mxu0 0
      %2107 = vmatprep.mubr.bf16.mxu0 0
      %2108 = vmatmul.mubr.bf16.gmra.mrb[0].mxu0 %v2052
      %v2109 = vpop.f32.mrb[0].mxu0
      %v2110 = vadd.f32 %v2019, %v2109
      %v2111 = vpop.f32.mrb[0].mxu0
      %v2112 = vpop.f32.mrb[0].mxu0
      %v2113 = vadd.f32 %v2019, %v2112
      %v2114 = vpop.f32.mrb[0].mxu0
      %2115 = vmatprep.mubr.bf16.mxu0 0
      %2116 = vmatmul.mubr.bf16.gmra.mrb[0].mxu0 %v2055
      %v2117 = vpop.f32.mrb[0].mxu0
      %v2118 = vadd.f32 %v2019, %v2117
      %v2119 = vpop.f32.mrb[0].mxu0
      %v2120 = vpop.f32.mrb[0].mxu0
      %v2121 = vpop.f32.mrb[0].mxu0
      %2122 = vdwg.mxu0
      %s2123 = scalar_lea.vmem %s6, 16
      %v2124 = vld [vmem:[%s2123] sm:$0xf]
      %v2125 = vld [vmem:[%s2123 + $0x4] sm:$0xf]
      %v2126 = vld [vmem:[%s2123 + $0x8] sm:$0xf]
      %v2127 = vld [vmem:[%s2123 + $0xc] sm:$0xf]
      %v2128 = vpack.c.bf16 %v2113, %v2110
      %v2129 = vpack.c.bf16 %v2118, %v2118
      %2132 = vrot.lane.b32.xlu0 %v2128, 96
      %v2133 = vpop.permute.xlu0 %2132
      %2134 = vrot.lane.b32.xlu0 %v2129, 96
      %v2135 = vpop.permute.xlu0 %2134
      %v2137 = vsel %vm740, %v2128, 0
      %v2140 = vsel %vm740, %v2129, 0
      %v2143 = vsel %vm740, %v2133, 0
      %v2146 = vsel %vm740, %v2135, 0
      %2148 = vmatprep.subr.bf16.mxu0 0
      %2149 = vmatpush1.bf16.xpose.msra.mxu0 %v2143
      %2150 = vmatprep.subr.bf16.mxu0 0
      %2151 = vmatpush1.bf16.xpose.msra.mxu0 %v2146
      %2152 = vmatprep.subr.bf16.mxu0 0
      %2153 = vmatpush1.bf16.xpose.msra.mxu0 0
      %2154 = vmatprep.subr.bf16.mxu0 0
      %2155 = vmatpush1.bf16.xpose.msra.mxu0 0
      %2156 = vmatprep.subr.bf16.mxu0 0
      %2157 = vmatpush1.bf16.xpose.msra.mxu0 0
      %2158 = vmatprep.subr.bf16.mxu0 0
      %2159 = vmatpush1.bf16.xpose.msra.mxu0 0
      %2160 = vmatprep.subr.bf16.mxu0 0
      %2161 = vmatpush1.bf16.xpose.msra.mxu0 0
      %2162 = vmatprep.subr.bf16.mxu0 0
      %2163 = vmatpush1.bf16.xpose.msra.mxu0 0
      %2164 = vmatprep.subr.bf16.mxu0 0
      %2165 = vmatpush1.bf16.xpose.msra.mxu0 0
      %2166 = vmatprep.subr.bf16.mxu0 0
      %2167 = vmatpush1.bf16.xpose.msra.mxu0 0
      %2168 = vmatprep.subr.bf16.mxu0 0
      %2169 = vmatpush1.bf16.xpose.msra.mxu0 0
      %2170 = vmatprep.subr.bf16.mxu0 0
      %2171 = vmatpush1.bf16.xpose.msra.mxu0 0
      %2172 = vmatprep.subr.bf16.mxu0 0
      %2173 = vmatpush1.bf16.xpose.msra.mxu0 0
      %2174 = vmatprep.subr.bf16.mxu0 0
      %2175 = vmatpush1.bf16.xpose.msra.mxu0 0
      %2176 = vmatprep.subr.bf16.mxu0 0
      %2177 = vmatpush1.bf16.xpose.msra.mxu0 0
      %2178 = vmatprep.subr.bf16.mxu0 0
      %2179 = vmatpush1.bf16.xpose.msra.mxu0 0
      %2180 = vmatprep.mubr.bf16.mxu0 0
      %2181 = vmatmul.mubr.bf16.gmra.mrb[0].mxu0 %v2137
      %v2182 = vpop.f32.mrb[0].mxu0
      %v2183 = vadd.f32 0.0, %v2182
      %v2184 = vpop.f32.mrb[0].mxu0
      %v2185 = vpop.f32.mrb[0].mxu0
      %v2186 = vadd.f32 0.0, %v2185
      %v2187 = vpop.f32.mrb[0].mxu0
      %2188 = vmatprep.mubr.bf16.mxu0 0
      %2189 = vmatmul.mubr.bf16.gmra.mrb[0].mxu0 %v2140
      %v2190 = vpop.f32.mrb[0].mxu0
      %v2191 = vadd.f32 0.0, %v2190
      %v2192 = vpop.f32.mrb[0].mxu0
      %v2193 = vpop.f32.mrb[0].mxu0
      %v2194 = vpop.f32.mrb[0].mxu0
      %2195 = vdwg.mxu0
      %v2196 = vsel %vm801, %v2183, -inf
      %2197 = vmax.xlane.f32.xlu0 %v2196
      %v2198 = vpop.xlane.xlu0 %2197
      %v2199 = vsel %vm801, %v2186, -inf
      %2200 = vmax.xlane.f32.xlu0 %v2199
      %v2201 = vpop.xlane.xlu0 %2200
      %v2202 = vsel %vm808, %v2191, -inf
      %2203 = vmax.xlane.f32.xlu0 %v2202
      %v2204 = vpop.xlane.xlu0 %2203
      %v2205 = vsub.f32 %v2183, %v2198
      %v2206 = vsub.f32 %v2186, %v2201
      %v2207 = vsub.f32 %v2191, %v2204
      %v2208 = vmul.f32 %v2205, 1.442695
      %v2209 = vpow.pop %v2208
      %v2210 = vmul.f32 %v2206, 1.442695
      %v2211 = vpow.pop %v2210
      %v2212 = vmul.f32 %v2207, 1.442695
      %v2213 = vpow.pop %v2212
      %v2214 = vsel %vm801, %v2209, 0.0
      %2215 = vadd.xlane.f32.xlu0 %v2214
      %v2216 = vpop.xlane.xlu0 %2215
      %v2217 = vsel %vm801, %v2211, 0.0
      %2218 = vadd.xlane.f32.xlu0 %v2217
      %v2219 = vpop.xlane.xlu0 %2218
      %v2220 = vsel %vm808, %v2213, 0.0
      %2221 = vadd.xlane.f32.xlu0 %v2220
      %v2222 = vpop.xlane.xlu0 %2221
      %v2223 = vrcp.pop %v2216
      %v2224 = vrcp.pop %v2219
      %v2225 = vrcp.pop %v2222
      %v2226 = vpack.c.bf16 %v2211, %v2209
      %v2227 = vpack.c.bf16 %v2213, %v2213
      %2228 = vrot.lane.b32.xlu0 %v2128, 64
      %v2229 = vpop.permute.xlu0 %2228
      %2230 = vrot.lane.b32.xlu0 %v2129, 64
      %v2231 = vpop.permute.xlu0 %2230
      %v2234 = vsel %vm801, %v2226, 0
      %v2237 = vsel %vm801, %v2227, 0
      %v2240 = vsel %vm846, %v2231, 0
      %2242 = vmatprep.subr.bf16.mxu0 0
      %2243 = vmatpush1.bf16.msra.mxu0 %v2229
      %2244 = vmatprep.subr.bf16.mxu0 0
      %2245 = vmatpush1.bf16.msra.mxu0 %v2240
      %2246 = vmatprep.subr.bf16.mxu0 0
      %2247 = vmatpush1.bf16.msra.mxu0 0
      %2248 = vmatprep.subr.bf16.mxu0 0
      %2249 = vmatpush1.bf16.msra.mxu0 0
      %2250 = vmatprep.subr.bf16.mxu0 0
      %2251 = vmatpush1.bf16.msra.mxu0 0
      %2252 = vmatprep.subr.bf16.mxu0 0
      %2253 = vmatpush1.bf16.msra.mxu0 0
      %2254 = vmatprep.subr.bf16.mxu0 0
      %2255 = vmatpush1.bf16.msra.mxu0 0
      %2256 = vmatprep.subr.bf16.mxu0 0
      %2257 = vmatpush1.bf16.msra.mxu0 0
      %2258 = vmatprep.subr.bf16.mxu0 0
      %2259 = vmatpush1.bf16.msra.mxu0 0
      %2260 = vmatprep.subr.bf16.mxu0 0
      %2261 = vmatpush1.bf16.msra.mxu0 0
      %2262 = vmatprep.subr.bf16.mxu0 0
      %2263 = vmatpush1.bf16.msra.mxu0 0
      %2264 = vmatprep.subr.bf16.mxu0 0
      %2265 = vmatpush1.bf16.msra.mxu0 0
      %2266 = vmatprep.subr.bf16.mxu0 0
      %2267 = vmatpush1.bf16.msra.mxu0 0
      %2268 = vmatprep.subr.bf16.mxu0 0
      %2269 = vmatpush1.bf16.msra.mxu0 0
      %2270 = vmatprep.subr.bf16.mxu0 0
      %2271 = vmatpush1.bf16.msra.mxu0 0
      %2272 = vmatprep.subr.bf16.mxu0 0
      %2273 = vmatpush1.bf16.msra.mxu0 0
      %2274 = vmatprep.mubr.bf16.mxu0 0
      %2275 = vmatmul.mubr.bf16.gmra.mrb[0].mxu0 %v2234
      %v2276 = vpop.f32.mrb[0].mxu0
      %v2277 = vadd.f32 0.0, %v2276
      %v2278 = vpop.f32.mrb[0].mxu0
      %v2279 = vpop.f32.mrb[0].mxu0
      %v2280 = vadd.f32 0.0, %v2279
      %v2281 = vpop.f32.mrb[0].mxu0
      %2282 = vmatprep.mubr.bf16.mxu0 0
      %2283 = vmatmul.mubr.bf16.gmra.mrb[0].mxu0 %v2237
      %v2284 = vpop.f32.mrb[0].mxu0
      %v2285 = vadd.f32 0.0, %v2284
      %v2286 = vpop.f32.mrb[0].mxu0
      %v2287 = vpop.f32.mrb[0].mxu0
      %v2288 = vpop.f32.mrb[0].mxu0
      %2289 = vdwg.mxu0
      %v2290 = vmul.f32 %v2277, %v2223
      %v2291 = vmul.f32 %v2280, %v2224
      %v2292 = vmul.f32 %v2285, %v2225
      %v2293 = vpack.c.bf16 %v2291, %v2290
      %v2294 = vpack.c.bf16 %v2292, %v2292
      %2295 = vrot.lane.b32.xlu0 %v2128, 120
      %v2296 = vpop.permute.xlu0 %2295
      %2297 = vrot.lane.b32.xlu0 %v2129, 120
      %v2298 = vpop.permute.xlu0 %2297
      %2299 = vrot.lane.b32.xlu0 %v2128, 88
      %v2300 = vpop.permute.xlu0 %2299
      %2301 = vrot.lane.b32.xlu0 %v2129, 88
      %v2302 = vpop.permute.xlu0 %2301
      %v2304 = vsel %vm740, %v2296, 0
      %v2307 = vsel %vm740, %v2298, 0
      %v2310 = vsel %vm740, %v2300, 0
      %v2313 = vsel %vm740, %v2302, 0
      %2315 = vmatprep.subr.bf16.mxu0 0
      %2316 = vmatpush1.bf16.xpose.msra.mxu0 %v2310
      %2317 = vmatprep.subr.bf16.mxu0 0
      %2318 = vmatpush1.bf16.xpose.msra.mxu0 %v2313
      %2319 = vmatprep.subr.bf16.mxu0 0
      %2320 = vmatpush1.bf16.xpose.msra.mxu0 0
      %2321 = vmatprep.subr.bf16.mxu0 0
      %2322 = vmatpush1.bf16.xpose.msra.mxu0 0
      %2323 = vmatprep.subr.bf16.mxu0 0
      %2324 = vmatpush1.bf16.xpose.msra.mxu0 0
      %2325 = vmatprep.subr.bf16.mxu0 0
      %2326 = vmatpush1.bf16.xpose.msra.mxu0 0
      %2327 = vmatprep.subr.bf16.mxu0 0
      %2328 = vmatpush1.bf16.xpose.msra.mxu0 0
      %2329 = vmatprep.subr.bf16.mxu0 0
      %2330 = vmatpush1.bf16.xpose.msra.mxu0 0
      %2331 = vmatprep.subr.bf16.mxu0 0
      %2332 = vmatpush1.bf16.xpose.msra.mxu0 0
      %2333 = vmatprep.subr.bf16.mxu0 0
      %2334 = vmatpush1.bf16.xpose.msra.mxu0 0
      %2335 = vmatprep.subr.bf16.mxu0 0
      %2336 = vmatpush1.bf16.xpose.msra.mxu0 0
      %2337 = vmatprep.subr.bf16.mxu0 0
      %2338 = vmatpush1.bf16.xpose.msra.mxu0 0
      %2339 = vmatprep.subr.bf16.mxu0 0
      %2340 = vmatpush1.bf16.xpose.msra.mxu0 0
      %2341 = vmatprep.subr.bf16.mxu0 0
      %2342 = vmatpush1.bf16.xpose.msra.mxu0 0
      %2343 = vmatprep.subr.bf16.mxu0 0
      %2344 = vmatpush1.bf16.xpose.msra.mxu0 0
      %2345 = vmatprep.subr.bf16.mxu0 0
      %2346 = vmatpush1.bf16.xpose.msra.mxu0 0
      %2347 = vmatprep.mubr.bf16.mxu0 0
      %2348 = vmatmul.mubr.bf16.gmra.mrb[0].mxu0 %v2304
      %v2349 = vpop.f32.mrb[0].mxu0
      %v2350 = vadd.f32 0.0, %v2349
      %v2351 = vpop.f32.mrb[0].mxu0
      %v2352 = vpop.f32.mrb[0].mxu0
      %v2353 = vadd.f32 0.0, %v2352
      %v2354 = vpop.f32.mrb[0].mxu0
      %2355 = vmatprep.mubr.bf16.mxu0 0
      %2356 = vmatmul.mubr.bf16.gmra.mrb[0].mxu0 %v2307
      %v2357 = vpop.f32.mrb[0].mxu0
      %v2358 = vadd.f32 0.0, %v2357
      %v2359 = vpop.f32.mrb[0].mxu0
      %v2360 = vpop.f32.mrb[0].mxu0
      %v2361 = vpop.f32.mrb[0].mxu0
      %2362 = vdwg.mxu0
      %v2363 = vsel %vm801, %v2350, -inf
      %2364 = vmax.xlane.f32.xlu0 %v2363
      %v2365 = vpop.xlane.xlu0 %2364
      %v2366 = vsel %vm801, %v2353, -inf
      %2367 = vmax.xlane.f32.xlu0 %v2366
      %v2368 = vpop.xlane.xlu0 %2367
      %v2369 = vsel %vm808, %v2358, -inf
      %2370 = vmax.xlane.f32.xlu0 %v2369
      %v2371 = vpop.xlane.xlu0 %2370
      %v2372 = vsub.f32 %v2350, %v2365
      %v2373 = vsub.f32 %v2353, %v2368
      %v2374 = vsub.f32 %v2358, %v2371
      %v2375 = vmul.f32 %v2372, 1.442695
      %v2376 = vpow.pop %v2375
      %v2377 = vmul.f32 %v2373, 1.442695
      %v2378 = vpow.pop %v2377
      %v2379 = vmul.f32 %v2374, 1.442695
      %v2380 = vpow.pop %v2379
      %v2381 = vsel %vm801, %v2376, 0.0
      %2382 = vadd.xlane.f32.xlu0 %v2381
      %v2383 = vpop.xlane.xlu0 %2382
      %v2384 = vsel %vm801, %v2378, 0.0
      %2385 = vadd.xlane.f32.xlu0 %v2384
      %v2386 = vpop.xlane.xlu0 %2385
      %v2387 = vsel %vm808, %v2380, 0.0
      %2388 = vadd.xlane.f32.xlu0 %v2387
      %v2389 = vpop.xlane.xlu0 %2388
      %v2390 = vrcp.pop %v2383
      %v2391 = vrcp.pop %v2386
      %v2392 = vrcp.pop %v2389
      %v2393 = vpack.c.bf16 %v2378, %v2376
      %v2394 = vpack.c.bf16 %v2380, %v2380
      %2395 = vrot.lane.b32.xlu0 %v2128, 56
      %v2396 = vpop.permute.xlu0 %2395
      %2397 = vrot.lane.b32.xlu0 %v2129, 56
      %v2398 = vpop.permute.xlu0 %2397
      %v2401 = vsel %vm801, %v2393, 0
      %v2404 = vsel %vm801, %v2394, 0
      %v2407 = vsel %vm846, %v2398, 0
      %2409 = vmatprep.subr.bf16.mxu0 0
      %2410 = vmatpush1.bf16.msra.mxu0 %v2396
      %2411 = vmatprep.subr.bf16.mxu0 0
      %2412 = vmatpush1.bf16.msra.mxu0 %v2407
      %2413 = vmatprep.subr.bf16.mxu0 0
      %2414 = vmatpush1.bf16.msra.mxu0 0
      %2415 = vmatprep.subr.bf16.mxu0 0
      %2416 = vmatpush1.bf16.msra.mxu0 0
      %2417 = vmatprep.subr.bf16.mxu0 0
      %2418 = vmatpush1.bf16.msra.mxu0 0
      %2419 = vmatprep.subr.bf16.mxu0 0
      %2420 = vmatpush1.bf16.msra.mxu0 0
      %2421 = vmatprep.subr.bf16.mxu0 0
      %2422 = vmatpush1.bf16.msra.mxu0 0
      %2423 = vmatprep.subr.bf16.mxu0 0
      %2424 = vmatpush1.bf16.msra.mxu0 0
      %2425 = vmatprep.subr.bf16.mxu0 0
      %2426 = vmatpush1.bf16.msra.mxu0 0
      %2427 = vmatprep.subr.bf16.mxu0 0
      %2428 = vmatpush1.bf16.msra.mxu0 0
      %2429 = vmatprep.subr.bf16.mxu0 0
      %2430 = vmatpush1.bf16.msra.mxu0 0
      %2431 = vmatprep.subr.bf16.mxu0 0
      %2432 = vmatpush1.bf16.msra.mxu0 0
      %2433 = vmatprep.subr.bf16.mxu0 0
      %2434 = vmatpush1.bf16.msra.mxu0 0
      %2435 = vmatprep.subr.bf16.mxu0 0
      %2436 = vmatpush1.bf16.msra.mxu0 0
      %2437 = vmatprep.subr.bf16.mxu0 0
      %2438 = vmatpush1.bf16.msra.mxu0 0
      %2439 = vmatprep.subr.bf16.mxu0 0
      %2440 = vmatpush1.bf16.msra.mxu0 0
      %2441 = vmatprep.mubr.bf16.mxu0 0
      %2442 = vmatmul.mubr.bf16.gmra.mrb[0].mxu0 %v2401
      %v2443 = vpop.f32.mrb[0].mxu0
      %v2444 = vadd.f32 0.0, %v2443
      %v2445 = vpop.f32.mrb[0].mxu0
      %v2446 = vpop.f32.mrb[0].mxu0
      %v2447 = vadd.f32 0.0, %v2446
      %v2448 = vpop.f32.mrb[0].mxu0
      %2449 = vmatprep.mubr.bf16.mxu0 0
      %2450 = vmatmul.mubr.bf16.gmra.mrb[0].mxu0 %v2404
      %v2451 = vpop.f32.mrb[0].mxu0
      %v2452 = vadd.f32 0.0, %v2451
      %v2453 = vpop.f32.mrb[0].mxu0
      %v2454 = vpop.f32.mrb[0].mxu0
      %v2455 = vpop.f32.mrb[0].mxu0
      %2456 = vdwg.mxu0
      %v2457 = vmul.f32 %v2444, %v2390
      %v2458 = vmul.f32 %v2447, %v2391
      %v2459 = vmul.f32 %v2452, %v2392
      %v2460 = vpack.c.bf16 %v2458, %v2457
      %v2461 = vpack.c.bf16 %v2459, %v2459
      %v2466 = vunpack.c.l.b16 %v2124
      %v2467 = vunpack.c.l.b16 %v2125
      %v2468 = vunpack.c.l.b16 %v2126
      %v2469 = vunpack.c.l.b16 %v2127
      %v2470 = vpack.c.b16 %v2467, %v2466
      %v2471 = vpack.c.b16 %v2469, %v2468
      %2472 = vrot.lane.b32.xlu0 %v2470, 120
      %v2473 = vpop.permute.xlu0 %2472
      %2474 = vrot.lane.b32.xlu0 %v2471, 120
      %v2475 = vpop.permute.xlu0 %2474
      %v2477 = vsel %vm740, %v2460, 0
      %v2480 = vsel %vm740, %v2461, 0
      %v2483 = vsel %vm740, %v2473, 0
      %v2486 = vsel %vm740, %v2475, 0
      %2488 = vmatprep.subr.bf16.mxu0 0
      %2489 = vmatpush1.bf16.xpose.msra.mxu0 %v2483
      %2490 = vmatprep.subr.bf16.mxu0 0
      %2491 = vmatpush1.bf16.xpose.msra.mxu0 %v2486
      %2492 = vmatprep.subr.bf16.mxu0 0
      %2493 = vmatpush1.bf16.xpose.msra.mxu0 0
      %2494 = vmatprep.subr.bf16.mxu0 0
      %2495 = vmatpush1.bf16.xpose.msra.mxu0 0
      %2496 = vmatprep.subr.bf16.mxu0 0
      %2497 = vmatpush1.bf16.xpose.msra.mxu0 0
      %2498 = vmatprep.subr.bf16.mxu0 0
      %2499 = vmatpush1.bf16.xpose.msra.mxu0 0
      %2500 = vmatprep.subr.bf16.mxu0 0
      %2501 = vmatpush1.bf16.xpose.msra.mxu0 0
      %2502 = vmatprep.subr.bf16.mxu0 0
      %2503 = vmatpush1.bf16.xpose.msra.mxu0 0
      %2504 = vmatprep.subr.bf16.mxu0 0
      %2505 = vmatpush1.bf16.xpose.msra.mxu0 0
      %2506 = vmatprep.subr.bf16.mxu0 0
      %2507 = vmatpush1.bf16.xpose.msra.mxu0 0
      %2508 = vmatprep.subr.bf16.mxu0 0
      %2509 = vmatpush1.bf16.xpose.msra.mxu0 0
      %2510 = vmatprep.subr.bf16.mxu0 0
      %2511 = vmatpush1.bf16.xpose.msra.mxu0 0
      %2512 = vmatprep.subr.bf16.mxu0 0
      %2513 = vmatpush1.bf16.xpose.msra.mxu0 0
      %2514 = vmatprep.subr.bf16.mxu0 0
      %2515 = vmatpush1.bf16.xpose.msra.mxu0 0
      %2516 = vmatprep.subr.bf16.mxu0 0
      %2517 = vmatpush1.bf16.xpose.msra.mxu0 0
      %2518 = vmatprep.subr.bf16.mxu0 0
      %2519 = vmatpush1.bf16.xpose.msra.mxu0 0
      %2520 = vmatprep.mubr.bf16.mxu0 0
      %2521 = vmatmul.mubr.bf16.gmra.mrb[0].mxu0 %v2477
      %v2522 = vpop.f32.mrb[0].mxu0
      %v2523 = vadd.f32 0.0, %v2522
      %v2524 = vpop.f32.mrb[0].mxu0
      %v2525 = vpop.f32.mrb[0].mxu0
      %v2526 = vadd.f32 0.0, %v2525
      %v2527 = vpop.f32.mrb[0].mxu0
      %2528 = vmatprep.mubr.bf16.mxu0 0
      %2529 = vmatmul.mubr.bf16.gmra.mrb[0].mxu0 %v2480
      %v2530 = vpop.f32.mrb[0].mxu0
      %v2531 = vadd.f32 0.0, %v2530
      %v2532 = vpop.f32.mrb[0].mxu0
      %v2533 = vpop.f32.mrb[0].mxu0
      %v2534 = vpop.f32.mrb[0].mxu0
      %2535 = vdwg.mxu0
      %v2537 = vsel %vm740, %v2293, 0
      %v2540 = vsel %vm740, %v2294, 0
      %v2543 = vsel %vm740, %v2470, 0
      %v2546 = vsel %vm740, %v2471, 0
      %2548 = vmatprep.subr.bf16.mxu0 0
      %2549 = vmatpush1.bf16.xpose.msra.mxu0 %v2543
      %2550 = vmatprep.subr.bf16.mxu0 0
      %2551 = vmatpush1.bf16.xpose.msra.mxu0 %v2546
      %2552 = vmatprep.subr.bf16.mxu0 0
      %2553 = vmatpush1.bf16.xpose.msra.mxu0 0
      %2554 = vmatprep.subr.bf16.mxu0 0
      %2555 = vmatpush1.bf16.xpose.msra.mxu0 0
      %2556 = vmatprep.subr.bf16.mxu0 0
      %2557 = vmatpush1.bf16.xpose.msra.mxu0 0
      %2558 = vmatprep.subr.bf16.mxu0 0
      %2559 = vmatpush1.bf16.xpose.msra.mxu0 0
      %2560 = vmatprep.subr.bf16.mxu0 0
      %2561 = vmatpush1.bf16.xpose.msra.mxu0 0
      %2562 = vmatprep.subr.bf16.mxu0 0
      %2563 = vmatpush1.bf16.xpose.msra.mxu0 0
      %2564 = vmatprep.subr.bf16.mxu0 0
      %2565 = vmatpush1.bf16.xpose.msra.mxu0 0
      %2566 = vmatprep.subr.bf16.mxu0 0
      %2567 = vmatpush1.bf16.xpose.msra.mxu0 0
      %2568 = vmatprep.subr.bf16.mxu0 0
      %2569 = vmatpush1.bf16.xpose.msra.mxu0 0
      %2570 = vmatprep.subr.bf16.mxu0 0
      %2571 = vmatpush1.bf16.xpose.msra.mxu0 0
      %2572 = vmatprep.subr.bf16.mxu0 0
      %2573 = vmatpush1.bf16.xpose.msra.mxu0 0
      %2574 = vmatprep.subr.bf16.mxu0 0
      %2575 = vmatpush1.bf16.xpose.msra.mxu0 0
      %2576 = vmatprep.subr.bf16.mxu0 0
      %2577 = vmatpush1.bf16.xpose.msra.mxu0 0
      %2578 = vmatprep.subr.bf16.mxu0 0
      %2579 = vmatpush1.bf16.xpose.msra.mxu0 0
      %2580 = vmatprep.mubr.bf16.mxu0 0
      %2581 = vmatmul.mubr.bf16.gmra.mrb[0].mxu0 %v2537
      %v2582 = vpop.f32.mrb[0].mxu0
      %v2583 = vadd.f32 %v2523, %v2582
      %v2584 = vpop.f32.mrb[0].mxu0
      %v2585 = vpop.f32.mrb[0].mxu0
      %v2586 = vadd.f32 %v2526, %v2585
      %v2587 = vpop.f32.mrb[0].mxu0
      %2588 = vmatprep.mubr.bf16.mxu0 0
      %2589 = vmatmul.mubr.bf16.gmra.mrb[0].mxu0 %v2540
      %v2590 = vpop.f32.mrb[0].mxu0
      %v2591 = vadd.f32 %v2531, %v2590
      %v2592 = vpop.f32.mrb[0].mxu0
      %v2593 = vpop.f32.mrb[0].mxu0
      %v2594 = vpop.f32.mrb[0].mxu0
      %2595 = vdwg.mxu0
      %2596 = vrot.lane.b32.xlu0 %v2128, 112
      %v2597 = vpop.permute.xlu0 %2596
      %2598 = vrot.lane.b32.xlu0 %v2129, 112
      %v2599 = vpop.permute.xlu0 %2598
      %2600 = vrot.lane.b32.xlu0 %v2128, 80
      %v2601 = vpop.permute.xlu0 %2600
      %2602 = vrot.lane.b32.xlu0 %v2129, 80
      %v2603 = vpop.permute.xlu0 %2602
      %v2605 = vsel %vm740, %v2597, 0
      %v2608 = vsel %vm740, %v2599, 0
      %v2611 = vsel %vm740, %v2601, 0
      %v2614 = vsel %vm740, %v2603, 0
      %2616 = vmatprep.subr.bf16.mxu0 0
      %2617 = vmatpush1.bf16.xpose.msra.mxu0 %v2611
      %2618 = vmatprep.subr.bf16.mxu0 0
      %2619 = vmatpush1.bf16.xpose.msra.mxu0 %v2614
      %2620 = vmatprep.subr.bf16.mxu0 0
      %2621 = vmatpush1.bf16.xpose.msra.mxu0 0
      %2622 = vmatprep.subr.bf16.mxu0 0
      %2623 = vmatpush1.bf16.xpose.msra.mxu0 0
      %2624 = vmatprep.subr.bf16.mxu0 0
      %2625 = vmatpush1.bf16.xpose.msra.mxu0 0
      %2626 = vmatprep.subr.bf16.mxu0 0
      %2627 = vmatpush1.bf16.xpose.msra.mxu0 0
      %2628 = vmatprep.subr.bf16.mxu0 0
      %2629 = vmatpush1.bf16.xpose.msra.mxu0 0
      %2630 = vmatprep.subr.bf16.mxu0 0
      %2631 = vmatpush1.bf16.xpose.msra.mxu0 0
      %2632 = vmatprep.subr.bf16.mxu0 0
      %2633 = vmatpush1.bf16.xpose.msra.mxu0 0
      %2634 = vmatprep.subr.bf16.mxu0 0
      %2635 = vmatpush1.bf16.xpose.msra.mxu0 0
      %2636 = vmatprep.subr.bf16.mxu0 0
      %2637 = vmatpush1.bf16.xpose.msra.mxu0 0
      %2638 = vmatprep.subr.bf16.mxu0 0
      %2639 = vmatpush1.bf16.xpose.msra.mxu0 0
      %2640 = vmatprep.subr.bf16.mxu0 0
      %2641 = vmatpush1.bf16.xpose.msra.mxu0 0
      %2642 = vmatprep.subr.bf16.mxu0 0
      %2643 = vmatpush1.bf16.xpose.msra.mxu0 0
      %2644 = vmatprep.subr.bf16.mxu0 0
      %2645 = vmatpush1.bf16.xpose.msra.mxu0 0
      %2646 = vmatprep.subr.bf16.mxu0 0
      %2647 = vmatpush1.bf16.xpose.msra.mxu0 0
      %2648 = vmatprep.mubr.bf16.mxu0 0
      %2649 = vmatmul.mubr.bf16.gmra.mrb[0].mxu0 %v2605
      %v2650 = vpop.f32.mrb[0].mxu0
      %v2651 = vadd.f32 0.0, %v2650
      %v2652 = vpop.f32.mrb[0].mxu0
      %v2653 = vpop.f32.mrb[0].mxu0
      %v2654 = vadd.f32 0.0, %v2653
      %v2655 = vpop.f32.mrb[0].mxu0
      %2656 = vmatprep.mubr.bf16.mxu0 0
      %2657 = vmatmul.mubr.bf16.gmra.mrb[0].mxu0 %v2608
      %v2658 = vpop.f32.mrb[0].mxu0
      %v2659 = vadd.f32 0.0, %v2658
      %v2660 = vpop.f32.mrb[0].mxu0
      %v2661 = vpop.f32.mrb[0].mxu0
      %v2662 = vpop.f32.mrb[0].mxu0
      %2663 = vdwg.mxu0
      %v2664 = vsel %vm801, %v2651, -inf
      %2665 = vmax.xlane.f32.xlu0 %v2664
      %v2666 = vpop.xlane.xlu0 %2665
      %v2667 = vsel %vm801, %v2654, -inf
      %2668 = vmax.xlane.f32.xlu0 %v2667
      %v2669 = vpop.xlane.xlu0 %2668
      %v2670 = vsel %vm808, %v2659, -inf
      %2671 = vmax.xlane.f32.xlu0 %v2670
      %v2672 = vpop.xlane.xlu0 %2671
      %v2673 = vsub.f32 %v2651, %v2666
      %v2674 = vsub.f32 %v2654, %v2669
      %v2675 = vsub.f32 %v2659, %v2672
      %v2676 = vmul.f32 %v2673, 1.442695
      %v2677 = vpow.pop %v2676
      %v2678 = vmul.f32 %v2674, 1.442695
      %v2679 = vpow.pop %v2678
      %v2680 = vmul.f32 %v2675, 1.442695
      %v2681 = vpow.pop %v2680
      %v2682 = vsel %vm801, %v2677, 0.0
      %2683 = vadd.xlane.f32.xlu0 %v2682
      %v2684 = vpop.xlane.xlu0 %2683
      %v2685 = vsel %vm801, %v2679, 0.0
      %2686 = vadd.xlane.f32.xlu0 %v2685
      %v2687 = vpop.xlane.xlu0 %2686
      %v2688 = vsel %vm808, %v2681, 0.0
      %2689 = vadd.xlane.f32.xlu0 %v2688
      %v2690 = vpop.xlane.xlu0 %2689
      %v2691 = vrcp.pop %v2684
      %v2692 = vrcp.pop %v2687
      %v2693 = vrcp.pop %v2690
      %v2694 = vpack.c.bf16 %v2679, %v2677
      %v2695 = vpack.c.bf16 %v2681, %v2681
      %2696 = vrot.lane.b32.xlu0 %v2128, 48
      %v2697 = vpop.permute.xlu0 %2696
      %2698 = vrot.lane.b32.xlu0 %v2129, 48
      %v2699 = vpop.permute.xlu0 %2698
      %v2702 = vsel %vm801, %v2694, 0
      %v2705 = vsel %vm801, %v2695, 0
      %v2708 = vsel %vm846, %v2699, 0
      %2710 = vmatprep.subr.bf16.mxu0 0
      %2711 = vmatpush1.bf16.msra.mxu0 %v2697
      %2712 = vmatprep.subr.bf16.mxu0 0
      %2713 = vmatpush1.bf16.msra.mxu0 %v2708
      %2714 = vmatprep.subr.bf16.mxu0 0
      %2715 = vmatpush1.bf16.msra.mxu0 0
      %2716 = vmatprep.subr.bf16.mxu0 0
      %2717 = vmatpush1.bf16.msra.mxu0 0
      %2718 = vmatprep.subr.bf16.mxu0 0
      %2719 = vmatpush1.bf16.msra.mxu0 0
      %2720 = vmatprep.subr.bf16.mxu0 0
      %2721 = vmatpush1.bf16.msra.mxu0 0
      %2722 = vmatprep.subr.bf16.mxu0 0
      %2723 = vmatpush1.bf16.msra.mxu0 0
      %2724 = vmatprep.subr.bf16.mxu0 0
      %2725 = vmatpush1.bf16.msra.mxu0 0
      %2726 = vmatprep.subr.bf16.mxu0 0
      %2727 = vmatpush1.bf16.msra.mxu0 0
      %2728 = vmatprep.subr.bf16.mxu0 0
      %2729 = vmatpush1.bf16.msra.mxu0 0
      %2730 = vmatprep.subr.bf16.mxu0 0
      %2731 = vmatpush1.bf16.msra.mxu0 0
      %2732 = vmatprep.subr.bf16.mxu0 0
      %2733 = vmatpush1.bf16.msra.mxu0 0
      %2734 = vmatprep.subr.bf16.mxu0 0
      %2735 = vmatpush1.bf16.msra.mxu0 0
      %2736 = vmatprep.subr.bf16.mxu0 0
      %2737 = vmatpush1.bf16.msra.mxu0 0
      %2738 = vmatprep.subr.bf16.mxu0 0
      %2739 = vmatpush1.bf16.msra.mxu0 0
      %2740 = vmatprep.subr.bf16.mxu0 0
      %2741 = vmatpush1.bf16.msra.mxu0 0
      %2742 = vmatprep.mubr.bf16.mxu0 0
      %2743 = vmatmul.mubr.bf16.gmra.mrb[0].mxu0 %v2702
      %v2744 = vpop.f32.mrb[0].mxu0
      %v2745 = vadd.f32 0.0, %v2744
      %v2746 = vpop.f32.mrb[0].mxu0
      %v2747 = vpop.f32.mrb[0].mxu0
      %v2748 = vadd.f32 0.0, %v2747
      %v2749 = vpop.f32.mrb[0].mxu0
      %2750 = vmatprep.mubr.bf16.mxu0 0
      %2751 = vmatmul.mubr.bf16.gmra.mrb[0].mxu0 %v2705
      %v2752 = vpop.f32.mrb[0].mxu0
      %v2753 = vadd.f32 0.0, %v2752
      %v2754 = vpop.f32.mrb[0].mxu0
      %v2755 = vpop.f32.mrb[0].mxu0
      %v2756 = vpop.f32.mrb[0].mxu0
      %2757 = vdwg.mxu0
      %v2758 = vmul.f32 %v2745, %v2691
      %v2759 = vmul.f32 %v2748, %v2692
      %v2760 = vmul.f32 %v2753, %v2693
      %v2761 = vpack.c.bf16 %v2759, %v2758
      %v2762 = vpack.c.bf16 %v2760, %v2760
      %2763 = vrot.lane.b32.xlu0 %v2470, 112
      %v2764 = vpop.permute.xlu0 %2763
      %2765 = vrot.lane.b32.xlu0 %v2471, 112
      %v2766 = vpop.permute.xlu0 %2765
      %v2768 = vsel %vm740, %v2761, 0
      %v2771 = vsel %vm740, %v2762, 0
      %v2774 = vsel %vm740, %v2764, 0
      %v2777 = vsel %vm740, %v2766, 0
      %2779 = vmatprep.subr.bf16.mxu0 0
      %2780 = vmatpush1.bf16.xpose.msra.mxu0 %v2774
      %2781 = vmatprep.subr.bf16.mxu0 0
      %2782 = vmatpush1.bf16.xpose.msra.mxu0 %v2777
      %2783 = vmatprep.subr.bf16.mxu0 0
      %2784 = vmatpush1.bf16.xpose.msra.mxu0 0
      %2785 = vmatprep.subr.bf16.mxu0 0
      %2786 = vmatpush1.bf16.xpose.msra.mxu0 0
      %2787 = vmatprep.subr.bf16.mxu0 0
      %2788 = vmatpush1.bf16.xpose.msra.mxu0 0
      %2789 = vmatprep.subr.bf16.mxu0 0
      %2790 = vmatpush1.bf16.xpose.msra.mxu0 0
      %2791 = vmatprep.subr.bf16.mxu0 0
      %2792 = vmatpush1.bf16.xpose.msra.mxu0 0
      %2793 = vmatprep.subr.bf16.mxu0 0
      %2794 = vmatpush1.bf16.xpose.msra.mxu0 0
      %2795 = vmatprep.subr.bf16.mxu0 0
      %2796 = vmatpush1.bf16.xpose.msra.mxu0 0
      %2797 = vmatprep.subr.bf16.mxu0 0
      %2798 = vmatpush1.bf16.xpose.msra.mxu0 0
      %2799 = vmatprep.subr.bf16.mxu0 0
      %2800 = vmatpush1.bf16.xpose.msra.mxu0 0
      %2801 = vmatprep.subr.bf16.mxu0 0
      %2802 = vmatpush1.bf16.xpose.msra.mxu0 0
      %2803 = vmatprep.subr.bf16.mxu0 0
      %2804 = vmatpush1.bf16.xpose.msra.mxu0 0
      %2805 = vmatprep.subr.bf16.mxu0 0
      %2806 = vmatpush1.bf16.xpose.msra.mxu0 0
      %2807 = vmatprep.subr.bf16.mxu0 0
      %2808 = vmatpush1.bf16.xpose.msra.mxu0 0
      %2809 = vmatprep.subr.bf16.mxu0 0
      %2810 = vmatpush1.bf16.xpose.msra.mxu0 0
      %2811 = vmatprep.mubr.bf16.mxu0 0
      %2812 = vmatmul.mubr.bf16.gmra.mrb[0].mxu0 %v2768
      %v2813 = vpop.f32.mrb[0].mxu0
      %v2814 = vadd.f32 0.0, %v2813
      %v2815 = vpop.f32.mrb[0].mxu0
      %v2816 = vpop.f32.mrb[0].mxu0
      %v2817 = vadd.f32 0.0, %v2816
      %v2818 = vpop.f32.mrb[0].mxu0
      %2819 = vmatprep.mubr.bf16.mxu0 0
      %2820 = vmatmul.mubr.bf16.gmra.mrb[0].mxu0 %v2771
      %v2821 = vpop.f32.mrb[0].mxu0
      %v2822 = vadd.f32 0.0, %v2821
      %v2823 = vpop.f32.mrb[0].mxu0
      %v2824 = vpop.f32.mrb[0].mxu0
      %v2825 = vpop.f32.mrb[0].mxu0
      %2826 = vdwg.mxu0
      %v2827 = vadd.f32 %v2583, %v2814
      %v2828 = vadd.f32 %v2586, %v2817
      %v2829 = vadd.f32 %v2591, %v2822
      %2830 = vrot.lane.b32.xlu0 %v2128, 104
      %v2831 = vpop.permute.xlu0 %2830
      %2832 = vrot.lane.b32.xlu0 %v2129, 104
      %v2833 = vpop.permute.xlu0 %2832
      %2834 = vrot.lane.b32.xlu0 %v2128, 72
      %v2835 = vpop.permute.xlu0 %2834
      %2836 = vrot.lane.b32.xlu0 %v2129, 72
      %v2837 = vpop.permute.xlu0 %2836
      %v2839 = vsel %vm740, %v2831, 0
      %v2842 = vsel %vm740, %v2833, 0
      %v2845 = vsel %vm740, %v2835, 0
      %v2848 = vsel %vm740, %v2837, 0
      %2850 = vmatprep.subr.bf16.mxu0 0
      %2851 = vmatpush1.bf16.xpose.msra.mxu0 %v2845
      %2852 = vmatprep.subr.bf16.mxu0 0
      %2853 = vmatpush1.bf16.xpose.msra.mxu0 %v2848
      %2854 = vmatprep.subr.bf16.mxu0 0
      %2855 = vmatpush1.bf16.xpose.msra.mxu0 0
      %2856 = vmatprep.subr.bf16.mxu0 0
      %2857 = vmatpush1.bf16.xpose.msra.mxu0 0
      %2858 = vmatprep.subr.bf16.mxu0 0
      %2859 = vmatpush1.bf16.xpose.msra.mxu0 0
      %2860 = vmatprep.subr.bf16.mxu0 0
      %2861 = vmatpush1.bf16.xpose.msra.mxu0 0
      %2862 = vmatprep.subr.bf16.mxu0 0
      %2863 = vmatpush1.bf16.xpose.msra.mxu0 0
      %2864 = vmatprep.subr.bf16.mxu0 0
      %2865 = vmatpush1.bf16.xpose.msra.mxu0 0
      %2866 = vmatprep.subr.bf16.mxu0 0
      %2867 = vmatpush1.bf16.xpose.msra.mxu0 0
      %2868 = vmatprep.subr.bf16.mxu0 0
      %2869 = vmatpush1.bf16.xpose.msra.mxu0 0
      %2870 = vmatprep.subr.bf16.mxu0 0
      %2871 = vmatpush1.bf16.xpose.msra.mxu0 0
      %2872 = vmatprep.subr.bf16.mxu0 0
      %2873 = vmatpush1.bf16.xpose.msra.mxu0 0
      %2874 = vmatprep.subr.bf16.mxu0 0
      %2875 = vmatpush1.bf16.xpose.msra.mxu0 0
      %2876 = vmatprep.subr.bf16.mxu0 0
      %2877 = vmatpush1.bf16.xpose.msra.mxu0 0
      %2878 = vmatprep.subr.bf16.mxu0 0
      %2879 = vmatpush1.bf16.xpose.msra.mxu0 0
      %2880 = vmatprep.subr.bf16.mxu0 0
      %2881 = vmatpush1.bf16.xpose.msra.mxu0 0
      %2882 = vmatprep.mubr.bf16.mxu0 0
      %2883 = vmatmul.mubr.bf16.gmra.mrb[0].mxu0 %v2839
      %v2884 = vpop.f32.mrb[0].mxu0
      %v2885 = vadd.f32 0.0, %v2884
      %v2886 = vpop.f32.mrb[0].mxu0
      %v2887 = vpop.f32.mrb[0].mxu0
      %v2888 = vadd.f32 0.0, %v2887
      %v2889 = vpop.f32.mrb[0].mxu0
      %2890 = vmatprep.mubr.bf16.mxu0 0
      %2891 = vmatmul.mubr.bf16.gmra.mrb[0].mxu0 %v2842
      %v2892 = vpop.f32.mrb[0].mxu0
      %v2893 = vadd.f32 0.0, %v2892
      %v2894 = vpop.f32.mrb[0].mxu0
      %v2895 = vpop.f32.mrb[0].mxu0
      %v2896 = vpop.f32.mrb[0].mxu0
      %2897 = vdwg.mxu0
      %v2898 = vsel %vm801, %v2885, -inf
      %2899 = vmax.xlane.f32.xlu0 %v2898
      %v2900 = vpop.xlane.xlu0 %2899
      %v2901 = vsel %vm801, %v2888, -inf
      %2902 = vmax.xlane.f32.xlu0 %v2901
      %v2903 = vpop.xlane.xlu0 %2902
      %v2904 = vsel %vm808, %v2893, -inf
      %2905 = vmax.xlane.f32.xlu0 %v2904
      %v2906 = vpop.xlane.xlu0 %2905
      %v2907 = vsub.f32 %v2885, %v2900
      %v2908 = vsub.f32 %v2888, %v2903
      %v2909 = vsub.f32 %v2893, %v2906
      %v2910 = vmul.f32 %v2907, 1.442695
      %v2911 = vpow.pop %v2910
      %v2912 = vmul.f32 %v2908, 1.442695
      %v2913 = vpow.pop %v2912
      %v2914 = vmul.f32 %v2909, 1.442695
      %v2915 = vpow.pop %v2914
      %v2916 = vsel %vm801, %v2911, 0.0
      %2917 = vadd.xlane.f32.xlu0 %v2916
      %v2918 = vpop.xlane.xlu0 %2917
      %v2919 = vsel %vm801, %v2913, 0.0
      %2920 = vadd.xlane.f32.xlu0 %v2919
      %v2921 = vpop.xlane.xlu0 %2920
      %v2922 = vsel %vm808, %v2915, 0.0
      %2923 = vadd.xlane.f32.xlu0 %v2922
      %v2924 = vpop.xlane.xlu0 %2923
      %v2925 = vrcp.pop %v2918
      %v2926 = vrcp.pop %v2921
      %v2927 = vrcp.pop %v2924
      %v2928 = vpack.c.bf16 %v2913, %v2911
      %v2929 = vpack.c.bf16 %v2915, %v2915
      %2930 = vrot.lane.b32.xlu0 %v2128, 40
      %v2931 = vpop.permute.xlu0 %2930
      %2932 = vrot.lane.b32.xlu0 %v2129, 40
      %v2933 = vpop.permute.xlu0 %2932
      %v2936 = vsel %vm801, %v2928, 0
      %v2939 = vsel %vm801, %v2929, 0
      %v2942 = vsel %vm846, %v2933, 0
      %2944 = vmatprep.subr.bf16.mxu0 0
      %2945 = vmatpush1.bf16.msra.mxu0 %v2931
      %2946 = vmatprep.subr.bf16.mxu0 0
      %2947 = vmatpush1.bf16.msra.mxu0 %v2942
      %2948 = vmatprep.subr.bf16.mxu0 0
      %2949 = vmatpush1.bf16.msra.mxu0 0
      %2950 = vmatprep.subr.bf16.mxu0 0
      %2951 = vmatpush1.bf16.msra.mxu0 0
      %2952 = vmatprep.subr.bf16.mxu0 0
      %2953 = vmatpush1.bf16.msra.mxu0 0
      %2954 = vmatprep.subr.bf16.mxu0 0
      %2955 = vmatpush1.bf16.msra.mxu0 0
      %2956 = vmatprep.subr.bf16.mxu0 0
      %2957 = vmatpush1.bf16.msra.mxu0 0
      %2958 = vmatprep.subr.bf16.mxu0 0
      %2959 = vmatpush1.bf16.msra.mxu0 0
      %2960 = vmatprep.subr.bf16.mxu0 0
      %2961 = vmatpush1.bf16.msra.mxu0 0
      %2962 = vmatprep.subr.bf16.mxu0 0
      %2963 = vmatpush1.bf16.msra.mxu0 0
      %2964 = vmatprep.subr.bf16.mxu0 0
      %2965 = vmatpush1.bf16.msra.mxu0 0
      %2966 = vmatprep.subr.bf16.mxu0 0
      %2967 = vmatpush1.bf16.msra.mxu0 0
      %2968 = vmatprep.subr.bf16.mxu0 0
      %2969 = vmatpush1.bf16.msra.mxu0 0
      %2970 = vmatprep.subr.bf16.mxu0 0
      %2971 = vmatpush1.bf16.msra.mxu0 0
      %2972 = vmatprep.subr.bf16.mxu0 0
      %2973 = vmatpush1.bf16.msra.mxu0 0
      %2974 = vmatprep.subr.bf16.mxu0 0
      %2975 = vmatpush1.bf16.msra.mxu0 0
      %2976 = vmatprep.mubr.bf16.mxu0 0
      %2977 = vmatmul.mubr.bf16.gmra.mrb[0].mxu0 %v2936
      %v2978 = vpop.f32.mrb[0].mxu0
      %v2979 = vadd.f32 0.0, %v2978
      %v2980 = vpop.f32.mrb[0].mxu0
      %v2981 = vpop.f32.mrb[0].mxu0
      %v2982 = vadd.f32 0.0, %v2981
      %v2983 = vpop.f32.mrb[0].mxu0
      %2984 = vmatprep.mubr.bf16.mxu0 0
      %2985 = vmatmul.mubr.bf16.gmra.mrb[0].mxu0 %v2939
      %v2986 = vpop.f32.mrb[0].mxu0
      %v2987 = vadd.f32 0.0, %v2986
      %v2988 = vpop.f32.mrb[0].mxu0
      %v2989 = vpop.f32.mrb[0].mxu0
      %v2990 = vpop.f32.mrb[0].mxu0
      %2991 = vdwg.mxu0
      %v2992 = vmul.f32 %v2979, %v2925
      %v2993 = vmul.f32 %v2982, %v2926
      %v2994 = vmul.f32 %v2987, %v2927
      %v2995 = vpack.c.bf16 %v2993, %v2992
      %v2996 = vpack.c.bf16 %v2994, %v2994
      %2997 = vrot.lane.b32.xlu0 %v2470, 104
      %v2998 = vpop.permute.xlu0 %2997
      %2999 = vrot.lane.b32.xlu0 %v2471, 104
      %v3000 = vpop.permute.xlu0 %2999
      %v3002 = vsel %vm740, %v2995, 0
      %v3005 = vsel %vm740, %v2996, 0
      %v3008 = vsel %vm740, %v2998, 0
      %v3011 = vsel %vm740, %v3000, 0
      %3013 = vmatprep.subr.bf16.mxu0 0
      %3014 = vmatpush1.bf16.xpose.msra.mxu0 %v3008
      %3015 = vmatprep.subr.bf16.mxu0 0
      %3016 = vmatpush1.bf16.xpose.msra.mxu0 %v3011
      %3017 = vmatprep.subr.bf16.mxu0 0
      %3018 = vmatpush1.bf16.xpose.msra.mxu0 0
      %3019 = vmatprep.subr.bf16.mxu0 0
      %3020 = vmatpush1.bf16.xpose.msra.mxu0 0
      %3021 = vmatprep.subr.bf16.mxu0 0
      %3022 = vmatpush1.bf16.xpose.msra.mxu0 0
      %3023 = vmatprep.subr.bf16.mxu0 0
      %3024 = vmatpush1.bf16.xpose.msra.mxu0 0
      %3025 = vmatprep.subr.bf16.mxu0 0
      %3026 = vmatpush1.bf16.xpose.msra.mxu0 0
      %3027 = vmatprep.subr.bf16.mxu0 0
      %3028 = vmatpush1.bf16.xpose.msra.mxu0 0
      %3029 = vmatprep.subr.bf16.mxu0 0
      %3030 = vmatpush1.bf16.xpose.msra.mxu0 0
      %3031 = vmatprep.subr.bf16.mxu0 0
      %3032 = vmatpush1.bf16.xpose.msra.mxu0 0
      %3033 = vmatprep.subr.bf16.mxu0 0
      %3034 = vmatpush1.bf16.xpose.msra.mxu0 0
      %3035 = vmatprep.subr.bf16.mxu0 0
      %3036 = vmatpush1.bf16.xpose.msra.mxu0 0
      %3037 = vmatprep.subr.bf16.mxu0 0
      %3038 = vmatpush1.bf16.xpose.msra.mxu0 0
      %3039 = vmatprep.subr.bf16.mxu0 0
      %3040 = vmatpush1.bf16.xpose.msra.mxu0 0
      %3041 = vmatprep.subr.bf16.mxu0 0
      %3042 = vmatpush1.bf16.xpose.msra.mxu0 0
      %3043 = vmatprep.subr.bf16.mxu0 0
      %3044 = vmatpush1.bf16.xpose.msra.mxu0 0
      %3045 = vmatprep.mubr.bf16.mxu0 0
      %3046 = vmatmul.mubr.bf16.gmra.mrb[0].mxu0 %v3002
      %v3047 = vpop.f32.mrb[0].mxu0
      %v3048 = vadd.f32 0.0, %v3047
      %v3049 = vpop.f32.mrb[0].mxu0
      %v3050 = vpop.f32.mrb[0].mxu0
      %v3051 = vadd.f32 0.0, %v3050
      %v3052 = vpop.f32.mrb[0].mxu0
      %3053 = vmatprep.mubr.bf16.mxu0 0
      %3054 = vmatmul.mubr.bf16.gmra.mrb[0].mxu0 %v3005
      %v3055 = vpop.f32.mrb[0].mxu0
      %v3056 = vadd.f32 0.0, %v3055
      %v3057 = vpop.f32.mrb[0].mxu0
      %v3058 = vpop.f32.mrb[0].mxu0
      %v3059 = vpop.f32.mrb[0].mxu0
      %3060 = vdwg.mxu0
      %v3061 = vadd.f32 %v2827, %v3048
      %v3062 = vadd.f32 %v2828, %v3051
      %v3063 = vadd.f32 %v2829, %v3056
      %s3064 = scalar_lea.vmem %s7, 1
      %v3065 = vld [vmem:[%s3064] sm:$0x1]
      %v3067 = vlaneseq
      %v3068 = vshrl.u32 %v3067, 7
      %v3069 = vsub.s32 0, %v3068
      %v3070 = vrot.slane %v3065, %v3069
      %v3072 = vadd.f32 %v3061, %v3070
      %v3073 = vadd.f32 %v3062, %v3070
      %v3074 = vadd.f32 %v3063, %v3070
      %v3075 = vadd.f32 %v1995, %v3072
      %v3076 = vadd.f32 %v1996, %v3073
      %v3077 = vadd.f32 %v1997, %v3074
      %s3078 = scalar_lea.vmem %s8, 1
      %v3079 = vld [vmem:[%s3078] sm:$0x1]
      %s3080 = scalar_lea.vmem %s9, 1
      %v3081 = vld [vmem:[%s3080] sm:$0x1]
      %v3082 = vsel %vm655, %v3075, 0.0
      %3083 = vadd.xlane.f32.xlu0 %v3082
      %v3084 = vpop.xlane.xlu0 %3083
      %v3085 = vsel %vm655, %v3076, 0.0
      %3086 = vadd.xlane.f32.xlu0 %v3085
      %v3087 = vpop.xlane.xlu0 %3086
      %v3088 = vsel %vm1693, %v3077, 0.0
      %3089 = vadd.xlane.f32.xlu0 %v3088
      %v3090 = vpop.xlane.xlu0 %3089
      %v3091 = vmul.f32 %v3084, %v1697
      %v3092 = vmul.f32 %v3087, %v1697
      %v3093 = vmul.f32 %v3090, %v1697
      %v3094 = vsub.f32 %v3075, %v3091
      %v3095 = vsub.f32 %v3076, %v3092
      %v3096 = vsub.f32 %v3077, %v3093
      %v3097 = vmul.f32 %v3094, %v3094
      %v3098 = vmul.f32 %v3095, %v3095
      %v3099 = vmul.f32 %v3096, %v3096
      %v3100 = vsel %vm655, %v3097, 0.0
      %3101 = vadd.xlane.f32.xlu0 %v3100
      %v3102 = vpop.xlane.xlu0 %3101
      %v3103 = vsel %vm655, %v3098, 0.0
      %3104 = vadd.xlane.f32.xlu0 %v3103
      %v3105 = vpop.xlane.xlu0 %3104
      %v3106 = vsel %vm1693, %v3099, 0.0
      %3107 = vadd.xlane.f32.xlu0 %v3106
      %v3108 = vpop.xlane.xlu0 %3107
      %v3109 = vmul.f32 %v3102, %v1697
      %v3110 = vmul.f32 %v3105, %v1697
      %v3111 = vmul.f32 %v3108, %v1697
      %v3112 = vadd.f32 %v3109, 1e-05
      %v3113 = vadd.f32 %v3110, 1e-05
      %v3114 = vadd.f32 %v3111, 1e-05
      %v3115 = vrsqrt.pop %v3112
      %v3116 = vrsqrt.pop %v3113
      %v3117 = vrsqrt.pop %v3114
      %v3118 = vmul.f32 %v3094, %v3115
      %v3119 = vmul.f32 %v3095, %v3116
      %v3120 = vmul.f32 %v3096, %v3117
      %v3122 = vlaneseq
      %v3123 = vshrl.u32 %v3122, 7
      %v3124 = vsub.s32 0, %v3123
      %v3125 = vrot.slane %v3079, %v3124
      %v3127 = vmul.f32 %v3118, %v3125
      %v3128 = vmul.f32 %v3119, %v3125
      %v3129 = vmul.f32 %v3120, %v3125
      %v3131 = vlaneseq
      %v3132 = vshrl.u32 %v3131, 7
      %v3133 = vsub.s32 0, %v3132
      %v3134 = vrot.slane %v3081, %v3133
      %v3136 = vadd.f32 %v3127, %v3134
      %v3137 = vadd.f32 %v3128, %v3134
      %v3138 = vadd.f32 %v3129, %v3134
      %s3139 = scalar_lea.vmem %s10, 32
      %v3140 = vld [vmem:[%s3139] sm:$0xf]
      %v3141 = vld [vmem:[%s3139 + $0x4] sm:$0xf]
      %v3142 = vld [vmem:[%s3139 + $0x8] sm:$0xf]
      %v3143 = vld [vmem:[%s3139 + $0xc] sm:$0xf]
      %v3144 = vld [vmem:[%s3139 + $0x10] sm:$0xf]
      %v3145 = vld [vmem:[%s3139 + $0x14] sm:$0xf]
      %v3146 = vld [vmem:[%s3139 + $0x18] sm:$0xf]
      %v3147 = vld [vmem:[%s3139 + $0x1c] sm:$0xf]
      %v3148 = vpack.c.bf16 %v3137, %v3136
      %v3149 = vpack.c.bf16 %v3138, %v3138
      %s3150 = scalar_lea.vmem %s11, 1
      %v3151 = vld [vmem:[%s3150] sm:$0x1]
      %v3153 = vlaneseq
      %v3154 = vshrl.u32 %v3153, 7
      %v3155 = vsub.s32 0, %v3154
      %v3156 = vrot.slane %v3151, %v3155
      %v3166 = vunpack.c.l.b16 %v3140
      %v3167 = vunpack.c.l.b16 %v3141
      %v3168 = vunpack.c.l.b16 %v3142
      %v3169 = vunpack.c.l.b16 %v3143
      %v3170 = vunpack.c.l.b16 %v3144
      %v3171 = vunpack.c.l.b16 %v3145
      %v3172 = vunpack.c.l.b16 %v3146
      %v3173 = vunpack.c.l.b16 %v3147
      %v3174 = vpack.c.b16 %v3167, %v3166
      %v3175 = vpack.c.b16 %v3169, %v3168
      %v3176 = vpack.c.b16 %v3171, %v3170
      %v3177 = vpack.c.b16 %v3173, %v3172
      %v3179 = vsel %vm655, %v3148, 0
      %v3182 = vsel %vm655, %v3149, 0
      %v3185 = vsel %vm655, %v3174, 0
      %v3188 = vsel %vm655, %v3175, 0
      %v3191 = vsel %vm655, %v3176, 0
      %v3194 = vsel %vm655, %v3177, 0
      %3196 = vmatprep.subr.bf16.mxu0 0
      %3197 = vmatpush1.bf16.xpose.msra.mxu0 %v3185
      %3198 = vmatprep.subr.bf16.mxu0 0
      %3199 = vmatpush1.bf16.xpose.msra.mxu0 %v3188
      %3200 = vmatprep.subr.bf16.mxu0 0
      %3201 = vmatpush1.bf16.xpose.msra.mxu0 %v3191
      %3202 = vmatprep.subr.bf16.mxu0 0
      %3203 = vmatpush1.bf16.xpose.msra.mxu0 %v3194
      %3204 = vmatprep.subr.bf16.mxu0 0
      %3205 = vmatpush1.bf16.xpose.msra.mxu0 0
      %3206 = vmatprep.subr.bf16.mxu0 0
      %3207 = vmatpush1.bf16.xpose.msra.mxu0 0
      %3208 = vmatprep.subr.bf16.mxu0 0
      %3209 = vmatpush1.bf16.xpose.msra.mxu0 0
      %3210 = vmatprep.subr.bf16.mxu0 0
      %3211 = vmatpush1.bf16.xpose.msra.mxu0 0
      %3212 = vmatprep.subr.bf16.mxu0 0
      %3213 = vmatpush1.bf16.xpose.msra.mxu0 0
      %3214 = vmatprep.subr.bf16.mxu0 0
      %3215 = vmatpush1.bf16.xpose.msra.mxu0 0
      %3216 = vmatprep.subr.bf16.mxu0 0
      %3217 = vmatpush1.bf16.xpose.msra.mxu0 0
      %3218 = vmatprep.subr.bf16.mxu0 0
      %3219 = vmatpush1.bf16.xpose.msra.mxu0 0
      %3220 = vmatprep.subr.bf16.mxu0 0
      %3221 = vmatpush1.bf16.xpose.msra.mxu0 0
      %3222 = vmatprep.subr.bf16.mxu0 0
      %3223 = vmatpush1.bf16.xpose.msra.mxu0 0
      %3224 = vmatprep.subr.bf16.mxu0 0
      %3225 = vmatpush1.bf16.xpose.msra.mxu0 0
      %3226 = vmatprep.subr.bf16.mxu0 0
      %3227 = vmatpush1.bf16.xpose.msra.mxu0 0
      %3228 = vmatprep.mubr.bf16.mxu0 0
      %3229 = vmatmul.mubr.bf16.gmra.mrb[0].mxu0 %v3179
      %v3230 = vpop.f32.mrb[0].mxu0
      %v3231 = vadd.f32 %v3156, %v3230
      %v3232 = vpop.f32.mrb[0].mxu0
      %v3233 = vpop.f32.mrb[0].mxu0
      %v3234 = vadd.f32 %v3156, %v3233
      %v3235 = vpop.f32.mrb[0].mxu0
      %3236 = vmatprep.mubr.bf16.mxu0 0
      %3237 = vmatmul.mubr.bf16.gmra.mrb[0].mxu0 %v3182
      %v3238 = vpop.f32.mrb[0].mxu0
      %v3239 = vadd.f32 %v3156, %v3238
      %v3240 = vpop.f32.mrb[0].mxu0
      %v3241 = vpop.f32.mrb[0].mxu0
      %v3242 = vpop.f32.mrb[0].mxu0
      %3243 = vdwg.mxu0
      %v3244 = vmax.f32 %v3231, 0.0
      %v3245 = vmax.f32 %v3234, 0.0
      %v3246 = vmax.f32 %v3239, 0.0
      %s3247 = scalar_lea.vmem %s12, 16
      %v3248 = vld [vmem:[%s3247] sm:$0xf]
      %v3249 = vld [vmem:[%s3247 + $0x4] sm:$0xf]
      %v3250 = vld [vmem:[%s3247 + $0x8] sm:$0xf]
      %v3251 = vld [vmem:[%s3247 + $0xc] sm:$0xf]
      %v3252 = vpack.c.bf16 %v3245, %v3244
      %v3253 = vpack.c.bf16 %v3246, %v3246
      %s3254 = scalar_lea.vmem %s13, 1
      %v3255 = vld [vmem:[%s3254] sm:$0x1]
      %v3257 = vlaneseq
      %v3258 = vshrl.u32 %v3257, 7
      %v3259 = vsub.s32 0, %v3258
      %v3260 = vrot.slane %v3255, %v3259
      %v3266 = vunpack.c.l.b16 %v3248
      %v3267 = vunpack.c.l.b16 %v3249
      %v3268 = vunpack.c.l.b16 %v3250
      %v3269 = vunpack.c.l.b16 %v3251
      %v3270 = vpack.c.b16 %v3267, %v3266
      %v3271 = vpack.c.b16 %v3269, %v3268
      %v3273 = vsel %vm1875, %v3252, 0
      %v3276 = vsel %vm1875, %v3253, 0
      %v3279 = vsel %vm1875, %v3270, 0
      %v3282 = vsel %vm1875, %v3271, 0
      %3284 = vmatprep.subr.bf16.mxu0 0
      %3285 = vmatpush1.bf16.xpose.msra.mxu0 %v3279
      %3286 = vmatprep.subr.bf16.mxu0 0
      %3287 = vmatpush1.bf16.xpose.msra.mxu0 %v3282
      %3288 = vmatprep.subr.bf16.mxu0 0
      %3289 = vmatpush1.bf16.xpose.msra.mxu0 0
      %3290 = vmatprep.subr.bf16.mxu0 0
      %3291 = vmatpush1.bf16.xpose.msra.mxu0 0
      %3292 = vmatprep.subr.bf16.mxu0 0
      %3293 = vmatpush1.bf16.xpose.msra.mxu0 0
      %3294 = vmatprep.subr.bf16.mxu0 0
      %3295 = vmatpush1.bf16.xpose.msra.mxu0 0
      %3296 = vmatprep.subr.bf16.mxu0 0
      %3297 = vmatpush1.bf16.xpose.msra.mxu0 0
      %3298 = vmatprep.subr.bf16.mxu0 0
      %3299 = vmatpush1.bf16.xpose.msra.mxu0 0
      %3300 = vmatprep.subr.bf16.mxu0 0
      %3301 = vmatpush1.bf16.xpose.msra.mxu0 0
      %3302 = vmatprep.subr.bf16.mxu0 0
      %3303 = vmatpush1.bf16.xpose.msra.mxu0 0
      %3304 = vmatprep.subr.bf16.mxu0 0
      %3305 = vmatpush1.bf16.xpose.msra.mxu0 0
      %3306 = vmatprep.subr.bf16.mxu0 0
      %3307 = vmatpush1.bf16.xpose.msra.mxu0 0
      %3308 = vmatprep.subr.bf16.mxu0 0
      %3309 = vmatpush1.bf16.xpose.msra.mxu0 0
      %3310 = vmatprep.subr.bf16.mxu0 0
      %3311 = vmatpush1.bf16.xpose.msra.mxu0 0
      %3312 = vmatprep.subr.bf16.mxu0 0
      %3313 = vmatpush1.bf16.xpose.msra.mxu0 0
      %3314 = vmatprep.subr.bf16.mxu0 0
      %3315 = vmatpush1.bf16.xpose.msra.mxu0 0
      %3316 = vmatprep.mubr.bf16.mxu0 0
      %3317 = vmatmul.mubr.bf16.gmra.mrb[0].mxu0 %v3273
      %v3318 = vpop.f32.mrb[0].mxu0
      %v3319 = vadd.f32 %v3260, %v3318
      %v3320 = vpop.f32.mrb[0].mxu0
      %v3321 = vpop.f32.mrb[0].mxu0
      %v3322 = vadd.f32 %v3260, %v3321
      %v3323 = vpop.f32.mrb[0].mxu0
      %3324 = vmatprep.mubr.bf16.mxu0 0
      %3325 = vmatmul.mubr.bf16.gmra.mrb[0].mxu0 %v3276
      %v3326 = vpop.f32.mrb[0].mxu0
      %v3327 = vadd.f32 %v3260, %v3326
      %v3328 = vpop.f32.mrb[0].mxu0
      %v3329 = vpop.f32.mrb[0].mxu0
      %v3330 = vpop.f32.mrb[0].mxu0
      %3331 = vdwg.mxu0
      %v3332 = vadd.f32 %v3136, %v3319
      %v3333 = vadd.f32 %v3137, %v3322
      %v3334 = vadd.f32 %v3138, %v3327
      %s3335 = scalar_lea.vmem %s14, 1
      %v3336 = vld [vmem:[%s3335] sm:$0x1]
      %s3337 = scalar_lea.vmem %s15, 1
      %v3338 = vld [vmem:[%s3337] sm:$0x1]
      %v3339 = vsel %vm655, %v3332, 0.0
      %3340 = vadd.xlane.f32.xlu0 %v3339
      %v3341 = vpop.xlane.xlu0 %3340
      %v3342 = vsel %vm655, %v3333, 0.0
      %3343 = vadd.xlane.f32.xlu0 %v3342
      %v3344 = vpop.xlane.xlu0 %3343
      %v3345 = vsel %vm1693, %v3334, 0.0
      %3346 = vadd.xlane.f32.xlu0 %v3345
      %v3347 = vpop.xlane.xlu0 %3346
      %v3348 = vmul.f32 %v3341, %v1697
      %v3349 = vmul.f32 %v3344, %v1697
      %v3350 = vmul.f32 %v3347, %v1697
      %v3351 = vsub.f32 %v3332, %v3348
      %v3352 = vsub.f32 %v3333, %v3349
      %v3353 = vsub.f32 %v3334, %v3350
      %v3354 = vmul.f32 %v3351, %v3351
      %v3355 = vmul.f32 %v3352, %v3352
      %v3356 = vmul.f32 %v3353, %v3353
      %v3357 = vsel %vm655, %v3354, 0.0
      %3358 = vadd.xlane.f32.xlu0 %v3357
      %v3359 = vpop.xlane.xlu0 %3358
      %v3360 = vsel %vm655, %v3355, 0.0
      %3361 = vadd.xlane.f32.xlu0 %v3360
      %v3362 = vpop.xlane.xlu0 %3361
      %v3363 = vsel %vm1693, %v3356, 0.0
      %3364 = vadd.xlane.f32.xlu0 %v3363
      %v3365 = vpop.xlane.xlu0 %3364
      %v3366 = vmul.f32 %v3359, %v1697
      %v3367 = vmul.f32 %v3362, %v1697
      %v3368 = vmul.f32 %v3365, %v1697
      %v3369 = vadd.f32 %v3366, 1e-05
      %v3370 = vadd.f32 %v3367, 1e-05
      %v3371 = vadd.f32 %v3368, 1e-05
      %v3372 = vrsqrt.pop %v3369
      %v3373 = vrsqrt.pop %v3370
      %v3374 = vrsqrt.pop %v3371
      %v3375 = vmul.f32 %v3351, %v3372
      %v3376 = vmul.f32 %v3352, %v3373
      %v3377 = vmul.f32 %v3353, %v3374
      %v3379 = vlaneseq
      %v3380 = vshrl.u32 %v3379, 7
      %v3381 = vsub.s32 0, %v3380
      %v3382 = vrot.slane %v3336, %v3381
      %v3384 = vmul.f32 %v3375, %v3382
      %v3385 = vmul.f32 %v3376, %v3382
      %v3386 = vmul.f32 %v3377, %v3382
      %v3388 = vlaneseq
      %v3389 = vshrl.u32 %v3388, 7
      %v3390 = vsub.s32 0, %v3389
      %v3391 = vrot.slane %v3338, %v3390
      %v3393 = vadd.f32 %v3384, %v3391
      %v3394 = vadd.f32 %v3385, %v3391
      %v3395 = vadd.f32 %v3386, %v3391
      %3396 = vst.msk [vmem:[%s521] sm:$0xff] %vm655, %v3393
      %3397 = vst.msk [vmem:[%s521 + $0x8] sm:$0xff] %vm655, %v3394
      %3398 = vst.msk [vmem:[%s521 + $0x10] sm:$0x3] %vm1693, %v3395
      %p3399 = scmp.lt.s32.totalorder %s27, 1
      %s3400 = scalar_select %p3399, %s27, 1
      %s3401 = smul.addr %s3400, 3
      %s3402 = smul.addr %s3401, 8
      %s3403 = scalar_lea.vmem %s16, %s3402
      // Predicated region
      $region85: #{ast_forward.1} parent=83 // pred_check
        %p3404 = pneg %p386
      $region86: #{ast_forward.1} parent=83 // pred_check_branch
        %3406 = sbr.rel (%p3404) target = $region88
      $region87: #{ast_forward.1} parent=83 // pred_region
        _
      $region88: #{ast_forward.1} parent=83 // pred_fallthru
        _
    $region84: #{ast_forward.1} parent=5 // pred_fallthru
      _
    %p3407 = scmp.le.s32.totalorder 2, %s22
    // Predicated region
    $region89: #{ast_forward.1} parent=5 // pred_check
      %p3408 = pneg %p3407
    $region90: #{ast_forward.1} parent=5 // pred_check_branch
      %3410 = sbr.rel (%p3408) target = $region92
    $region91: #{ast_forward.1} parent=5 // pred_region
      %s3411 = ssub.s32 %s22, 2
      // Predicated region
      $region93: #{ast_forward.1} parent=91 // pred_check
        %p3412 = pneg %p392
      $region94: #{ast_forward.1} parent=91 // pred_check_branch
        %3414 = sbr.rel (%p3412) target = $region96
      $region95: #{ast_forward.1} parent=91 // pred_region
        %p3415 = scmp.lt.s32.totalorder %s28, 1
        %s3416 = scalar_select %p3415, %s28, 1
        %s3417 = smul.addr %s3416, 3
        %s3418 = smul.addr %s3417, 8
        %s3419 = scalar_lea.vmem %s16, %s3418
      $region96: #{ast_forward.1} parent=91 // pred_fallthru
        _
    $region92: #{ast_forward.1} parent=5 // pred_fallthru
      _
  $region6: #{ast_forward.1} parent=0 // loop_footer
    %s26 = sadd.s32 1, %s22
  $region7: #{ast_forward.1} parent=0 // loop_footer_branch
    %21 = sbr.rel target = $region3
  $region8: #{ast_forward.1} parent=0 // loop_exit
    _

</llo_original>
